<compile_context>
chip_gen: v7x
topology: tpu7x:2x2x1
jax: 0.10.0
libtpu: 0.0.40
codegen_flags: <defaults>
</compile_context>

<pallas_src>
import functools

import jax
import jax.numpy as jnp
import numpy as np
from jax.experimental import pallas as pl
from jax.experimental.pallas import tpu as pltpu


def _pe_kernel(x_ref, selcoef_ref, phase_ref, o_ref, *, dim):
    # x_ref:       (TN, dim)  compact input coordinates (no HBM-side repeat)
    # selcoef_ref: (dim, W)   row d holds coef[l] on columns fed by x[:, d], else 0
    # phase_ref:   (1, W)     0 on sin columns, pi/2 on cos columns
    # o_ref:       (TN, W)    out[n, 2*(d*L+l)+k] = sin(x[n,d]*coef[l] + k*pi/2)
    x = x_ref[...].astype(jnp.float32)          # (TN, dim)
    sel = selcoef_ref[...]                      # (dim, W)

    # rad[n, c] = phase[c] + sum_d x[n, d] * selcoef[d, c]
    # dim is tiny (3..16), so this is a handful of lane-broadcast multiply-adds
    # on the VPU.  All non-selected terms are exact zeros, so the argument is
    # bit-identical to x[n, d(c)] * coef[l(c)] (+ phase on cos columns).
    rad = phase_ref[...] + x[:, 0:1] * sel[0:1, :]
    for d in range(1, dim):
        rad = rad + x[:, d:d + 1] * sel[d:d + 1, :]

    # cos(t) == sin(t + pi/2): a single EUP pass over the tile.
    o_ref[...] = jnp.sin(rad).astype(o_ref.dtype)


def _round_up(x: int, m: int) -> int:
    return ((x + m - 1) // m) * m


def positional_encoding(vectors: jax.Array, L: int, *, tile_rows: int | None = None,
                        vmem_limit_bytes: int = 32 * 1024 * 1024) -> jax.Array:
    """vectors: (N, dim) -> (N, 2*dim*L), matching the PyTorch module."""
    N, dim = vectors.shape
    W = 2 * dim * L
    dtype = vectors.dtype

    # ---- tiny column-indexed constants (built host-side, once) ----
    # column c = 2*(d*L + l) + k  ->  d = c // (2L), l = (c // 2) % L, k = c & 1
    col = np.arange(W)
    coef_np = (2.0 ** np.arange(L, dtype=np.float64)) * np.pi          # == f32(2^l * pi)
    selcoef_np = np.zeros((dim, W), dtype=np.float32)
    selcoef_np[col // (2 * L), col] = coef_np[(col // 2) % L]
    phase_np = ((col & 1).astype(np.float64) * (np.pi / 2.0)).reshape(1, W)
    selcoef = jnp.asarray(selcoef_np, dtype=jnp.float32)               # (dim, W)
    phase = jnp.asarray(phase_np, dtype=jnp.float32)                   # (1, W)

    # ---- row tile: multiple of 8, ~4 MiB output tile, VMEM-budgeted ----
    if tile_rows is None:
        target_out_bytes = 4 << 20
        tile_rows = max(8, min(8192, (target_out_bytes // max(1, W * 4)) // 8 * 8))
    tile_rows = min(tile_rows, _round_up(N, 8))
    tile_rows = max(8, (tile_rows // 8) * 8)

    # Pad the tail tile instead of silently dropping rows.
    N_pad = _round_up(N, tile_rows)
    x = vectors if N_pad == N else jnp.pad(vectors, ((0, N_pad - N), (0, 0)))
    grid = (pl.cdiv(N_pad, tile_rows),)

    out = pl.pallas_call(
        functools.partial(_pe_kernel, dim=dim),
        out_shape=jax.ShapeDtypeStruct((N_pad, W), dtype),
        grid_spec=pltpu.PrefetchScalarGridSpec(
            num_scalar_prefetch=0,
            grid=grid,
            in_specs=[
                pl.BlockSpec((tile_rows, dim), lambda i: (i, 0)),  # compact x (streamed)
                pl.BlockSpec((dim, W), lambda i: (0, 0)),          # selcoef (stays resident)
                pl.BlockSpec((1, W), lambda i: (0, 0)),            # phase   (stays resident)
            ],
            out_specs=pl.BlockSpec((tile_rows, W), lambda i: (i, 0)),
        ),
        compiler_params=pltpu.CompilerParams(
            dimension_semantics=("parallel",),
            vmem_limit_bytes=vmem_limit_bytes,
        ),
    )(x, selcoef, phase)

    return out if N_pad == N else out[:N]


def _reference(vectors: jax.Array, L: int) -> jax.Array:
    # Pure-JAX transcription of the PyTorch forward.
    N, dim = vectors.shape
    coef = jnp.exp2(jnp.arange(L, dtype=jnp.float32)) * jnp.pi
    rad = vectors.astype(jnp.float32)[:, :, None] * coef[None, None, :]   # (N, dim, L)
    s = jnp.sin(rad).reshape(N, dim * L)
    c = jnp.cos(rad).reshape(N, dim * L)
    return jnp.stack([s, c], axis=2).reshape(N, 2 * dim * L).astype(vectors.dtype)


if __name__ == "__main__":
    key = jax.random.PRNGKey(0)
    k1, k2 = jax.random.split(key)

    # Case 1: lane-dense output (W = 2*dim*L = 128); N not a multiple of the
    # tile -> exercises pad + a multi-step, double-buffered grid.
    N1, dim1, L1 = 1000, 16, 4
    x1 = jax.random.uniform(k1, (N1, dim1), jnp.float32, minval=-1.0, maxval=1.0)
    out1 = jax.block_until_ready(positional_encoding(x1, L1, tile_rows=256))
    ref1 = _reference(x1, L1)
    assert out1.shape == (N1, 2 * dim1 * L1)
    # sin(r + pi/2) vs cos(r) differs by a few f32 ulps of the argument.
    np.testing.assert_allclose(np.asarray(out1), np.asarray(ref1), atol=5e-5, rtol=5e-5)

    # Case 2: NeRF-style odd shapes (dim=3, W=36 not lane-aligned) -- still correct.
    N2, dim2, L2 = 37, 3, 6
    x2 = jax.random.uniform(k2, (N2, dim2), jnp.float32, minval=-1.0, maxval=1.0)
    out2 = jax.block_until_ready(positional_encoding(x2, L2, tile_rows=16))
    ref2 = _reference(x2, L2)
    assert out2.shape == (N2, 2 * dim2 * L2)
    np.testing.assert_allclose(np.asarray(out2), np.asarray(ref2), atol=5e-5, rtol=5e-5)

    print("KERNEL_OK")
</pallas_src>

<mosaic_0001>
module attributes {stable_mosaic.version = 11 : i64} {
  func.func @_pe_kernel(%arg0: i32, %arg1: memref<256x16xf32, #tpu.memory_space<vmem>>, %arg2: memref<16x128xf32, #tpu.memory_space<vmem>>, %arg3: memref<1x128xf32, #tpu.memory_space<vmem>>, %arg4: memref<256x128xf32, #tpu.memory_space<vmem>>) attributes {dimension_semantics = [#tpu.dimension_semantics<parallel>], iteration_bounds = array<i64: 4>, scalar_prefetch = 0 : i64, scratch_operands = 0 : i64, tpu.core_type = #tpu.core_type<tc>, window_params = [{transform_indices = @transform_0, window_bounds = array<i64: 256, 16>}, {pipeline_mode = #tpu.pipeline_mode<synchronous>, transform_indices = @transform_1, window_bounds = array<i64: 16, 128>}, {pipeline_mode = #tpu.pipeline_mode<synchronous>, transform_indices = @transform_2, window_bounds = array<i64: 1, 128>}, {transform_indices = @transform_3, window_bounds = array<i64: 256, 128>}]} {
    %c0 = arith.constant 0 : index
    %c0_0 = arith.constant 0 : index
    %0 = vector.load %arg1[%c0, %c0_0] : memref<256x16xf32, #tpu.memory_space<vmem>>, vector<256x16xf32>
    %c0_1 = arith.constant 0 : index
    %c0_2 = arith.constant 0 : index
    %1 = vector.load %arg2[%c0_1, %c0_2] : memref<16x128xf32, #tpu.memory_space<vmem>>, vector<16x128xf32>
    %c0_3 = arith.constant 0 : index
    %c0_4 = arith.constant 0 : index
    %2 = vector.load %arg3[%c0_3, %c0_4] : memref<1x128xf32, #tpu.memory_space<vmem>>, vector<1x128xf32>
    %3 = vector.extract_strided_slice %0 {offsets = [0, 0], sizes = [256, 1], strides = [1, 1]} : vector<256x16xf32> to vector<256x1xf32>
    %4 = vector.extract_strided_slice %1 {offsets = [0, 0], sizes = [1, 128], strides = [1, 1]} : vector<16x128xf32> to vector<1x128xf32>
    %5 = vector.broadcast %3 : vector<256x1xf32> to vector<256x128xf32>
    %6 = vector.broadcast %4 : vector<1x128xf32> to vector<256x128xf32>
    %7 = arith.mulf %5, %6 : vector<256x128xf32>
    %8 = vector.broadcast %2 : vector<1x128xf32> to vector<256x128xf32>
    %9 = arith.addf %8, %7 : vector<256x128xf32>
    %10 = vector.extract_strided_slice %0 {offsets = [0, 1], sizes = [256, 1], strides = [1, 1]} : vector<256x16xf32> to vector<256x1xf32>
    %11 = vector.extract_strided_slice %1 {offsets = [1, 0], sizes = [1, 128], strides = [1, 1]} : vector<16x128xf32> to vector<1x128xf32>
    %12 = vector.broadcast %10 : vector<256x1xf32> to vector<256x128xf32>
    %13 = vector.broadcast %11 : vector<1x128xf32> to vector<256x128xf32>
    %14 = arith.mulf %12, %13 : vector<256x128xf32>
    %15 = arith.addf %9, %14 : vector<256x128xf32>
    %16 = vector.extract_strided_slice %0 {offsets = [0, 2], sizes = [256, 1], strides = [1, 1]} : vector<256x16xf32> to vector<256x1xf32>
    %17 = vector.extract_strided_slice %1 {offsets = [2, 0], sizes = [1, 128], strides = [1, 1]} : vector<16x128xf32> to vector<1x128xf32>
    %18 = vector.broadcast %16 : vector<256x1xf32> to vector<256x128xf32>
    %19 = vector.broadcast %17 : vector<1x128xf32> to vector<256x128xf32>
    %20 = arith.mulf %18, %19 : vector<256x128xf32>
    %21 = arith.addf %15, %20 : vector<256x128xf32>
    %22 = vector.extract_strided_slice %0 {offsets = [0, 3], sizes = [256, 1], strides = [1, 1]} : vector<256x16xf32> to vector<256x1xf32>
    %23 = vector.extract_strided_slice %1 {offsets = [3, 0], sizes = [1, 128], strides = [1, 1]} : vector<16x128xf32> to vector<1x128xf32>
    %24 = vector.broadcast %22 : vector<256x1xf32> to vector<256x128xf32>
    %25 = vector.broadcast %23 : vector<1x128xf32> to vector<256x128xf32>
    %26 = arith.mulf %24, %25 : vector<256x128xf32>
    %27 = arith.addf %21, %26 : vector<256x128xf32>
    %28 = vector.extract_strided_slice %0 {offsets = [0, 4], sizes = [256, 1], strides = [1, 1]} : vector<256x16xf32> to vector<256x1xf32>
    %29 = vector.extract_strided_slice %1 {offsets = [4, 0], sizes = [1, 128], strides = [1, 1]} : vector<16x128xf32> to vector<1x128xf32>
    %30 = vector.broadcast %28 : vector<256x1xf32> to vector<256x128xf32>
    %31 = vector.broadcast %29 : vector<1x128xf32> to vector<256x128xf32>
    %32 = arith.mulf %30, %31 : vector<256x128xf32>
    %33 = arith.addf %27, %32 : vector<256x128xf32>
    %34 = vector.extract_strided_slice %0 {offsets = [0, 5], sizes = [256, 1], strides = [1, 1]} : vector<256x16xf32> to vector<256x1xf32>
    %35 = vector.extract_strided_slice %1 {offsets = [5, 0], sizes = [1, 128], strides = [1, 1]} : vector<16x128xf32> to vector<1x128xf32>
    %36 = vector.broadcast %34 : vector<256x1xf32> to vector<256x128xf32>
    %37 = vector.broadcast %35 : vector<1x128xf32> to vector<256x128xf32>
    %38 = arith.mulf %36, %37 : vector<256x128xf32>
    %39 = arith.addf %33, %38 : vector<256x128xf32>
    %40 = vector.extract_strided_slice %0 {offsets = [0, 6], sizes = [256, 1], strides = [1, 1]} : vector<256x16xf32> to vector<256x1xf32>
    %41 = vector.extract_strided_slice %1 {offsets = [6, 0], sizes = [1, 128], strides = [1, 1]} : vector<16x128xf32> to vector<1x128xf32>
    %42 = vector.broadcast %40 : vector<256x1xf32> to vector<256x128xf32>
    %43 = vector.broadcast %41 : vector<1x128xf32> to vector<256x128xf32>
    %44 = arith.mulf %42, %43 : vector<256x128xf32>
    %45 = arith.addf %39, %44 : vector<256x128xf32>
    %46 = vector.extract_strided_slice %0 {offsets = [0, 7], sizes = [256, 1], strides = [1, 1]} : vector<256x16xf32> to vector<256x1xf32>
    %47 = vector.extract_strided_slice %1 {offsets = [7, 0], sizes = [1, 128], strides = [1, 1]} : vector<16x128xf32> to vector<1x128xf32>
    %48 = vector.broadcast %46 : vector<256x1xf32> to vector<256x128xf32>
    %49 = vector.broadcast %47 : vector<1x128xf32> to vector<256x128xf32>
    %50 = arith.mulf %48, %49 : vector<256x128xf32>
    %51 = arith.addf %45, %50 : vector<256x128xf32>
    %52 = vector.extract_strided_slice %0 {offsets = [0, 8], sizes = [256, 1], strides = [1, 1]} : vector<256x16xf32> to vector<256x1xf32>
    %53 = vector.extract_strided_slice %1 {offsets = [8, 0], sizes = [1, 128], strides = [1, 1]} : vector<16x128xf32> to vector<1x128xf32>
    %54 = vector.broadcast %52 : vector<256x1xf32> to vector<256x128xf32>
    %55 = vector.broadcast %53 : vector<1x128xf32> to vector<256x128xf32>
    %56 = arith.mulf %54, %55 : vector<256x128xf32>
    %57 = arith.addf %51, %56 : vector<256x128xf32>
    %58 = vector.extract_strided_slice %0 {offsets = [0, 9], sizes = [256, 1], strides = [1, 1]} : vector<256x16xf32> to vector<256x1xf32>
    %59 = vector.extract_strided_slice %1 {offsets = [9, 0], sizes = [1, 128], strides = [1, 1]} : vector<16x128xf32> to vector<1x128xf32>
    %60 = vector.broadcast %58 : vector<256x1xf32> to vector<256x128xf32>
    %61 = vector.broadcast %59 : vector<1x128xf32> to vector<256x128xf32>
    %62 = arith.mulf %60, %61 : vector<256x128xf32>
    %63 = arith.addf %57, %62 : vector<256x128xf32>
    %64 = vector.extract_strided_slice %0 {offsets = [0, 10], sizes = [256, 1], strides = [1, 1]} : vector<256x16xf32> to vector<256x1xf32>
    %65 = vector.extract_strided_slice %1 {offsets = [10, 0], sizes = [1, 128], strides = [1, 1]} : vector<16x128xf32> to vector<1x128xf32>
    %66 = vector.broadcast %64 : vector<256x1xf32> to vector<256x128xf32>
    %67 = vector.broadcast %65 : vector<1x128xf32> to vector<256x128xf32>
    %68 = arith.mulf %66, %67 : vector<256x128xf32>
    %69 = arith.addf %63, %68 : vector<256x128xf32>
    %70 = vector.extract_strided_slice %0 {offsets = [0, 11], sizes = [256, 1], strides = [1, 1]} : vector<256x16xf32> to vector<256x1xf32>
    %71 = vector.extract_strided_slice %1 {offsets = [11, 0], sizes = [1, 128], strides = [1, 1]} : vector<16x128xf32> to vector<1x128xf32>
    %72 = vector.broadcast %70 : vector<256x1xf32> to vector<256x128xf32>
    %73 = vector.broadcast %71 : vector<1x128xf32> to vector<256x128xf32>
    %74 = arith.mulf %72, %73 : vector<256x128xf32>
    %75 = arith.addf %69, %74 : vector<256x128xf32>
    %76 = vector.extract_strided_slice %0 {offsets = [0, 12], sizes = [256, 1], strides = [1, 1]} : vector<256x16xf32> to vector<256x1xf32>
    %77 = vector.extract_strided_slice %1 {offsets = [12, 0], sizes = [1, 128], strides = [1, 1]} : vector<16x128xf32> to vector<1x128xf32>
    %78 = vector.broadcast %76 : vector<256x1xf32> to vector<256x128xf32>
    %79 = vector.broadcast %77 : vector<1x128xf32> to vector<256x128xf32>
    %80 = arith.mulf %78, %79 : vector<256x128xf32>
    %81 = arith.addf %75, %80 : vector<256x128xf32>
    %82 = vector.extract_strided_slice %0 {offsets = [0, 13], sizes = [256, 1], strides = [1, 1]} : vector<256x16xf32> to vector<256x1xf32>
    %83 = vector.extract_strided_slice %1 {offsets = [13, 0], sizes = [1, 128], strides = [1, 1]} : vector<16x128xf32> to vector<1x128xf32>
    %84 = vector.broadcast %82 : vector<256x1xf32> to vector<256x128xf32>
    %85 = vector.broadcast %83 : vector<1x128xf32> to vector<256x128xf32>
    %86 = arith.mulf %84, %85 : vector<256x128xf32>
    %87 = arith.addf %81, %86 : vector<256x128xf32>
    %88 = vector.extract_strided_slice %0 {offsets = [0, 14], sizes = [256, 1], strides = [1, 1]} : vector<256x16xf32> to vector<256x1xf32>
    %89 = vector.extract_strided_slice %1 {offsets = [14, 0], sizes = [1, 128], strides = [1, 1]} : vector<16x128xf32> to vector<1x128xf32>
    %90 = vector.broadcast %88 : vector<256x1xf32> to vector<256x128xf32>
    %91 = vector.broadcast %89 : vector<1x128xf32> to vector<256x128xf32>
    %92 = arith.mulf %90, %91 : vector<256x128xf32>
    %93 = arith.addf %87, %92 : vector<256x128xf32>
    %94 = vector.extract_strided_slice %0 {offsets = [0, 15], sizes = [256, 1], strides = [1, 1]} : vector<256x16xf32> to vector<256x1xf32>
    %95 = vector.extract_strided_slice %1 {offsets = [15, 0], sizes = [1, 128], strides = [1, 1]} : vector<16x128xf32> to vector<1x128xf32>
    %96 = vector.broadcast %94 : vector<256x1xf32> to vector<256x128xf32>
    %97 = vector.broadcast %95 : vector<1x128xf32> to vector<256x128xf32>
    %98 = arith.mulf %96, %97 : vector<256x128xf32>
    %99 = arith.addf %93, %98 : vector<256x128xf32>
    %100 = math.sin %99 : vector<256x128xf32>
    %c0_5 = arith.constant 0 : index
    %c0_6 = arith.constant 0 : index
    %101 = vector.load %arg4[%c0_5, %c0_6] : memref<256x128xf32, #tpu.memory_space<vmem>>, vector<256x128xf32>
    tpu.vector_store %arg4[%c0_5, %c0_6], %100 {strides = array<i32>} : memref<256x128xf32, #tpu.memory_space<vmem>>, vector<256x128xf32>,
    return
  }
  func.func @transform_0(%arg0: i32) -> (i32, i32) {
    %c0_i32 = arith.constant 0 : i32
    %c0_i32_0 = arith.constant 0 : i32
    return %arg0, %c0_i32 : i32, i32
  }
  func.func @transform_1(%arg0: i32) -> (i32, i32) {
    %c0_i32 = arith.constant 0 : i32
    %c0_i32_0 = arith.constant 0 : i32
    %c0_i32_1 = arith.constant 0 : i32
    return %c0_i32, %c0_i32_0 : i32, i32
  }
  func.func @transform_2(%arg0: i32) -> (i32, i32) {
    %c0_i32 = arith.constant 0 : i32
    %c0_i32_0 = arith.constant 0 : i32
    %c0_i32_1 = arith.constant 0 : i32
    return %c0_i32, %c0_i32_0 : i32, i32
  }
  func.func @transform_3(%arg0: i32) -> (i32, i32) {
    %c0_i32 = arith.constant 0 : i32
    %c0_i32_0 = arith.constant 0 : i32
    return %arg0, %c0_i32 : i32, i32
  }
}

</mosaic_0001>

<llo_original>
// kernel: tpu_custom_call.1
$region0: #{tpu_custom_call.1}
  #allocation0 [shape = 'u32[]', space=smem, size = 0x4, offset = 0x4, fixed_abs, tag = 'smem constant byte address 0x4 - core index']
  #allocation1 [shape = 'u32[144,128]{1,0:T(1,128)}', space=vmem, size = 0x12000, scoped, tag = 'internal scratch']
  %s0 = inlined_call_operand.vmem [shape: f32[1024,16], index: 0, kind: input, shape index: {}]
  %s1 = inlined_call_operand.vmem [shape: f32[16,128], index: 1, kind: input, shape index: {}]
  %s2 = inlined_call_operand.vmem [shape: f32[1,128], index: 2, kind: input, shape index: {}]
  %s3 = inlined_call_operand.hbm [shape: f32[1024,128], index: 3, kind: output, shape index: {}]
  %s4 = sld [smem:[#allocation0]]
  $region45: #{tpu_custom_call.1} parent=0
    _
  %s6 = ssub.s32 1, %s4
  %s7 = scalar_select 0, %s6, %s4
  $region1: #{tpu_custom_call.1} parent=0
    #allocation2 [shape = 'u8[262144]{0}', space=vmem, size = 0x40000, scoped, tag = 'output window, operand 0']
    #allocation3 [shape = 's32[2]{0}', space=sflag, size = 0x8, scoped, tag = 'scoped memory for tpu_custom_call.1']
    %8 = vsyncpa [#allocation3], 0
    %s9 = scalar_lea.sflag [#allocation3], 1
    %10 = vsyncpa %s9, 0
    loop: start=0, step=1, limit=6
    $region2: #{tpu_custom_call.1} parent=1 // loop_pre_header
      _
    $region3: #{tpu_custom_call.1} parent=1 // loop_header
      %s12 = sphi 0, %s16
      %p13 = scmp.ge.s32.totalorder %s12, 6
      %s22 = sphi 0, %s24
      %s25 = sphi 0, %s22
      %s26 = sphi 0, %s25
      %s42 = sphi 0, %s26
      %s46 = sphi 0, %s46
      %s48 = sphi 0, %s46
      %s49 = sphi 0, %s48
      %s63 = sphi 0, %s49
      %s67 = sphi 0, %s67
      %s69 = sphi 0, %s67
      %s70 = sphi 0, %s69
      %s84 = sphi 0, %s70
      %s90 = sphi 0, %s92
      %s93 = sphi 0, %s90
      %s94 = sphi 0, %s93
      %s110 = sphi 0, %s94
    $region4: #{tpu_custom_call.1} parent=1 // loop_header_branch
      %15 = sbr.rel (%p13) target = $region8
    $region5: #{tpu_custom_call.1} parent=1 // loop_body
      %s17 = ssub.s32 %s12, 1
      %s18 = ssub.s32 %s12, 2
      %s19 = sadd.s32 %s12, 1
      %s20 = ssub.s32 %s12, %s19
      %p21 = scmp.eq.s32.totalorder %s20, 0
      %s23 = sadd.s32 %s22, 1
      %s24 = scalar_select %p21, %s22, %s23
      %p27 = pneg %p21
      %p28 = scmp.eq.s32.totalorder %s12, 3
      %p29 = por %p27, %p28
      %p30 = scmp.ne.s32.totalorder %s22, %s25
      %p31 = scmp.eq.s32.totalorder %s12, 0
      %p32 = por %p30, %p31
      %p33 = scmp.ne.s32.totalorder %s22, %s25
      %p34 = scmp.eq.s32.totalorder %s17, 3
      %p35 = por %p33, %p34
      %p36 = scmp.ne.s32.totalorder %s25, %s26
      %p37 = scmp.eq.s32.totalorder %s17, 0
      %p38 = por %p36, %p37
      %p39 = scmp.ne.s32.totalorder %s25, %s26
      %p40 = scmp.eq.s32.totalorder %s18, 3
      %p41 = por %p39, %p40
      %p43 = scmp.ne.s32.totalorder %s26, %s42
      %p44 = scmp.eq.s32.totalorder %s18, 0
      %p45 = por %p43, %p44
      %s47 = sadd.s32 %s46, 1
      %p50 = scmp.eq.s32.totalorder %s12, 3
      %p51 = scmp.ne.s32.totalorder %s46, %s48
      %p52 = scmp.eq.s32.totalorder %s12, 0
      %p53 = por %p51, %p52
      %p54 = scmp.ne.s32.totalorder %s46, %s48
      %p55 = scmp.eq.s32.totalorder %s17, 3
      %p56 = por %p54, %p55
      %p57 = scmp.ne.s32.totalorder %s48, %s49
      %p58 = scmp.eq.s32.totalorder %s17, 0
      %p59 = por %p57, %p58
      %p60 = scmp.ne.s32.totalorder %s48, %s49
      %p61 = scmp.eq.s32.totalorder %s18, 3
      %p62 = por %p60, %p61
      %p64 = scmp.ne.s32.totalorder %s49, %s63
      %p65 = scmp.eq.s32.totalorder %s18, 0
      %p66 = por %p64, %p65
      %s68 = sadd.s32 %s67, 1
      %p71 = scmp.eq.s32.totalorder %s12, 3
      %p72 = scmp.ne.s32.totalorder %s67, %s69
      %p73 = scmp.eq.s32.totalorder %s12, 0
      %p74 = por %p72, %p73
      %p75 = scmp.ne.s32.totalorder %s67, %s69
      %p76 = scmp.eq.s32.totalorder %s17, 3
      %p77 = por %p75, %p76
      %p78 = scmp.ne.s32.totalorder %s69, %s70
      %p79 = scmp.eq.s32.totalorder %s17, 0
      %p80 = por %p78, %p79
      %p81 = scmp.ne.s32.totalorder %s69, %s70
      %p82 = scmp.eq.s32.totalorder %s18, 3
      %p83 = por %p81, %p82
      %p85 = scmp.ne.s32.totalorder %s70, %s84
      %p86 = scmp.eq.s32.totalorder %s18, 0
      %p87 = por %p85, %p86
      %s88 = ssub.s32 %s12, %s19
      %p89 = scmp.eq.s32.totalorder %s88, 0
      %s91 = sadd.s32 %s90, 1
      %s92 = scalar_select %p89, %s90, %s91
      %p95 = pneg %p89
      %p96 = scmp.eq.s32.totalorder %s12, 3
      %p97 = por %p95, %p96
      %p98 = scmp.ne.s32.totalorder %s90, %s93
      %p99 = scmp.eq.s32.totalorder %s12, 0
      %p100 = por %p98, %p99
      %p101 = scmp.ne.s32.totalorder %s90, %s93
      %p102 = scmp.eq.s32.totalorder %s17, 3
      %p103 = por %p101, %p102
      %p104 = scmp.ne.s32.totalorder %s93, %s94
      %p105 = scmp.eq.s32.totalorder %s17, 0
      %p106 = por %p104, %p105
      %p107 = scmp.ne.s32.totalorder %s93, %s94
      %p108 = scmp.eq.s32.totalorder %s18, 3
      %p109 = por %p107, %p108
      %p111 = scmp.ne.s32.totalorder %s94, %s110
      %p112 = scmp.eq.s32.totalorder %s18, 0
      %p113 = por %p111, %p112
      %p114 = scmp.le.s32.totalorder 1, %s12
      %p115 = scmp.lt.s32.totalorder %s12, 5
      %p116 = pnand %p114, %p115
      %p117 = pneg %p116
      // Predicated region
      $region9: #{tpu_custom_call.1} parent=5 // pred_check
        _
      $region10: #{tpu_custom_call.1} parent=5 // pred_check_branch
        %119 = sbr.rel (%p116) target = $region12
      $region11: #{tpu_custom_call.1} parent=5 // pred_region
        %s120 = ssub.s32 %s12, 1
        // Predicated region
        $region13: #{tpu_custom_call.1} parent=11 // pred_check
          %p121 = pneg %p59
        $region14: #{tpu_custom_call.1} parent=11 // pred_check_branch
          %123 = sbr.rel (%p121) target = $region16
        $region15: #{tpu_custom_call.1} parent=11 // pred_region
          _
        $region16: #{tpu_custom_call.1} parent=11 // pred_fallthru
          _
        // Predicated region
        $region17: #{tpu_custom_call.1} parent=11 // pred_check
          %p124 = pneg %p80
        $region18: #{tpu_custom_call.1} parent=11 // pred_check_branch
          %126 = sbr.rel (%p124) target = $region20
        $region19: #{tpu_custom_call.1} parent=11 // pred_region
          _
        $region20: #{tpu_custom_call.1} parent=11 // pred_fallthru
          _
      $region12: #{tpu_custom_call.1} parent=5 // pred_fallthru
        _
      %p127 = scmp.lt.s32.totalorder %s12, 4
      // Predicated region
      $region21: #{tpu_custom_call.1} parent=5 // pred_check
        %p128 = pneg %p127
      $region22: #{tpu_custom_call.1} parent=5 // pred_check_branch
        %130 = sbr.rel (%p128) target = $region24
      $region23: #{tpu_custom_call.1} parent=5 // pred_region
        // Predicated region
        $region25: #{tpu_custom_call.1} parent=23 // pred_check
          %p131 = pneg %p32
        $region26: #{tpu_custom_call.1} parent=23 // pred_check_branch
          %133 = sbr.rel (%p131) target = $region28
        $region27: #{tpu_custom_call.1} parent=23 // pred_region
          %s134 = smul.u32 32, %s12
          %p135 = scmp.lt.s32.totalorder %s134, 127
          %s136 = scalar_select %p135, %s134, 127
          %s137 = smul.addr %s136, 8
          %s138 = scalar_lea.vmem %s0, %s137
          %s139 = smul.u32 32, %s12
        $region28: #{tpu_custom_call.1} parent=23 // pred_fallthru
          _
      $region24: #{tpu_custom_call.1} parent=5 // pred_fallthru
        _
      %p140 = scmp.le.s32.totalorder 1, %s12
      %p141 = scmp.lt.s32.totalorder %s12, 5
      %p142 = pnand %p140, %p141
      %p143 = pneg %p142
      // Predicated region
      $region29: #{tpu_custom_call.1} parent=5 // pred_check
        _
      $region30: #{tpu_custom_call.1} parent=5 // pred_check_branch
        %145 = sbr.rel (%p142) target = $region32
      $region31: #{tpu_custom_call.1} parent=5 // pred_region
        %s146 = ssub.s32 %s12, 1
        %s147 = smul.u32 32, %s17
        %p148 = scmp.lt.s32.totalorder %s147, 127
        %s149 = scalar_select %p148, %s147, 127
        %s150 = smul.addr %s149, 8
        %s151 = scalar_lea.vmem %s0, %s150
        %p152 = pneg %p38
        %p153 = pneg %p35
        %p154 = pneg %p59
        %p155 = pneg %p56
        %p156 = pneg %p80
        %p157 = pneg %p77
        %p158 = pneg %p106
        %p159 = pneg %p103
        %s160 = sand.u32 %s93, 1
        %s161 = scalar_lea.sflag [#allocation3], %s160
        %s162 = sand.u32 %s93, 1
        %s163 = smul.addr %s162, 256
        %s164 = scalar_lea.vmem [#allocation2], %s163
        %s165 = smul.u32 32, %s17
        %p166 = scmp.lt.s32.totalorder %s165, 127
        %s167 = scalar_select %p166, %s165, 127
        %s168 = smul.addr %s167, 8
        %s169 = scalar_lea.vmem %s0, %s168
        %s170 = smul.u32 32, %s17
        %s171 = smul.u32 32, %s17
        %v172 = vld [vmem:[%s169] sm:$0xff]
        %v173 = vld [vmem:[%s169 + $0x8] sm:$0xff]
        %v174 = vld [vmem:[%s169 + $0x10] sm:$0xff]
        %v175 = vld [vmem:[%s169 + $0x18] sm:$0xff]
        %v176 = vld [vmem:[%s169 + $0x20] sm:$0xff]
        %v177 = vld [vmem:[%s169 + $0x28] sm:$0xff]
        %v178 = vld [vmem:[%s169 + $0x30] sm:$0xff]
        %v179 = vld [vmem:[%s169 + $0x38] sm:$0xff]
        %v180 = vld [vmem:[%s169 + $0x40] sm:$0xff]
        %v181 = vld [vmem:[%s169 + $0x48] sm:$0xff]
        %v182 = vld [vmem:[%s169 + $0x50] sm:$0xff]
        %v183 = vld [vmem:[%s169 + $0x58] sm:$0xff]
        %v184 = vld [vmem:[%s169 + $0x60] sm:$0xff]
        %v185 = vld [vmem:[%s169 + $0x68] sm:$0xff]
        %v186 = vld [vmem:[%s169 + $0x70] sm:$0xff]
        %v187 = vld [vmem:[%s169 + $0x78] sm:$0xff]
        %v188 = vld [vmem:[%s169 + $0x80] sm:$0xff]
        %v189 = vld [vmem:[%s169 + $0x88] sm:$0xff]
        %v190 = vld [vmem:[%s169 + $0x90] sm:$0xff]
        %v191 = vld [vmem:[%s169 + $0x98] sm:$0xff]
        %v192 = vld [vmem:[%s169 + $0xa0] sm:$0xff]
        %v193 = vld [vmem:[%s169 + $0xa8] sm:$0xff]
        %v194 = vld [vmem:[%s169 + $0xb0] sm:$0xff]
        %v195 = vld [vmem:[%s169 + $0xb8] sm:$0xff]
        %v196 = vld [vmem:[%s169 + $0xc0] sm:$0xff]
        %v197 = vld [vmem:[%s169 + $0xc8] sm:$0xff]
        %v198 = vld [vmem:[%s169 + $0xd0] sm:$0xff]
        %v199 = vld [vmem:[%s169 + $0xd8] sm:$0xff]
        %v200 = vld [vmem:[%s169 + $0xe0] sm:$0xff]
        %v201 = vld [vmem:[%s169 + $0xe8] sm:$0xff]
        %v202 = vld [vmem:[%s169 + $0xf0] sm:$0xff]
        %v203 = vld [vmem:[%s169 + $0xf8] sm:$0xff]
        %v204 = vld [vmem:[%s1] sm:$0xff]
        %v205 = vld [vmem:[%s1 + $0x8] sm:$0xff]
        %v206 = vld [vmem:[%s2] sm:$0x1]
        %208 = vset.pattern.permute.xlu0 0
        %209 = vperm.xlu0 %208, %v172
        %v210 = vpop.permute.xlu0 %209
        %213 = vset.pattern.permute.xlu0 0
        %214 = vperm.xlu0 %213, %v173
        %v215 = vpop.permute.xlu0 %214
        %218 = vset.pattern.permute.xlu0 0
        %219 = vperm.xlu0 %218, %v174
        %v220 = vpop.permute.xlu0 %219
        %223 = vset.pattern.permute.xlu0 0
        %224 = vperm.xlu0 %223, %v175
        %v225 = vpop.permute.xlu0 %224
        %228 = vset.pattern.permute.xlu0 0
        %229 = vperm.xlu0 %228, %v176
        %v230 = vpop.permute.xlu0 %229
        %233 = vset.pattern.permute.xlu0 0
        %234 = vperm.xlu0 %233, %v177
        %v235 = vpop.permute.xlu0 %234
        %238 = vset.pattern.permute.xlu0 0
        %239 = vperm.xlu0 %238, %v178
        %v240 = vpop.permute.xlu0 %239
        %243 = vset.pattern.permute.xlu0 0
        %244 = vperm.xlu0 %243, %v179
        %v245 = vpop.permute.xlu0 %244
        %248 = vset.pattern.permute.xlu0 0
        %249 = vperm.xlu0 %248, %v180
        %v250 = vpop.permute.xlu0 %249
        %253 = vset.pattern.permute.xlu0 0
        %254 = vperm.xlu0 %253, %v181
        %v255 = vpop.permute.xlu0 %254
        %258 = vset.pattern.permute.xlu0 0
        %259 = vperm.xlu0 %258, %v182
        %v260 = vpop.permute.xlu0 %259
        %263 = vset.pattern.permute.xlu0 0
        %264 = vperm.xlu0 %263, %v183
        %v265 = vpop.permute.xlu0 %264
        %268 = vset.pattern.permute.xlu0 0
        %269 = vperm.xlu0 %268, %v184
        %v270 = vpop.permute.xlu0 %269
        %273 = vset.pattern.permute.xlu0 0
        %274 = vperm.xlu0 %273, %v185
        %v275 = vpop.permute.xlu0 %274
        %278 = vset.pattern.permute.xlu0 0
        %279 = vperm.xlu0 %278, %v186
        %v280 = vpop.permute.xlu0 %279
        %283 = vset.pattern.permute.xlu0 0
        %284 = vperm.xlu0 %283, %v187
        %v285 = vpop.permute.xlu0 %284
        %288 = vset.pattern.permute.xlu0 0
        %289 = vperm.xlu0 %288, %v188
        %v290 = vpop.permute.xlu0 %289
        %293 = vset.pattern.permute.xlu0 0
        %294 = vperm.xlu0 %293, %v189
        %v295 = vpop.permute.xlu0 %294
        %298 = vset.pattern.permute.xlu0 0
        %299 = vperm.xlu0 %298, %v190
        %v300 = vpop.permute.xlu0 %299
        %303 = vset.pattern.permute.xlu0 0
        %304 = vperm.xlu0 %303, %v191
        %v305 = vpop.permute.xlu0 %304
        %308 = vset.pattern.permute.xlu0 0
        %309 = vperm.xlu0 %308, %v192
        %v310 = vpop.permute.xlu0 %309
        %313 = vset.pattern.permute.xlu0 0
        %314 = vperm.xlu0 %313, %v193
        %v315 = vpop.permute.xlu0 %314
        %318 = vset.pattern.permute.xlu0 0
        %319 = vperm.xlu0 %318, %v194
        %v320 = vpop.permute.xlu0 %319
        %323 = vset.pattern.permute.xlu0 0
        %324 = vperm.xlu0 %323, %v195
        %v325 = vpop.permute.xlu0 %324
        %328 = vset.pattern.permute.xlu0 0
        %329 = vperm.xlu0 %328, %v196
        %v330 = vpop.permute.xlu0 %329
        %333 = vset.pattern.permute.xlu0 0
        %334 = vperm.xlu0 %333, %v197
        %v335 = vpop.permute.xlu0 %334
        %338 = vset.pattern.permute.xlu0 0
        %339 = vperm.xlu0 %338, %v198
        %v340 = vpop.permute.xlu0 %339
        %343 = vset.pattern.permute.xlu0 0
        %344 = vperm.xlu0 %343, %v199
        %v345 = vpop.permute.xlu0 %344
        %348 = vset.pattern.permute.xlu0 0
        %349 = vperm.xlu0 %348, %v200
        %v350 = vpop.permute.xlu0 %349
        %353 = vset.pattern.permute.xlu0 0
        %354 = vperm.xlu0 %353, %v201
        %v355 = vpop.permute.xlu0 %354
        %358 = vset.pattern.permute.xlu0 0
        %359 = vperm.xlu0 %358, %v202
        %v360 = vpop.permute.xlu0 %359
        %363 = vset.pattern.permute.xlu0 0
        %364 = vperm.xlu0 %363, %v203
        %v365 = vpop.permute.xlu0 %364
        %v367 = vlaneseq
        %v368 = vshrl.u32 %v367, 7
        %v369 = vsub.s32 0, %v368
        %v370 = vrot.slane %v204, %v369
        %v371 = vmul.f32 %v210, %v370
        %v372 = vmul.f32 %v215, %v370
        %v373 = vmul.f32 %v220, %v370
        %v374 = vmul.f32 %v225, %v370
        %v375 = vmul.f32 %v230, %v370
        %v376 = vmul.f32 %v235, %v370
        %v377 = vmul.f32 %v240, %v370
        %v378 = vmul.f32 %v245, %v370
        %v379 = vmul.f32 %v250, %v370
        %v380 = vmul.f32 %v255, %v370
        %v381 = vmul.f32 %v260, %v370
        %v382 = vmul.f32 %v265, %v370
        %v383 = vmul.f32 %v270, %v370
        %v384 = vmul.f32 %v275, %v370
        %v385 = vmul.f32 %v280, %v370
        %v386 = vmul.f32 %v285, %v370
        %v387 = vmul.f32 %v290, %v370
        %v388 = vmul.f32 %v295, %v370
        %v389 = vmul.f32 %v300, %v370
        %v390 = vmul.f32 %v305, %v370
        %v391 = vmul.f32 %v310, %v370
        %v392 = vmul.f32 %v315, %v370
        %v393 = vmul.f32 %v320, %v370
        %v394 = vmul.f32 %v325, %v370
        %v395 = vmul.f32 %v330, %v370
        %v396 = vmul.f32 %v335, %v370
        %v397 = vmul.f32 %v340, %v370
        %v398 = vmul.f32 %v345, %v370
        %v399 = vmul.f32 %v350, %v370
        %v400 = vmul.f32 %v355, %v370
        %v401 = vmul.f32 %v360, %v370
        %v402 = vmul.f32 %v365, %v370
        %v404 = vlaneseq
        %v405 = vshrl.u32 %v404, 7
        %v406 = vsub.s32 0, %v405
        %v407 = vrot.slane %v206, %v406
        %v409 = vadd.f32 %v407, %v371
        %v410 = vadd.f32 %v407, %v372
        %v411 = vadd.f32 %v407, %v373
        %v412 = vadd.f32 %v407, %v374
        %v413 = vadd.f32 %v407, %v375
        %v414 = vadd.f32 %v407, %v376
        %v415 = vadd.f32 %v407, %v377
        %v416 = vadd.f32 %v407, %v378
        %v417 = vadd.f32 %v407, %v379
        %v418 = vadd.f32 %v407, %v380
        %v419 = vadd.f32 %v407, %v381
        %v420 = vadd.f32 %v407, %v382
        %v421 = vadd.f32 %v407, %v383
        %v422 = vadd.f32 %v407, %v384
        %v423 = vadd.f32 %v407, %v385
        %v424 = vadd.f32 %v407, %v386
        %v425 = vadd.f32 %v407, %v387
        %v426 = vadd.f32 %v407, %v388
        %v427 = vadd.f32 %v407, %v389
        %v428 = vadd.f32 %v407, %v390
        %v429 = vadd.f32 %v407, %v391
        %v430 = vadd.f32 %v407, %v392
        %v431 = vadd.f32 %v407, %v393
        %v432 = vadd.f32 %v407, %v394
        %v433 = vadd.f32 %v407, %v395
        %v434 = vadd.f32 %v407, %v396
        %v435 = vadd.f32 %v407, %v397
        %v436 = vadd.f32 %v407, %v398
        %v437 = vadd.f32 %v407, %v399
        %v438 = vadd.f32 %v407, %v400
        %v439 = vadd.f32 %v407, %v401
        %v440 = vadd.f32 %v407, %v402
        %441 = vset.pattern.permute.xlu0 1
        %442 = vperm.xlu0 %441, %v172
        %v443 = vpop.permute.xlu0 %442
        %445 = vset.pattern.permute.xlu0 1
        %446 = vperm.xlu0 %445, %v173
        %v447 = vpop.permute.xlu0 %446
        %449 = vset.pattern.permute.xlu0 1
        %450 = vperm.xlu0 %449, %v174
        %v451 = vpop.permute.xlu0 %450
        %453 = vset.pattern.permute.xlu0 1
        %454 = vperm.xlu0 %453, %v175
        %v455 = vpop.permute.xlu0 %454
        %457 = vset.pattern.permute.xlu0 1
        %458 = vperm.xlu0 %457, %v176
        %v459 = vpop.permute.xlu0 %458
        %461 = vset.pattern.permute.xlu0 1
        %462 = vperm.xlu0 %461, %v177
        %v463 = vpop.permute.xlu0 %462
        %465 = vset.pattern.permute.xlu0 1
        %466 = vperm.xlu0 %465, %v178
        %v467 = vpop.permute.xlu0 %466
        %469 = vset.pattern.permute.xlu0 1
        %470 = vperm.xlu0 %469, %v179
        %v471 = vpop.permute.xlu0 %470
        %473 = vset.pattern.permute.xlu0 1
        %474 = vperm.xlu0 %473, %v180
        %v475 = vpop.permute.xlu0 %474
        %477 = vset.pattern.permute.xlu0 1
        %478 = vperm.xlu0 %477, %v181
        %v479 = vpop.permute.xlu0 %478
        %481 = vset.pattern.permute.xlu0 1
        %482 = vperm.xlu0 %481, %v182
        %v483 = vpop.permute.xlu0 %482
        %485 = vset.pattern.permute.xlu0 1
        %486 = vperm.xlu0 %485, %v183
        %v487 = vpop.permute.xlu0 %486
        %489 = vset.pattern.permute.xlu0 1
        %490 = vperm.xlu0 %489, %v184
        %v491 = vpop.permute.xlu0 %490
        %493 = vset.pattern.permute.xlu0 1
        %494 = vperm.xlu0 %493, %v185
        %v495 = vpop.permute.xlu0 %494
        %497 = vset.pattern.permute.xlu0 1
        %498 = vperm.xlu0 %497, %v186
        %v499 = vpop.permute.xlu0 %498
        %501 = vset.pattern.permute.xlu0 1
        %502 = vperm.xlu0 %501, %v187
        %v503 = vpop.permute.xlu0 %502
        %505 = vset.pattern.permute.xlu0 1
        %506 = vperm.xlu0 %505, %v188
        %v507 = vpop.permute.xlu0 %506
        %509 = vset.pattern.permute.xlu0 1
        %510 = vperm.xlu0 %509, %v189
        %v511 = vpop.permute.xlu0 %510
        %513 = vset.pattern.permute.xlu0 1
        %514 = vperm.xlu0 %513, %v190
        %v515 = vpop.permute.xlu0 %514
        %517 = vset.pattern.permute.xlu0 1
        %518 = vperm.xlu0 %517, %v191
        %v519 = vpop.permute.xlu0 %518
        %521 = vset.pattern.permute.xlu0 1
        %522 = vperm.xlu0 %521, %v192
        %v523 = vpop.permute.xlu0 %522
        %525 = vset.pattern.permute.xlu0 1
        %526 = vperm.xlu0 %525, %v193
        %v527 = vpop.permute.xlu0 %526
        %529 = vset.pattern.permute.xlu0 1
        %530 = vperm.xlu0 %529, %v194
        %v531 = vpop.permute.xlu0 %530
        %533 = vset.pattern.permute.xlu0 1
        %534 = vperm.xlu0 %533, %v195
        %v535 = vpop.permute.xlu0 %534
        %537 = vset.pattern.permute.xlu0 1
        %538 = vperm.xlu0 %537, %v196
        %v539 = vpop.permute.xlu0 %538
        %541 = vset.pattern.permute.xlu0 1
        %542 = vperm.xlu0 %541, %v197
        %v543 = vpop.permute.xlu0 %542
        %545 = vset.pattern.permute.xlu0 1
        %546 = vperm.xlu0 %545, %v198
        %v547 = vpop.permute.xlu0 %546
        %549 = vset.pattern.permute.xlu0 1
        %550 = vperm.xlu0 %549, %v199
        %v551 = vpop.permute.xlu0 %550
        %553 = vset.pattern.permute.xlu0 1
        %554 = vperm.xlu0 %553, %v200
        %v555 = vpop.permute.xlu0 %554
        %557 = vset.pattern.permute.xlu0 1
        %558 = vperm.xlu0 %557, %v201
        %v559 = vpop.permute.xlu0 %558
        %561 = vset.pattern.permute.xlu0 1
        %562 = vperm.xlu0 %561, %v202
        %v563 = vpop.permute.xlu0 %562
        %565 = vset.pattern.permute.xlu0 1
        %566 = vperm.xlu0 %565, %v203
        %v567 = vpop.permute.xlu0 %566
        %v569 = vlaneseq
        %v570 = vshrl.u32 %v569, 7
        %v571 = vsub.s32 1, %v570
        %v572 = vrot.slane %v204, %v571
        %v573 = vmul.f32 %v443, %v572
        %v574 = vmul.f32 %v447, %v572
        %v575 = vmul.f32 %v451, %v572
        %v576 = vmul.f32 %v455, %v572
        %v577 = vmul.f32 %v459, %v572
        %v578 = vmul.f32 %v463, %v572
        %v579 = vmul.f32 %v467, %v572
        %v580 = vmul.f32 %v471, %v572
        %v581 = vmul.f32 %v475, %v572
        %v582 = vmul.f32 %v479, %v572
        %v583 = vmul.f32 %v483, %v572
        %v584 = vmul.f32 %v487, %v572
        %v585 = vmul.f32 %v491, %v572
        %v586 = vmul.f32 %v495, %v572
        %v587 = vmul.f32 %v499, %v572
        %v588 = vmul.f32 %v503, %v572
        %v589 = vmul.f32 %v507, %v572
        %v590 = vmul.f32 %v511, %v572
        %v591 = vmul.f32 %v515, %v572
        %v592 = vmul.f32 %v519, %v572
        %v593 = vmul.f32 %v523, %v572
        %v594 = vmul.f32 %v527, %v572
        %v595 = vmul.f32 %v531, %v572
        %v596 = vmul.f32 %v535, %v572
        %v597 = vmul.f32 %v539, %v572
        %v598 = vmul.f32 %v543, %v572
        %v599 = vmul.f32 %v547, %v572
        %v600 = vmul.f32 %v551, %v572
        %v601 = vmul.f32 %v555, %v572
        %v602 = vmul.f32 %v559, %v572
        %v603 = vmul.f32 %v563, %v572
        %v604 = vmul.f32 %v567, %v572
        %v605 = vadd.f32 %v409, %v573
        %v606 = vadd.f32 %v410, %v574
        %v607 = vadd.f32 %v411, %v575
        %v608 = vadd.f32 %v412, %v576
        %v609 = vadd.f32 %v413, %v577
        %v610 = vadd.f32 %v414, %v578
        %v611 = vadd.f32 %v415, %v579
        %v612 = vadd.f32 %v416, %v580
        %v613 = vadd.f32 %v417, %v581
        %v614 = vadd.f32 %v418, %v582
        %v615 = vadd.f32 %v419, %v583
        %v616 = vadd.f32 %v420, %v584
        %v617 = vadd.f32 %v421, %v585
        %v618 = vadd.f32 %v422, %v586
        %v619 = vadd.f32 %v423, %v587
        %v620 = vadd.f32 %v424, %v588
        %v621 = vadd.f32 %v425, %v589
        %v622 = vadd.f32 %v426, %v590
        %v623 = vadd.f32 %v427, %v591
        %v624 = vadd.f32 %v428, %v592
        %v625 = vadd.f32 %v429, %v593
        %v626 = vadd.f32 %v430, %v594
        %v627 = vadd.f32 %v431, %v595
        %v628 = vadd.f32 %v432, %v596
        %v629 = vadd.f32 %v433, %v597
        %v630 = vadd.f32 %v434, %v598
        %v631 = vadd.f32 %v435, %v599
        %v632 = vadd.f32 %v436, %v600
        %v633 = vadd.f32 %v437, %v601
        %v634 = vadd.f32 %v438, %v602
        %v635 = vadd.f32 %v439, %v603
        %v636 = vadd.f32 %v440, %v604
        %637 = vset.pattern.permute.xlu0 2
        %638 = vperm.xlu0 %637, %v172
        %v639 = vpop.permute.xlu0 %638
        %641 = vset.pattern.permute.xlu0 2
        %642 = vperm.xlu0 %641, %v173
        %v643 = vpop.permute.xlu0 %642
        %645 = vset.pattern.permute.xlu0 2
        %646 = vperm.xlu0 %645, %v174
        %v647 = vpop.permute.xlu0 %646
        %649 = vset.pattern.permute.xlu0 2
        %650 = vperm.xlu0 %649, %v175
        %v651 = vpop.permute.xlu0 %650
        %653 = vset.pattern.permute.xlu0 2
        %654 = vperm.xlu0 %653, %v176
        %v655 = vpop.permute.xlu0 %654
        %657 = vset.pattern.permute.xlu0 2
        %658 = vperm.xlu0 %657, %v177
        %v659 = vpop.permute.xlu0 %658
        %661 = vset.pattern.permute.xlu0 2
        %662 = vperm.xlu0 %661, %v178
        %v663 = vpop.permute.xlu0 %662
        %665 = vset.pattern.permute.xlu0 2
        %666 = vperm.xlu0 %665, %v179
        %v667 = vpop.permute.xlu0 %666
        %669 = vset.pattern.permute.xlu0 2
        %670 = vperm.xlu0 %669, %v180
        %v671 = vpop.permute.xlu0 %670
        %673 = vset.pattern.permute.xlu0 2
        %674 = vperm.xlu0 %673, %v181
        %v675 = vpop.permute.xlu0 %674
        %677 = vset.pattern.permute.xlu0 2
        %678 = vperm.xlu0 %677, %v182
        %v679 = vpop.permute.xlu0 %678
        %681 = vset.pattern.permute.xlu0 2
        %682 = vperm.xlu0 %681, %v183
        %v683 = vpop.permute.xlu0 %682
        %685 = vset.pattern.permute.xlu0 2
        %686 = vperm.xlu0 %685, %v184
        %v687 = vpop.permute.xlu0 %686
        %689 = vset.pattern.permute.xlu0 2
        %690 = vperm.xlu0 %689, %v185
        %v691 = vpop.permute.xlu0 %690
        %693 = vset.pattern.permute.xlu0 2
        %694 = vperm.xlu0 %693, %v186
        %v695 = vpop.permute.xlu0 %694
        %697 = vset.pattern.permute.xlu0 2
        %698 = vperm.xlu0 %697, %v187
        %v699 = vpop.permute.xlu0 %698
        %701 = vset.pattern.permute.xlu0 2
        %702 = vperm.xlu0 %701, %v188
        %v703 = vpop.permute.xlu0 %702
        %705 = vset.pattern.permute.xlu0 2
        %706 = vperm.xlu0 %705, %v189
        %v707 = vpop.permute.xlu0 %706
        %709 = vset.pattern.permute.xlu0 2
        %710 = vperm.xlu0 %709, %v190
        %v711 = vpop.permute.xlu0 %710
        %713 = vset.pattern.permute.xlu0 2
        %714 = vperm.xlu0 %713, %v191
        %v715 = vpop.permute.xlu0 %714
        %717 = vset.pattern.permute.xlu0 2
        %718 = vperm.xlu0 %717, %v192
        %v719 = vpop.permute.xlu0 %718
        %721 = vset.pattern.permute.xlu0 2
        %722 = vperm.xlu0 %721, %v193
        %v723 = vpop.permute.xlu0 %722
        %725 = vset.pattern.permute.xlu0 2
        %726 = vperm.xlu0 %725, %v194
        %v727 = vpop.permute.xlu0 %726
        %729 = vset.pattern.permute.xlu0 2
        %730 = vperm.xlu0 %729, %v195
        %v731 = vpop.permute.xlu0 %730
        %733 = vset.pattern.permute.xlu0 2
        %734 = vperm.xlu0 %733, %v196
        %v735 = vpop.permute.xlu0 %734
        %737 = vset.pattern.permute.xlu0 2
        %738 = vperm.xlu0 %737, %v197
        %v739 = vpop.permute.xlu0 %738
        %741 = vset.pattern.permute.xlu0 2
        %742 = vperm.xlu0 %741, %v198
        %v743 = vpop.permute.xlu0 %742
        %745 = vset.pattern.permute.xlu0 2
        %746 = vperm.xlu0 %745, %v199
        %v747 = vpop.permute.xlu0 %746
        %749 = vset.pattern.permute.xlu0 2
        %750 = vperm.xlu0 %749, %v200
        %v751 = vpop.permute.xlu0 %750
        %753 = vset.pattern.permute.xlu0 2
        %754 = vperm.xlu0 %753, %v201
        %v755 = vpop.permute.xlu0 %754
        %757 = vset.pattern.permute.xlu0 2
        %758 = vperm.xlu0 %757, %v202
        %v759 = vpop.permute.xlu0 %758
        %761 = vset.pattern.permute.xlu0 2
        %762 = vperm.xlu0 %761, %v203
        %v763 = vpop.permute.xlu0 %762
        %v765 = vlaneseq
        %v766 = vshrl.u32 %v765, 7
        %v767 = vsub.s32 2, %v766
        %v768 = vrot.slane %v204, %v767
        %v769 = vmul.f32 %v639, %v768
        %v770 = vmul.f32 %v643, %v768
        %v771 = vmul.f32 %v647, %v768
        %v772 = vmul.f32 %v651, %v768
        %v773 = vmul.f32 %v655, %v768
        %v774 = vmul.f32 %v659, %v768
        %v775 = vmul.f32 %v663, %v768
        %v776 = vmul.f32 %v667, %v768
        %v777 = vmul.f32 %v671, %v768
        %v778 = vmul.f32 %v675, %v768
        %v779 = vmul.f32 %v679, %v768
        %v780 = vmul.f32 %v683, %v768
        %v781 = vmul.f32 %v687, %v768
        %v782 = vmul.f32 %v691, %v768
        %v783 = vmul.f32 %v695, %v768
        %v784 = vmul.f32 %v699, %v768
        %v785 = vmul.f32 %v703, %v768
        %v786 = vmul.f32 %v707, %v768
        %v787 = vmul.f32 %v711, %v768
        %v788 = vmul.f32 %v715, %v768
        %v789 = vmul.f32 %v719, %v768
        %v790 = vmul.f32 %v723, %v768
        %v791 = vmul.f32 %v727, %v768
        %v792 = vmul.f32 %v731, %v768
        %v793 = vmul.f32 %v735, %v768
        %v794 = vmul.f32 %v739, %v768
        %v795 = vmul.f32 %v743, %v768
        %v796 = vmul.f32 %v747, %v768
        %v797 = vmul.f32 %v751, %v768
        %v798 = vmul.f32 %v755, %v768
        %v799 = vmul.f32 %v759, %v768
        %v800 = vmul.f32 %v763, %v768
        %v801 = vadd.f32 %v605, %v769
        %v802 = vadd.f32 %v606, %v770
        %v803 = vadd.f32 %v607, %v771
        %v804 = vadd.f32 %v608, %v772
        %v805 = vadd.f32 %v609, %v773
        %v806 = vadd.f32 %v610, %v774
        %v807 = vadd.f32 %v611, %v775
        %v808 = vadd.f32 %v612, %v776
        %v809 = vadd.f32 %v613, %v777
        %v810 = vadd.f32 %v614, %v778
        %v811 = vadd.f32 %v615, %v779
        %v812 = vadd.f32 %v616, %v780
        %v813 = vadd.f32 %v617, %v781
        %v814 = vadd.f32 %v618, %v782
        %v815 = vadd.f32 %v619, %v783
        %v816 = vadd.f32 %v620, %v784
        %v817 = vadd.f32 %v621, %v785
        %v818 = vadd.f32 %v622, %v786
        %v819 = vadd.f32 %v623, %v787
        %v820 = vadd.f32 %v624, %v788
        %v821 = vadd.f32 %v625, %v789
        %v822 = vadd.f32 %v626, %v790
        %v823 = vadd.f32 %v627, %v791
        %v824 = vadd.f32 %v628, %v792
        %v825 = vadd.f32 %v629, %v793
        %v826 = vadd.f32 %v630, %v794
        %v827 = vadd.f32 %v631, %v795
        %v828 = vadd.f32 %v632, %v796
        %v829 = vadd.f32 %v633, %v797
        %v830 = vadd.f32 %v634, %v798
        %v831 = vadd.f32 %v635, %v799
        %v832 = vadd.f32 %v636, %v800
        %833 = vset.pattern.permute.xlu0 3
        %834 = vperm.xlu0 %833, %v172
        %v835 = vpop.permute.xlu0 %834
        %837 = vset.pattern.permute.xlu0 3
        %838 = vperm.xlu0 %837, %v173
        %v839 = vpop.permute.xlu0 %838
        %841 = vset.pattern.permute.xlu0 3
        %842 = vperm.xlu0 %841, %v174
        %v843 = vpop.permute.xlu0 %842
        %845 = vset.pattern.permute.xlu0 3
        %846 = vperm.xlu0 %845, %v175
        %v847 = vpop.permute.xlu0 %846
        %849 = vset.pattern.permute.xlu0 3
        %850 = vperm.xlu0 %849, %v176
        %v851 = vpop.permute.xlu0 %850
        %853 = vset.pattern.permute.xlu0 3
        %854 = vperm.xlu0 %853, %v177
        %v855 = vpop.permute.xlu0 %854
        %857 = vset.pattern.permute.xlu0 3
        %858 = vperm.xlu0 %857, %v178
        %v859 = vpop.permute.xlu0 %858
        %861 = vset.pattern.permute.xlu0 3
        %862 = vperm.xlu0 %861, %v179
        %v863 = vpop.permute.xlu0 %862
        %865 = vset.pattern.permute.xlu0 3
        %866 = vperm.xlu0 %865, %v180
        %v867 = vpop.permute.xlu0 %866
        %869 = vset.pattern.permute.xlu0 3
        %870 = vperm.xlu0 %869, %v181
        %v871 = vpop.permute.xlu0 %870
        %873 = vset.pattern.permute.xlu0 3
        %874 = vperm.xlu0 %873, %v182
        %v875 = vpop.permute.xlu0 %874
        %877 = vset.pattern.permute.xlu0 3
        %878 = vperm.xlu0 %877, %v183
        %v879 = vpop.permute.xlu0 %878
        %881 = vset.pattern.permute.xlu0 3
        %882 = vperm.xlu0 %881, %v184
        %v883 = vpop.permute.xlu0 %882
        %885 = vset.pattern.permute.xlu0 3
        %886 = vperm.xlu0 %885, %v185
        %v887 = vpop.permute.xlu0 %886
        %889 = vset.pattern.permute.xlu0 3
        %890 = vperm.xlu0 %889, %v186
        %v891 = vpop.permute.xlu0 %890
        %893 = vset.pattern.permute.xlu0 3
        %894 = vperm.xlu0 %893, %v187
        %v895 = vpop.permute.xlu0 %894
        %897 = vset.pattern.permute.xlu0 3
        %898 = vperm.xlu0 %897, %v188
        %v899 = vpop.permute.xlu0 %898
        %901 = vset.pattern.permute.xlu0 3
        %902 = vperm.xlu0 %901, %v189
        %v903 = vpop.permute.xlu0 %902
        %905 = vset.pattern.permute.xlu0 3
        %906 = vperm.xlu0 %905, %v190
        %v907 = vpop.permute.xlu0 %906
        %909 = vset.pattern.permute.xlu0 3
        %910 = vperm.xlu0 %909, %v191
        %v911 = vpop.permute.xlu0 %910
        %913 = vset.pattern.permute.xlu0 3
        %914 = vperm.xlu0 %913, %v192
        %v915 = vpop.permute.xlu0 %914
        %917 = vset.pattern.permute.xlu0 3
        %918 = vperm.xlu0 %917, %v193
        %v919 = vpop.permute.xlu0 %918
        %921 = vset.pattern.permute.xlu0 3
        %922 = vperm.xlu0 %921, %v194
        %v923 = vpop.permute.xlu0 %922
        %925 = vset.pattern.permute.xlu0 3
        %926 = vperm.xlu0 %925, %v195
        %v927 = vpop.permute.xlu0 %926
        %929 = vset.pattern.permute.xlu0 3
        %930 = vperm.xlu0 %929, %v196
        %v931 = vpop.permute.xlu0 %930
        %933 = vset.pattern.permute.xlu0 3
        %934 = vperm.xlu0 %933, %v197
        %v935 = vpop.permute.xlu0 %934
        %937 = vset.pattern.permute.xlu0 3
        %938 = vperm.xlu0 %937, %v198
        %v939 = vpop.permute.xlu0 %938
        %941 = vset.pattern.permute.xlu0 3
        %942 = vperm.xlu0 %941, %v199
        %v943 = vpop.permute.xlu0 %942
        %945 = vset.pattern.permute.xlu0 3
        %946 = vperm.xlu0 %945, %v200
        %v947 = vpop.permute.xlu0 %946
        %949 = vset.pattern.permute.xlu0 3
        %950 = vperm.xlu0 %949, %v201
        %v951 = vpop.permute.xlu0 %950
        %953 = vset.pattern.permute.xlu0 3
        %954 = vperm.xlu0 %953, %v202
        %v955 = vpop.permute.xlu0 %954
        %957 = vset.pattern.permute.xlu0 3
        %958 = vperm.xlu0 %957, %v203
        %v959 = vpop.permute.xlu0 %958
        %v961 = vlaneseq
        %v962 = vshrl.u32 %v961, 7
        %v963 = vsub.s32 3, %v962
        %v964 = vrot.slane %v204, %v963
        %v965 = vmul.f32 %v835, %v964
        %v966 = vmul.f32 %v839, %v964
        %v967 = vmul.f32 %v843, %v964
        %v968 = vmul.f32 %v847, %v964
        %v969 = vmul.f32 %v851, %v964
        %v970 = vmul.f32 %v855, %v964
        %v971 = vmul.f32 %v859, %v964
        %v972 = vmul.f32 %v863, %v964
        %v973 = vmul.f32 %v867, %v964
        %v974 = vmul.f32 %v871, %v964
        %v975 = vmul.f32 %v875, %v964
        %v976 = vmul.f32 %v879, %v964
        %v977 = vmul.f32 %v883, %v964
        %v978 = vmul.f32 %v887, %v964
        %v979 = vmul.f32 %v891, %v964
        %v980 = vmul.f32 %v895, %v964
        %v981 = vmul.f32 %v899, %v964
        %v982 = vmul.f32 %v903, %v964
        %v983 = vmul.f32 %v907, %v964
        %v984 = vmul.f32 %v911, %v964
        %v985 = vmul.f32 %v915, %v964
        %v986 = vmul.f32 %v919, %v964
        %v987 = vmul.f32 %v923, %v964
        %v988 = vmul.f32 %v927, %v964
        %v989 = vmul.f32 %v931, %v964
        %v990 = vmul.f32 %v935, %v964
        %v991 = vmul.f32 %v939, %v964
        %v992 = vmul.f32 %v943, %v964
        %v993 = vmul.f32 %v947, %v964
        %v994 = vmul.f32 %v951, %v964
        %v995 = vmul.f32 %v955, %v964
        %v996 = vmul.f32 %v959, %v964
        %v997 = vadd.f32 %v801, %v965
        %v998 = vadd.f32 %v802, %v966
        %v999 = vadd.f32 %v803, %v967
        %v1000 = vadd.f32 %v804, %v968
        %v1001 = vadd.f32 %v805, %v969
        %v1002 = vadd.f32 %v806, %v970
        %v1003 = vadd.f32 %v807, %v971
        %v1004 = vadd.f32 %v808, %v972
        %v1005 = vadd.f32 %v809, %v973
        %v1006 = vadd.f32 %v810, %v974
        %v1007 = vadd.f32 %v811, %v975
        %v1008 = vadd.f32 %v812, %v976
        %v1009 = vadd.f32 %v813, %v977
        %v1010 = vadd.f32 %v814, %v978
        %v1011 = vadd.f32 %v815, %v979
        %v1012 = vadd.f32 %v816, %v980
        %v1013 = vadd.f32 %v817, %v981
        %v1014 = vadd.f32 %v818, %v982
        %v1015 = vadd.f32 %v819, %v983
        %v1016 = vadd.f32 %v820, %v984
        %v1017 = vadd.f32 %v821, %v985
        %v1018 = vadd.f32 %v822, %v986
        %v1019 = vadd.f32 %v823, %v987
        %v1020 = vadd.f32 %v824, %v988
        %v1021 = vadd.f32 %v825, %v989
        %v1022 = vadd.f32 %v826, %v990
        %v1023 = vadd.f32 %v827, %v991
        %v1024 = vadd.f32 %v828, %v992
        %v1025 = vadd.f32 %v829, %v993
        %v1026 = vadd.f32 %v830, %v994
        %v1027 = vadd.f32 %v831, %v995
        %v1028 = vadd.f32 %v832, %v996
        %1029 = vset.pattern.permute.xlu0 4
        %1030 = vperm.xlu0 %1029, %v172
        %v1031 = vpop.permute.xlu0 %1030
        %1033 = vset.pattern.permute.xlu0 4
        %1034 = vperm.xlu0 %1033, %v173
        %v1035 = vpop.permute.xlu0 %1034
        %1037 = vset.pattern.permute.xlu0 4
        %1038 = vperm.xlu0 %1037, %v174
        %v1039 = vpop.permute.xlu0 %1038
        %1041 = vset.pattern.permute.xlu0 4
        %1042 = vperm.xlu0 %1041, %v175
        %v1043 = vpop.permute.xlu0 %1042
        %1045 = vset.pattern.permute.xlu0 4
        %1046 = vperm.xlu0 %1045, %v176
        %v1047 = vpop.permute.xlu0 %1046
        %1049 = vset.pattern.permute.xlu0 4
        %1050 = vperm.xlu0 %1049, %v177
        %v1051 = vpop.permute.xlu0 %1050
        %1053 = vset.pattern.permute.xlu0 4
        %1054 = vperm.xlu0 %1053, %v178
        %v1055 = vpop.permute.xlu0 %1054
        %1057 = vset.pattern.permute.xlu0 4
        %1058 = vperm.xlu0 %1057, %v179
        %v1059 = vpop.permute.xlu0 %1058
        %1061 = vset.pattern.permute.xlu0 4
        %1062 = vperm.xlu0 %1061, %v180
        %v1063 = vpop.permute.xlu0 %1062
        %1065 = vset.pattern.permute.xlu0 4
        %1066 = vperm.xlu0 %1065, %v181
        %v1067 = vpop.permute.xlu0 %1066
        %1069 = vset.pattern.permute.xlu0 4
        %1070 = vperm.xlu0 %1069, %v182
        %v1071 = vpop.permute.xlu0 %1070
        %1073 = vset.pattern.permute.xlu0 4
        %1074 = vperm.xlu0 %1073, %v183
        %v1075 = vpop.permute.xlu0 %1074
        %1077 = vset.pattern.permute.xlu0 4
        %1078 = vperm.xlu0 %1077, %v184
        %v1079 = vpop.permute.xlu0 %1078
        %1081 = vset.pattern.permute.xlu0 4
        %1082 = vperm.xlu0 %1081, %v185
        %v1083 = vpop.permute.xlu0 %1082
        %1085 = vset.pattern.permute.xlu0 4
        %1086 = vperm.xlu0 %1085, %v186
        %v1087 = vpop.permute.xlu0 %1086
        %1089 = vset.pattern.permute.xlu0 4
        %1090 = vperm.xlu0 %1089, %v187
        %v1091 = vpop.permute.xlu0 %1090
        %1093 = vset.pattern.permute.xlu0 4
        %1094 = vperm.xlu0 %1093, %v188
        %v1095 = vpop.permute.xlu0 %1094
        %1097 = vset.pattern.permute.xlu0 4
        %1098 = vperm.xlu0 %1097, %v189
        %v1099 = vpop.permute.xlu0 %1098
        %1101 = vset.pattern.permute.xlu0 4
        %1102 = vperm.xlu0 %1101, %v190
        %v1103 = vpop.permute.xlu0 %1102
        %1105 = vset.pattern.permute.xlu0 4
        %1106 = vperm.xlu0 %1105, %v191
        %v1107 = vpop.permute.xlu0 %1106
        %1109 = vset.pattern.permute.xlu0 4
        %1110 = vperm.xlu0 %1109, %v192
        %v1111 = vpop.permute.xlu0 %1110
        %1113 = vset.pattern.permute.xlu0 4
        %1114 = vperm.xlu0 %1113, %v193
        %v1115 = vpop.permute.xlu0 %1114
        %1117 = vset.pattern.permute.xlu0 4
        %1118 = vperm.xlu0 %1117, %v194
        %v1119 = vpop.permute.xlu0 %1118
        %1121 = vset.pattern.permute.xlu0 4
        %1122 = vperm.xlu0 %1121, %v195
        %v1123 = vpop.permute.xlu0 %1122
        %1125 = vset.pattern.permute.xlu0 4
        %1126 = vperm.xlu0 %1125, %v196
        %v1127 = vpop.permute.xlu0 %1126
        %1129 = vset.pattern.permute.xlu0 4
        %1130 = vperm.xlu0 %1129, %v197
        %v1131 = vpop.permute.xlu0 %1130
        %1133 = vset.pattern.permute.xlu0 4
        %1134 = vperm.xlu0 %1133, %v198
        %v1135 = vpop.permute.xlu0 %1134
        %1137 = vset.pattern.permute.xlu0 4
        %1138 = vperm.xlu0 %1137, %v199
        %v1139 = vpop.permute.xlu0 %1138
        %1141 = vset.pattern.permute.xlu0 4
        %1142 = vperm.xlu0 %1141, %v200
        %v1143 = vpop.permute.xlu0 %1142
        %1145 = vset.pattern.permute.xlu0 4
        %1146 = vperm.xlu0 %1145, %v201
        %v1147 = vpop.permute.xlu0 %1146
        %1149 = vset.pattern.permute.xlu0 4
        %1150 = vperm.xlu0 %1149, %v202
        %v1151 = vpop.permute.xlu0 %1150
        %1153 = vset.pattern.permute.xlu0 4
        %1154 = vperm.xlu0 %1153, %v203
        %v1155 = vpop.permute.xlu0 %1154
        %v1157 = vlaneseq
        %v1158 = vshrl.u32 %v1157, 7
        %v1159 = vsub.s32 4, %v1158
        %v1160 = vrot.slane %v204, %v1159
        %v1161 = vmul.f32 %v1031, %v1160
        %v1162 = vmul.f32 %v1035, %v1160
        %v1163 = vmul.f32 %v1039, %v1160
        %v1164 = vmul.f32 %v1043, %v1160
        %v1165 = vmul.f32 %v1047, %v1160
        %v1166 = vmul.f32 %v1051, %v1160
        %v1167 = vmul.f32 %v1055, %v1160
        %v1168 = vmul.f32 %v1059, %v1160
        %v1169 = vmul.f32 %v1063, %v1160
        %v1170 = vmul.f32 %v1067, %v1160
        %v1171 = vmul.f32 %v1071, %v1160
        %v1172 = vmul.f32 %v1075, %v1160
        %v1173 = vmul.f32 %v1079, %v1160
        %v1174 = vmul.f32 %v1083, %v1160
        %v1175 = vmul.f32 %v1087, %v1160
        %v1176 = vmul.f32 %v1091, %v1160
        %v1177 = vmul.f32 %v1095, %v1160
        %v1178 = vmul.f32 %v1099, %v1160
        %v1179 = vmul.f32 %v1103, %v1160
        %v1180 = vmul.f32 %v1107, %v1160
        %v1181 = vmul.f32 %v1111, %v1160
        %v1182 = vmul.f32 %v1115, %v1160
        %v1183 = vmul.f32 %v1119, %v1160
        %v1184 = vmul.f32 %v1123, %v1160
        %v1185 = vmul.f32 %v1127, %v1160
        %v1186 = vmul.f32 %v1131, %v1160
        %v1187 = vmul.f32 %v1135, %v1160
        %v1188 = vmul.f32 %v1139, %v1160
        %v1189 = vmul.f32 %v1143, %v1160
        %v1190 = vmul.f32 %v1147, %v1160
        %v1191 = vmul.f32 %v1151, %v1160
        %v1192 = vmul.f32 %v1155, %v1160
        %v1193 = vadd.f32 %v997, %v1161
        %v1194 = vadd.f32 %v998, %v1162
        %v1195 = vadd.f32 %v999, %v1163
        %v1196 = vadd.f32 %v1000, %v1164
        %v1197 = vadd.f32 %v1001, %v1165
        %v1198 = vadd.f32 %v1002, %v1166
        %v1199 = vadd.f32 %v1003, %v1167
        %v1200 = vadd.f32 %v1004, %v1168
        %v1201 = vadd.f32 %v1005, %v1169
        %v1202 = vadd.f32 %v1006, %v1170
        %v1203 = vadd.f32 %v1007, %v1171
        %v1204 = vadd.f32 %v1008, %v1172
        %v1205 = vadd.f32 %v1009, %v1173
        %v1206 = vadd.f32 %v1010, %v1174
        %v1207 = vadd.f32 %v1011, %v1175
        %v1208 = vadd.f32 %v1012, %v1176
        %v1209 = vadd.f32 %v1013, %v1177
        %v1210 = vadd.f32 %v1014, %v1178
        %v1211 = vadd.f32 %v1015, %v1179
        %v1212 = vadd.f32 %v1016, %v1180
        %v1213 = vadd.f32 %v1017, %v1181
        %v1214 = vadd.f32 %v1018, %v1182
        %v1215 = vadd.f32 %v1019, %v1183
        %v1216 = vadd.f32 %v1020, %v1184
        %v1217 = vadd.f32 %v1021, %v1185
        %v1218 = vadd.f32 %v1022, %v1186
        %v1219 = vadd.f32 %v1023, %v1187
        %v1220 = vadd.f32 %v1024, %v1188
        %v1221 = vadd.f32 %v1025, %v1189
        %v1222 = vadd.f32 %v1026, %v1190
        %v1223 = vadd.f32 %v1027, %v1191
        %v1224 = vadd.f32 %v1028, %v1192
        %1225 = vset.pattern.permute.xlu0 5
        %1226 = vperm.xlu0 %1225, %v172
        %v1227 = vpop.permute.xlu0 %1226
        %1229 = vset.pattern.permute.xlu0 5
        %1230 = vperm.xlu0 %1229, %v173
        %v1231 = vpop.permute.xlu0 %1230
        %1233 = vset.pattern.permute.xlu0 5
        %1234 = vperm.xlu0 %1233, %v174
        %v1235 = vpop.permute.xlu0 %1234
        %1237 = vset.pattern.permute.xlu0 5
        %1238 = vperm.xlu0 %1237, %v175
        %v1239 = vpop.permute.xlu0 %1238
        %1241 = vset.pattern.permute.xlu0 5
        %1242 = vperm.xlu0 %1241, %v176
        %v1243 = vpop.permute.xlu0 %1242
        %1245 = vset.pattern.permute.xlu0 5
        %1246 = vperm.xlu0 %1245, %v177
        %v1247 = vpop.permute.xlu0 %1246
        %1249 = vset.pattern.permute.xlu0 5
        %1250 = vperm.xlu0 %1249, %v178
        %v1251 = vpop.permute.xlu0 %1250
        %1253 = vset.pattern.permute.xlu0 5
        %1254 = vperm.xlu0 %1253, %v179
        %v1255 = vpop.permute.xlu0 %1254
        %1257 = vset.pattern.permute.xlu0 5
        %1258 = vperm.xlu0 %1257, %v180
        %v1259 = vpop.permute.xlu0 %1258
        %1261 = vset.pattern.permute.xlu0 5
        %1262 = vperm.xlu0 %1261, %v181
        %v1263 = vpop.permute.xlu0 %1262
        %1265 = vset.pattern.permute.xlu0 5
        %1266 = vperm.xlu0 %1265, %v182
        %v1267 = vpop.permute.xlu0 %1266
        %1269 = vset.pattern.permute.xlu0 5
        %1270 = vperm.xlu0 %1269, %v183
        %v1271 = vpop.permute.xlu0 %1270
        %1273 = vset.pattern.permute.xlu0 5
        %1274 = vperm.xlu0 %1273, %v184
        %v1275 = vpop.permute.xlu0 %1274
        %1277 = vset.pattern.permute.xlu0 5
        %1278 = vperm.xlu0 %1277, %v185
        %v1279 = vpop.permute.xlu0 %1278
        %1281 = vset.pattern.permute.xlu0 5
        %1282 = vperm.xlu0 %1281, %v186
        %v1283 = vpop.permute.xlu0 %1282
        %1285 = vset.pattern.permute.xlu0 5
        %1286 = vperm.xlu0 %1285, %v187
        %v1287 = vpop.permute.xlu0 %1286
        %1289 = vset.pattern.permute.xlu0 5
        %1290 = vperm.xlu0 %1289, %v188
        %v1291 = vpop.permute.xlu0 %1290
        %1293 = vset.pattern.permute.xlu0 5
        %1294 = vperm.xlu0 %1293, %v189
        %v1295 = vpop.permute.xlu0 %1294
        %1297 = vset.pattern.permute.xlu0 5
        %1298 = vperm.xlu0 %1297, %v190
        %v1299 = vpop.permute.xlu0 %1298
        %1301 = vset.pattern.permute.xlu0 5
        %1302 = vperm.xlu0 %1301, %v191
        %v1303 = vpop.permute.xlu0 %1302
        %1305 = vset.pattern.permute.xlu0 5
        %1306 = vperm.xlu0 %1305, %v192
        %v1307 = vpop.permute.xlu0 %1306
        %1309 = vset.pattern.permute.xlu0 5
        %1310 = vperm.xlu0 %1309, %v193
        %v1311 = vpop.permute.xlu0 %1310
        %1313 = vset.pattern.permute.xlu0 5
        %1314 = vperm.xlu0 %1313, %v194
        %v1315 = vpop.permute.xlu0 %1314
        %1317 = vset.pattern.permute.xlu0 5
        %1318 = vperm.xlu0 %1317, %v195
        %v1319 = vpop.permute.xlu0 %1318
        %1321 = vset.pattern.permute.xlu0 5
        %1322 = vperm.xlu0 %1321, %v196
        %v1323 = vpop.permute.xlu0 %1322
        %1325 = vset.pattern.permute.xlu0 5
        %1326 = vperm.xlu0 %1325, %v197
        %v1327 = vpop.permute.xlu0 %1326
        %1329 = vset.pattern.permute.xlu0 5
        %1330 = vperm.xlu0 %1329, %v198
        %v1331 = vpop.permute.xlu0 %1330
        %1333 = vset.pattern.permute.xlu0 5
        %1334 = vperm.xlu0 %1333, %v199
        %v1335 = vpop.permute.xlu0 %1334
        %1337 = vset.pattern.permute.xlu0 5
        %1338 = vperm.xlu0 %1337, %v200
        %v1339 = vpop.permute.xlu0 %1338
        %1341 = vset.pattern.permute.xlu0 5
        %1342 = vperm.xlu0 %1341, %v201
        %v1343 = vpop.permute.xlu0 %1342
        %1345 = vset.pattern.permute.xlu0 5
        %1346 = vperm.xlu0 %1345, %v202
        %v1347 = vpop.permute.xlu0 %1346
        %1349 = vset.pattern.permute.xlu0 5
        %1350 = vperm.xlu0 %1349, %v203
        %v1351 = vpop.permute.xlu0 %1350
        %v1353 = vlaneseq
        %v1354 = vshrl.u32 %v1353, 7
        %v1355 = vsub.s32 5, %v1354
        %v1356 = vrot.slane %v204, %v1355
        %v1357 = vmul.f32 %v1227, %v1356
        %v1358 = vmul.f32 %v1231, %v1356
        %v1359 = vmul.f32 %v1235, %v1356
        %v1360 = vmul.f32 %v1239, %v1356
        %v1361 = vmul.f32 %v1243, %v1356
        %v1362 = vmul.f32 %v1247, %v1356
        %v1363 = vmul.f32 %v1251, %v1356
        %v1364 = vmul.f32 %v1255, %v1356
        %v1365 = vmul.f32 %v1259, %v1356
        %v1366 = vmul.f32 %v1263, %v1356
        %v1367 = vmul.f32 %v1267, %v1356
        %v1368 = vmul.f32 %v1271, %v1356
        %v1369 = vmul.f32 %v1275, %v1356
        %v1370 = vmul.f32 %v1279, %v1356
        %v1371 = vmul.f32 %v1283, %v1356
        %v1372 = vmul.f32 %v1287, %v1356
        %v1373 = vmul.f32 %v1291, %v1356
        %v1374 = vmul.f32 %v1295, %v1356
        %v1375 = vmul.f32 %v1299, %v1356
        %v1376 = vmul.f32 %v1303, %v1356
        %v1377 = vmul.f32 %v1307, %v1356
        %v1378 = vmul.f32 %v1311, %v1356
        %v1379 = vmul.f32 %v1315, %v1356
        %v1380 = vmul.f32 %v1319, %v1356
        %v1381 = vmul.f32 %v1323, %v1356
        %v1382 = vmul.f32 %v1327, %v1356
        %v1383 = vmul.f32 %v1331, %v1356
        %v1384 = vmul.f32 %v1335, %v1356
        %v1385 = vmul.f32 %v1339, %v1356
        %v1386 = vmul.f32 %v1343, %v1356
        %v1387 = vmul.f32 %v1347, %v1356
        %v1388 = vmul.f32 %v1351, %v1356
        %v1389 = vadd.f32 %v1193, %v1357
        %v1390 = vadd.f32 %v1194, %v1358
        %v1391 = vadd.f32 %v1195, %v1359
        %v1392 = vadd.f32 %v1196, %v1360
        %v1393 = vadd.f32 %v1197, %v1361
        %v1394 = vadd.f32 %v1198, %v1362
        %v1395 = vadd.f32 %v1199, %v1363
        %v1396 = vadd.f32 %v1200, %v1364
        %v1397 = vadd.f32 %v1201, %v1365
        %v1398 = vadd.f32 %v1202, %v1366
        %v1399 = vadd.f32 %v1203, %v1367
        %v1400 = vadd.f32 %v1204, %v1368
        %v1401 = vadd.f32 %v1205, %v1369
        %v1402 = vadd.f32 %v1206, %v1370
        %v1403 = vadd.f32 %v1207, %v1371
        %v1404 = vadd.f32 %v1208, %v1372
        %v1405 = vadd.f32 %v1209, %v1373
        %v1406 = vadd.f32 %v1210, %v1374
        %v1407 = vadd.f32 %v1211, %v1375
        %v1408 = vadd.f32 %v1212, %v1376
        %v1409 = vadd.f32 %v1213, %v1377
        %v1410 = vadd.f32 %v1214, %v1378
        %v1411 = vadd.f32 %v1215, %v1379
        %v1412 = vadd.f32 %v1216, %v1380
        %v1413 = vadd.f32 %v1217, %v1381
        %v1414 = vadd.f32 %v1218, %v1382
        %v1415 = vadd.f32 %v1219, %v1383
        %v1416 = vadd.f32 %v1220, %v1384
        %v1417 = vadd.f32 %v1221, %v1385
        %v1418 = vadd.f32 %v1222, %v1386
        %v1419 = vadd.f32 %v1223, %v1387
        %v1420 = vadd.f32 %v1224, %v1388
        %1421 = vset.pattern.permute.xlu0 6
        %1422 = vperm.xlu0 %1421, %v172
        %v1423 = vpop.permute.xlu0 %1422
        %1425 = vset.pattern.permute.xlu0 6
        %1426 = vperm.xlu0 %1425, %v173
        %v1427 = vpop.permute.xlu0 %1426
        %1429 = vset.pattern.permute.xlu0 6
        %1430 = vperm.xlu0 %1429, %v174
        %v1431 = vpop.permute.xlu0 %1430
        %1433 = vset.pattern.permute.xlu0 6
        %1434 = vperm.xlu0 %1433, %v175
        %v1435 = vpop.permute.xlu0 %1434
        %1437 = vset.pattern.permute.xlu0 6
        %1438 = vperm.xlu0 %1437, %v176
        %v1439 = vpop.permute.xlu0 %1438
        %1441 = vset.pattern.permute.xlu0 6
        %1442 = vperm.xlu0 %1441, %v177
        %v1443 = vpop.permute.xlu0 %1442
        %1445 = vset.pattern.permute.xlu0 6
        %1446 = vperm.xlu0 %1445, %v178
        %v1447 = vpop.permute.xlu0 %1446
        %1449 = vset.pattern.permute.xlu0 6
        %1450 = vperm.xlu0 %1449, %v179
        %v1451 = vpop.permute.xlu0 %1450
        %1453 = vset.pattern.permute.xlu0 6
        %1454 = vperm.xlu0 %1453, %v180
        %v1455 = vpop.permute.xlu0 %1454
        %1457 = vset.pattern.permute.xlu0 6
        %1458 = vperm.xlu0 %1457, %v181
        %v1459 = vpop.permute.xlu0 %1458
        %1461 = vset.pattern.permute.xlu0 6
        %1462 = vperm.xlu0 %1461, %v182
        %v1463 = vpop.permute.xlu0 %1462
        %1465 = vset.pattern.permute.xlu0 6
        %1466 = vperm.xlu0 %1465, %v183
        %v1467 = vpop.permute.xlu0 %1466
        %1469 = vset.pattern.permute.xlu0 6
        %1470 = vperm.xlu0 %1469, %v184
        %v1471 = vpop.permute.xlu0 %1470
        %1473 = vset.pattern.permute.xlu0 6
        %1474 = vperm.xlu0 %1473, %v185
        %v1475 = vpop.permute.xlu0 %1474
        %1477 = vset.pattern.permute.xlu0 6
        %1478 = vperm.xlu0 %1477, %v186
        %v1479 = vpop.permute.xlu0 %1478
        %1481 = vset.pattern.permute.xlu0 6
        %1482 = vperm.xlu0 %1481, %v187
        %v1483 = vpop.permute.xlu0 %1482
        %1485 = vset.pattern.permute.xlu0 6
        %1486 = vperm.xlu0 %1485, %v188
        %v1487 = vpop.permute.xlu0 %1486
        %1489 = vset.pattern.permute.xlu0 6
        %1490 = vperm.xlu0 %1489, %v189
        %v1491 = vpop.permute.xlu0 %1490
        %1493 = vset.pattern.permute.xlu0 6
        %1494 = vperm.xlu0 %1493, %v190
        %v1495 = vpop.permute.xlu0 %1494
        %1497 = vset.pattern.permute.xlu0 6
        %1498 = vperm.xlu0 %1497, %v191
        %v1499 = vpop.permute.xlu0 %1498
        %1501 = vset.pattern.permute.xlu0 6
        %1502 = vperm.xlu0 %1501, %v192
        %v1503 = vpop.permute.xlu0 %1502
        %1505 = vset.pattern.permute.xlu0 6
        %1506 = vperm.xlu0 %1505, %v193
        %v1507 = vpop.permute.xlu0 %1506
        %1509 = vset.pattern.permute.xlu0 6
        %1510 = vperm.xlu0 %1509, %v194
        %v1511 = vpop.permute.xlu0 %1510
        %1513 = vset.pattern.permute.xlu0 6
        %1514 = vperm.xlu0 %1513, %v195
        %v1515 = vpop.permute.xlu0 %1514
        %1517 = vset.pattern.permute.xlu0 6
        %1518 = vperm.xlu0 %1517, %v196
        %v1519 = vpop.permute.xlu0 %1518
        %1521 = vset.pattern.permute.xlu0 6
        %1522 = vperm.xlu0 %1521, %v197
        %v1523 = vpop.permute.xlu0 %1522
        %1525 = vset.pattern.permute.xlu0 6
        %1526 = vperm.xlu0 %1525, %v198
        %v1527 = vpop.permute.xlu0 %1526
        %1529 = vset.pattern.permute.xlu0 6
        %1530 = vperm.xlu0 %1529, %v199
        %v1531 = vpop.permute.xlu0 %1530
        %1533 = vset.pattern.permute.xlu0 6
        %1534 = vperm.xlu0 %1533, %v200
        %v1535 = vpop.permute.xlu0 %1534
        %1537 = vset.pattern.permute.xlu0 6
        %1538 = vperm.xlu0 %1537, %v201
        %v1539 = vpop.permute.xlu0 %1538
        %1541 = vset.pattern.permute.xlu0 6
        %1542 = vperm.xlu0 %1541, %v202
        %v1543 = vpop.permute.xlu0 %1542
        %1545 = vset.pattern.permute.xlu0 6
        %1546 = vperm.xlu0 %1545, %v203
        %v1547 = vpop.permute.xlu0 %1546
        %v1549 = vlaneseq
        %v1550 = vshrl.u32 %v1549, 7
        %v1551 = vsub.s32 6, %v1550
        %v1552 = vrot.slane %v204, %v1551
        %v1553 = vmul.f32 %v1423, %v1552
        %v1554 = vmul.f32 %v1427, %v1552
        %v1555 = vmul.f32 %v1431, %v1552
        %v1556 = vmul.f32 %v1435, %v1552
        %v1557 = vmul.f32 %v1439, %v1552
        %v1558 = vmul.f32 %v1443, %v1552
        %v1559 = vmul.f32 %v1447, %v1552
        %v1560 = vmul.f32 %v1451, %v1552
        %v1561 = vmul.f32 %v1455, %v1552
        %v1562 = vmul.f32 %v1459, %v1552
        %v1563 = vmul.f32 %v1463, %v1552
        %v1564 = vmul.f32 %v1467, %v1552
        %v1565 = vmul.f32 %v1471, %v1552
        %v1566 = vmul.f32 %v1475, %v1552
        %v1567 = vmul.f32 %v1479, %v1552
        %v1568 = vmul.f32 %v1483, %v1552
        %v1569 = vmul.f32 %v1487, %v1552
        %v1570 = vmul.f32 %v1491, %v1552
        %v1571 = vmul.f32 %v1495, %v1552
        %v1572 = vmul.f32 %v1499, %v1552
        %v1573 = vmul.f32 %v1503, %v1552
        %v1574 = vmul.f32 %v1507, %v1552
        %v1575 = vmul.f32 %v1511, %v1552
        %v1576 = vmul.f32 %v1515, %v1552
        %v1577 = vmul.f32 %v1519, %v1552
        %v1578 = vmul.f32 %v1523, %v1552
        %v1579 = vmul.f32 %v1527, %v1552
        %v1580 = vmul.f32 %v1531, %v1552
        %v1581 = vmul.f32 %v1535, %v1552
        %v1582 = vmul.f32 %v1539, %v1552
        %v1583 = vmul.f32 %v1543, %v1552
        %v1584 = vmul.f32 %v1547, %v1552
        %v1585 = vadd.f32 %v1389, %v1553
        %v1586 = vadd.f32 %v1390, %v1554
        %v1587 = vadd.f32 %v1391, %v1555
        %v1588 = vadd.f32 %v1392, %v1556
        %v1589 = vadd.f32 %v1393, %v1557
        %v1590 = vadd.f32 %v1394, %v1558
        %v1591 = vadd.f32 %v1395, %v1559
        %v1592 = vadd.f32 %v1396, %v1560
        %v1593 = vadd.f32 %v1397, %v1561
        %v1594 = vadd.f32 %v1398, %v1562
        %v1595 = vadd.f32 %v1399, %v1563
        %v1596 = vadd.f32 %v1400, %v1564
        %v1597 = vadd.f32 %v1401, %v1565
        %v1598 = vadd.f32 %v1402, %v1566
        %v1599 = vadd.f32 %v1403, %v1567
        %v1600 = vadd.f32 %v1404, %v1568
        %v1601 = vadd.f32 %v1405, %v1569
        %v1602 = vadd.f32 %v1406, %v1570
        %v1603 = vadd.f32 %v1407, %v1571
        %v1604 = vadd.f32 %v1408, %v1572
        %v1605 = vadd.f32 %v1409, %v1573
        %v1606 = vadd.f32 %v1410, %v1574
        %v1607 = vadd.f32 %v1411, %v1575
        %v1608 = vadd.f32 %v1412, %v1576
        %v1609 = vadd.f32 %v1413, %v1577
        %v1610 = vadd.f32 %v1414, %v1578
        %v1611 = vadd.f32 %v1415, %v1579
        %v1612 = vadd.f32 %v1416, %v1580
        %v1613 = vadd.f32 %v1417, %v1581
        %v1614 = vadd.f32 %v1418, %v1582
        %v1615 = vadd.f32 %v1419, %v1583
        %v1616 = vadd.f32 %v1420, %v1584
        %1617 = vset.pattern.permute.xlu0 7
        %1618 = vperm.xlu0 %1617, %v172
        %v1619 = vpop.permute.xlu0 %1618
        %1621 = vset.pattern.permute.xlu0 7
        %1622 = vperm.xlu0 %1621, %v173
        %v1623 = vpop.permute.xlu0 %1622
        %1625 = vset.pattern.permute.xlu0 7
        %1626 = vperm.xlu0 %1625, %v174
        %v1627 = vpop.permute.xlu0 %1626
        %1629 = vset.pattern.permute.xlu0 7
        %1630 = vperm.xlu0 %1629, %v175
        %v1631 = vpop.permute.xlu0 %1630
        %1633 = vset.pattern.permute.xlu0 7
        %1634 = vperm.xlu0 %1633, %v176
        %v1635 = vpop.permute.xlu0 %1634
        %1637 = vset.pattern.permute.xlu0 7
        %1638 = vperm.xlu0 %1637, %v177
        %v1639 = vpop.permute.xlu0 %1638
        %1641 = vset.pattern.permute.xlu0 7
        %1642 = vperm.xlu0 %1641, %v178
        %v1643 = vpop.permute.xlu0 %1642
        %1645 = vset.pattern.permute.xlu0 7
        %1646 = vperm.xlu0 %1645, %v179
        %v1647 = vpop.permute.xlu0 %1646
        %1649 = vset.pattern.permute.xlu0 7
        %1650 = vperm.xlu0 %1649, %v180
        %v1651 = vpop.permute.xlu0 %1650
        %1653 = vset.pattern.permute.xlu0 7
        %1654 = vperm.xlu0 %1653, %v181
        %v1655 = vpop.permute.xlu0 %1654
        %1657 = vset.pattern.permute.xlu0 7
        %1658 = vperm.xlu0 %1657, %v182
        %v1659 = vpop.permute.xlu0 %1658
        %1661 = vset.pattern.permute.xlu0 7
        %1662 = vperm.xlu0 %1661, %v183
        %v1663 = vpop.permute.xlu0 %1662
        %1665 = vset.pattern.permute.xlu0 7
        %1666 = vperm.xlu0 %1665, %v184
        %v1667 = vpop.permute.xlu0 %1666
        %1669 = vset.pattern.permute.xlu0 7
        %1670 = vperm.xlu0 %1669, %v185
        %v1671 = vpop.permute.xlu0 %1670
        %1673 = vset.pattern.permute.xlu0 7
        %1674 = vperm.xlu0 %1673, %v186
        %v1675 = vpop.permute.xlu0 %1674
        %1677 = vset.pattern.permute.xlu0 7
        %1678 = vperm.xlu0 %1677, %v187
        %v1679 = vpop.permute.xlu0 %1678
        %1681 = vset.pattern.permute.xlu0 7
        %1682 = vperm.xlu0 %1681, %v188
        %v1683 = vpop.permute.xlu0 %1682
        %1685 = vset.pattern.permute.xlu0 7
        %1686 = vperm.xlu0 %1685, %v189
        %v1687 = vpop.permute.xlu0 %1686
        %1689 = vset.pattern.permute.xlu0 7
        %1690 = vperm.xlu0 %1689, %v190
        %v1691 = vpop.permute.xlu0 %1690
        %1693 = vset.pattern.permute.xlu0 7
        %1694 = vperm.xlu0 %1693, %v191
        %v1695 = vpop.permute.xlu0 %1694
        %1697 = vset.pattern.permute.xlu0 7
        %1698 = vperm.xlu0 %1697, %v192
        %v1699 = vpop.permute.xlu0 %1698
        %1701 = vset.pattern.permute.xlu0 7
        %1702 = vperm.xlu0 %1701, %v193
        %v1703 = vpop.permute.xlu0 %1702
        %1705 = vset.pattern.permute.xlu0 7
        %1706 = vperm.xlu0 %1705, %v194
        %v1707 = vpop.permute.xlu0 %1706
        %1709 = vset.pattern.permute.xlu0 7
        %1710 = vperm.xlu0 %1709, %v195
        %v1711 = vpop.permute.xlu0 %1710
        %1713 = vset.pattern.permute.xlu0 7
        %1714 = vperm.xlu0 %1713, %v196
        %v1715 = vpop.permute.xlu0 %1714
        %1717 = vset.pattern.permute.xlu0 7
        %1718 = vperm.xlu0 %1717, %v197
        %v1719 = vpop.permute.xlu0 %1718
        %1721 = vset.pattern.permute.xlu0 7
        %1722 = vperm.xlu0 %1721, %v198
        %v1723 = vpop.permute.xlu0 %1722
        %1725 = vset.pattern.permute.xlu0 7
        %1726 = vperm.xlu0 %1725, %v199
        %v1727 = vpop.permute.xlu0 %1726
        %1729 = vset.pattern.permute.xlu0 7
        %1730 = vperm.xlu0 %1729, %v200
        %v1731 = vpop.permute.xlu0 %1730
        %1733 = vset.pattern.permute.xlu0 7
        %1734 = vperm.xlu0 %1733, %v201
        %v1735 = vpop.permute.xlu0 %1734
        %1737 = vset.pattern.permute.xlu0 7
        %1738 = vperm.xlu0 %1737, %v202
        %v1739 = vpop.permute.xlu0 %1738
        %1741 = vset.pattern.permute.xlu0 7
        %1742 = vperm.xlu0 %1741, %v203
        %v1743 = vpop.permute.xlu0 %1742
        %v1745 = vlaneseq
        %v1746 = vshrl.u32 %v1745, 7
        %v1747 = vsub.s32 7, %v1746
        %v1748 = vrot.slane %v204, %v1747
        %v1749 = vmul.f32 %v1619, %v1748
        %v1750 = vmul.f32 %v1623, %v1748
        %v1751 = vmul.f32 %v1627, %v1748
        %v1752 = vmul.f32 %v1631, %v1748
        %v1753 = vmul.f32 %v1635, %v1748
        %v1754 = vmul.f32 %v1639, %v1748
        %v1755 = vmul.f32 %v1643, %v1748
        %v1756 = vmul.f32 %v1647, %v1748
        %v1757 = vmul.f32 %v1651, %v1748
        %v1758 = vmul.f32 %v1655, %v1748
        %v1759 = vmul.f32 %v1659, %v1748
        %v1760 = vmul.f32 %v1663, %v1748
        %v1761 = vmul.f32 %v1667, %v1748
        %v1762 = vmul.f32 %v1671, %v1748
        %v1763 = vmul.f32 %v1675, %v1748
        %v1764 = vmul.f32 %v1679, %v1748
        %v1765 = vmul.f32 %v1683, %v1748
        %v1766 = vmul.f32 %v1687, %v1748
        %v1767 = vmul.f32 %v1691, %v1748
        %v1768 = vmul.f32 %v1695, %v1748
        %v1769 = vmul.f32 %v1699, %v1748
        %v1770 = vmul.f32 %v1703, %v1748
        %v1771 = vmul.f32 %v1707, %v1748
        %v1772 = vmul.f32 %v1711, %v1748
        %v1773 = vmul.f32 %v1715, %v1748
        %v1774 = vmul.f32 %v1719, %v1748
        %v1775 = vmul.f32 %v1723, %v1748
        %v1776 = vmul.f32 %v1727, %v1748
        %v1777 = vmul.f32 %v1731, %v1748
        %v1778 = vmul.f32 %v1735, %v1748
        %v1779 = vmul.f32 %v1739, %v1748
        %v1780 = vmul.f32 %v1743, %v1748
        %v1781 = vadd.f32 %v1585, %v1749
        %v1782 = vadd.f32 %v1586, %v1750
        %v1783 = vadd.f32 %v1587, %v1751
        %v1784 = vadd.f32 %v1588, %v1752
        %v1785 = vadd.f32 %v1589, %v1753
        %v1786 = vadd.f32 %v1590, %v1754
        %v1787 = vadd.f32 %v1591, %v1755
        %v1788 = vadd.f32 %v1592, %v1756
        %v1789 = vadd.f32 %v1593, %v1757
        %v1790 = vadd.f32 %v1594, %v1758
        %v1791 = vadd.f32 %v1595, %v1759
        %v1792 = vadd.f32 %v1596, %v1760
        %v1793 = vadd.f32 %v1597, %v1761
        %v1794 = vadd.f32 %v1598, %v1762
        %v1795 = vadd.f32 %v1599, %v1763
        %v1796 = vadd.f32 %v1600, %v1764
        %v1797 = vadd.f32 %v1601, %v1765
        %v1798 = vadd.f32 %v1602, %v1766
        %v1799 = vadd.f32 %v1603, %v1767
        %v1800 = vadd.f32 %v1604, %v1768
        %v1801 = vadd.f32 %v1605, %v1769
        %v1802 = vadd.f32 %v1606, %v1770
        %v1803 = vadd.f32 %v1607, %v1771
        %v1804 = vadd.f32 %v1608, %v1772
        %v1805 = vadd.f32 %v1609, %v1773
        %v1806 = vadd.f32 %v1610, %v1774
        %v1807 = vadd.f32 %v1611, %v1775
        %v1808 = vadd.f32 %v1612, %v1776
        %v1809 = vadd.f32 %v1613, %v1777
        %v1810 = vadd.f32 %v1614, %v1778
        %v1811 = vadd.f32 %v1615, %v1779
        %v1812 = vadd.f32 %v1616, %v1780
        %1813 = vset.pattern.permute.xlu0 8
        %1814 = vperm.xlu0 %1813, %v172
        %v1815 = vpop.permute.xlu0 %1814
        %1817 = vset.pattern.permute.xlu0 8
        %1818 = vperm.xlu0 %1817, %v173
        %v1819 = vpop.permute.xlu0 %1818
        %1821 = vset.pattern.permute.xlu0 8
        %1822 = vperm.xlu0 %1821, %v174
        %v1823 = vpop.permute.xlu0 %1822
        %1825 = vset.pattern.permute.xlu0 8
        %1826 = vperm.xlu0 %1825, %v175
        %v1827 = vpop.permute.xlu0 %1826
        %1829 = vset.pattern.permute.xlu0 8
        %1830 = vperm.xlu0 %1829, %v176
        %v1831 = vpop.permute.xlu0 %1830
        %1833 = vset.pattern.permute.xlu0 8
        %1834 = vperm.xlu0 %1833, %v177
        %v1835 = vpop.permute.xlu0 %1834
        %1837 = vset.pattern.permute.xlu0 8
        %1838 = vperm.xlu0 %1837, %v178
        %v1839 = vpop.permute.xlu0 %1838
        %1841 = vset.pattern.permute.xlu0 8
        %1842 = vperm.xlu0 %1841, %v179
        %v1843 = vpop.permute.xlu0 %1842
        %1845 = vset.pattern.permute.xlu0 8
        %1846 = vperm.xlu0 %1845, %v180
        %v1847 = vpop.permute.xlu0 %1846
        %1849 = vset.pattern.permute.xlu0 8
        %1850 = vperm.xlu0 %1849, %v181
        %v1851 = vpop.permute.xlu0 %1850
        %1853 = vset.pattern.permute.xlu0 8
        %1854 = vperm.xlu0 %1853, %v182
        %v1855 = vpop.permute.xlu0 %1854
        %1857 = vset.pattern.permute.xlu0 8
        %1858 = vperm.xlu0 %1857, %v183
        %v1859 = vpop.permute.xlu0 %1858
        %1861 = vset.pattern.permute.xlu0 8
        %1862 = vperm.xlu0 %1861, %v184
        %v1863 = vpop.permute.xlu0 %1862
        %1865 = vset.pattern.permute.xlu0 8
        %1866 = vperm.xlu0 %1865, %v185
        %v1867 = vpop.permute.xlu0 %1866
        %1869 = vset.pattern.permute.xlu0 8
        %1870 = vperm.xlu0 %1869, %v186
        %v1871 = vpop.permute.xlu0 %1870
        %1873 = vset.pattern.permute.xlu0 8
        %1874 = vperm.xlu0 %1873, %v187
        %v1875 = vpop.permute.xlu0 %1874
        %1877 = vset.pattern.permute.xlu0 8
        %1878 = vperm.xlu0 %1877, %v188
        %v1879 = vpop.permute.xlu0 %1878
        %1881 = vset.pattern.permute.xlu0 8
        %1882 = vperm.xlu0 %1881, %v189
        %v1883 = vpop.permute.xlu0 %1882
        %1885 = vset.pattern.permute.xlu0 8
        %1886 = vperm.xlu0 %1885, %v190
        %v1887 = vpop.permute.xlu0 %1886
        %1889 = vset.pattern.permute.xlu0 8
        %1890 = vperm.xlu0 %1889, %v191
        %v1891 = vpop.permute.xlu0 %1890
        %1893 = vset.pattern.permute.xlu0 8
        %1894 = vperm.xlu0 %1893, %v192
        %v1895 = vpop.permute.xlu0 %1894
        %1897 = vset.pattern.permute.xlu0 8
        %1898 = vperm.xlu0 %1897, %v193
        %v1899 = vpop.permute.xlu0 %1898
        %1901 = vset.pattern.permute.xlu0 8
        %1902 = vperm.xlu0 %1901, %v194
        %v1903 = vpop.permute.xlu0 %1902
        %1905 = vset.pattern.permute.xlu0 8
        %1906 = vperm.xlu0 %1905, %v195
        %v1907 = vpop.permute.xlu0 %1906
        %1909 = vset.pattern.permute.xlu0 8
        %1910 = vperm.xlu0 %1909, %v196
        %v1911 = vpop.permute.xlu0 %1910
        %1913 = vset.pattern.permute.xlu0 8
        %1914 = vperm.xlu0 %1913, %v197
        %v1915 = vpop.permute.xlu0 %1914
        %1917 = vset.pattern.permute.xlu0 8
        %1918 = vperm.xlu0 %1917, %v198
        %v1919 = vpop.permute.xlu0 %1918
        %1921 = vset.pattern.permute.xlu0 8
        %1922 = vperm.xlu0 %1921, %v199
        %v1923 = vpop.permute.xlu0 %1922
        %1925 = vset.pattern.permute.xlu0 8
        %1926 = vperm.xlu0 %1925, %v200
        %v1927 = vpop.permute.xlu0 %1926
        %1929 = vset.pattern.permute.xlu0 8
        %1930 = vperm.xlu0 %1929, %v201
        %v1931 = vpop.permute.xlu0 %1930
        %1933 = vset.pattern.permute.xlu0 8
        %1934 = vperm.xlu0 %1933, %v202
        %v1935 = vpop.permute.xlu0 %1934
        %1937 = vset.pattern.permute.xlu0 8
        %1938 = vperm.xlu0 %1937, %v203
        %v1939 = vpop.permute.xlu0 %1938
        %v1941 = vlaneseq
        %v1942 = vshrl.u32 %v1941, 7
        %v1943 = vsub.s32 0, %v1942
        %v1944 = vrot.slane %v205, %v1943
        %v1945 = vmul.f32 %v1815, %v1944
        %v1946 = vmul.f32 %v1819, %v1944
        %v1947 = vmul.f32 %v1823, %v1944
        %v1948 = vmul.f32 %v1827, %v1944
        %v1949 = vmul.f32 %v1831, %v1944
        %v1950 = vmul.f32 %v1835, %v1944
        %v1951 = vmul.f32 %v1839, %v1944
        %v1952 = vmul.f32 %v1843, %v1944
        %v1953 = vmul.f32 %v1847, %v1944
        %v1954 = vmul.f32 %v1851, %v1944
        %v1955 = vmul.f32 %v1855, %v1944
        %v1956 = vmul.f32 %v1859, %v1944
        %v1957 = vmul.f32 %v1863, %v1944
        %v1958 = vmul.f32 %v1867, %v1944
        %v1959 = vmul.f32 %v1871, %v1944
        %v1960 = vmul.f32 %v1875, %v1944
        %v1961 = vmul.f32 %v1879, %v1944
        %v1962 = vmul.f32 %v1883, %v1944
        %v1963 = vmul.f32 %v1887, %v1944
        %v1964 = vmul.f32 %v1891, %v1944
        %v1965 = vmul.f32 %v1895, %v1944
        %v1966 = vmul.f32 %v1899, %v1944
        %v1967 = vmul.f32 %v1903, %v1944
        %v1968 = vmul.f32 %v1907, %v1944
        %v1969 = vmul.f32 %v1911, %v1944
        %v1970 = vmul.f32 %v1915, %v1944
        %v1971 = vmul.f32 %v1919, %v1944
        %v1972 = vmul.f32 %v1923, %v1944
        %v1973 = vmul.f32 %v1927, %v1944
        %v1974 = vmul.f32 %v1931, %v1944
        %v1975 = vmul.f32 %v1935, %v1944
        %v1976 = vmul.f32 %v1939, %v1944
        %v1977 = vadd.f32 %v1781, %v1945
        %v1978 = vadd.f32 %v1782, %v1946
        %v1979 = vadd.f32 %v1783, %v1947
        %v1980 = vadd.f32 %v1784, %v1948
        %v1981 = vadd.f32 %v1785, %v1949
        %v1982 = vadd.f32 %v1786, %v1950
        %v1983 = vadd.f32 %v1787, %v1951
        %v1984 = vadd.f32 %v1788, %v1952
        %v1985 = vadd.f32 %v1789, %v1953
        %v1986 = vadd.f32 %v1790, %v1954
        %v1987 = vadd.f32 %v1791, %v1955
        %v1988 = vadd.f32 %v1792, %v1956
        %v1989 = vadd.f32 %v1793, %v1957
        %v1990 = vadd.f32 %v1794, %v1958
        %v1991 = vadd.f32 %v1795, %v1959
        %v1992 = vadd.f32 %v1796, %v1960
        %v1993 = vadd.f32 %v1797, %v1961
        %v1994 = vadd.f32 %v1798, %v1962
        %v1995 = vadd.f32 %v1799, %v1963
        %v1996 = vadd.f32 %v1800, %v1964
        %v1997 = vadd.f32 %v1801, %v1965
        %v1998 = vadd.f32 %v1802, %v1966
        %v1999 = vadd.f32 %v1803, %v1967
        %v2000 = vadd.f32 %v1804, %v1968
        %v2001 = vadd.f32 %v1805, %v1969
        %v2002 = vadd.f32 %v1806, %v1970
        %v2003 = vadd.f32 %v1807, %v1971
        %v2004 = vadd.f32 %v1808, %v1972
        %v2005 = vadd.f32 %v1809, %v1973
        %v2006 = vadd.f32 %v1810, %v1974
        %v2007 = vadd.f32 %v1811, %v1975
        %v2008 = vadd.f32 %v1812, %v1976
        %2009 = vset.pattern.permute.xlu0 9
        %2010 = vperm.xlu0 %2009, %v172
        %v2011 = vpop.permute.xlu0 %2010
        %2013 = vset.pattern.permute.xlu0 9
        %2014 = vperm.xlu0 %2013, %v173
        %v2015 = vpop.permute.xlu0 %2014
        %2017 = vset.pattern.permute.xlu0 9
        %2018 = vperm.xlu0 %2017, %v174
        %v2019 = vpop.permute.xlu0 %2018
        %2021 = vset.pattern.permute.xlu0 9
        %2022 = vperm.xlu0 %2021, %v175
        %v2023 = vpop.permute.xlu0 %2022
        %2025 = vset.pattern.permute.xlu0 9
        %2026 = vperm.xlu0 %2025, %v176
        %v2027 = vpop.permute.xlu0 %2026
        %2029 = vset.pattern.permute.xlu0 9
        %2030 = vperm.xlu0 %2029, %v177
        %v2031 = vpop.permute.xlu0 %2030
        %2033 = vset.pattern.permute.xlu0 9
        %2034 = vperm.xlu0 %2033, %v178
        %v2035 = vpop.permute.xlu0 %2034
        %2037 = vset.pattern.permute.xlu0 9
        %2038 = vperm.xlu0 %2037, %v179
        %v2039 = vpop.permute.xlu0 %2038
        %2041 = vset.pattern.permute.xlu0 9
        %2042 = vperm.xlu0 %2041, %v180
        %v2043 = vpop.permute.xlu0 %2042
        %2045 = vset.pattern.permute.xlu0 9
        %2046 = vperm.xlu0 %2045, %v181
        %v2047 = vpop.permute.xlu0 %2046
        %2049 = vset.pattern.permute.xlu0 9
        %2050 = vperm.xlu0 %2049, %v182
        %v2051 = vpop.permute.xlu0 %2050
        %2053 = vset.pattern.permute.xlu0 9
        %2054 = vperm.xlu0 %2053, %v183
        %v2055 = vpop.permute.xlu0 %2054
        %2057 = vset.pattern.permute.xlu0 9
        %2058 = vperm.xlu0 %2057, %v184
        %v2059 = vpop.permute.xlu0 %2058
        %2061 = vset.pattern.permute.xlu0 9
        %2062 = vperm.xlu0 %2061, %v185
        %v2063 = vpop.permute.xlu0 %2062
        %2065 = vset.pattern.permute.xlu0 9
        %2066 = vperm.xlu0 %2065, %v186
        %v2067 = vpop.permute.xlu0 %2066
        %2069 = vset.pattern.permute.xlu0 9
        %2070 = vperm.xlu0 %2069, %v187
        %v2071 = vpop.permute.xlu0 %2070
        %2073 = vset.pattern.permute.xlu0 9
        %2074 = vperm.xlu0 %2073, %v188
        %v2075 = vpop.permute.xlu0 %2074
        %2077 = vset.pattern.permute.xlu0 9
        %2078 = vperm.xlu0 %2077, %v189
        %v2079 = vpop.permute.xlu0 %2078
        %2081 = vset.pattern.permute.xlu0 9
        %2082 = vperm.xlu0 %2081, %v190
        %v2083 = vpop.permute.xlu0 %2082
        %2085 = vset.pattern.permute.xlu0 9
        %2086 = vperm.xlu0 %2085, %v191
        %v2087 = vpop.permute.xlu0 %2086
        %2089 = vset.pattern.permute.xlu0 9
        %2090 = vperm.xlu0 %2089, %v192
        %v2091 = vpop.permute.xlu0 %2090
        %2093 = vset.pattern.permute.xlu0 9
        %2094 = vperm.xlu0 %2093, %v193
        %v2095 = vpop.permute.xlu0 %2094
        %2097 = vset.pattern.permute.xlu0 9
        %2098 = vperm.xlu0 %2097, %v194
        %v2099 = vpop.permute.xlu0 %2098
        %2101 = vset.pattern.permute.xlu0 9
        %2102 = vperm.xlu0 %2101, %v195
        %v2103 = vpop.permute.xlu0 %2102
        %2105 = vset.pattern.permute.xlu0 9
        %2106 = vperm.xlu0 %2105, %v196
        %v2107 = vpop.permute.xlu0 %2106
        %2109 = vset.pattern.permute.xlu0 9
        %2110 = vperm.xlu0 %2109, %v197
        %v2111 = vpop.permute.xlu0 %2110
        %2113 = vset.pattern.permute.xlu0 9
        %2114 = vperm.xlu0 %2113, %v198
        %v2115 = vpop.permute.xlu0 %2114
        %2117 = vset.pattern.permute.xlu0 9
        %2118 = vperm.xlu0 %2117, %v199
        %v2119 = vpop.permute.xlu0 %2118
        %2121 = vset.pattern.permute.xlu0 9
        %2122 = vperm.xlu0 %2121, %v200
        %v2123 = vpop.permute.xlu0 %2122
        %2125 = vset.pattern.permute.xlu0 9
        %2126 = vperm.xlu0 %2125, %v201
        %v2127 = vpop.permute.xlu0 %2126
        %2129 = vset.pattern.permute.xlu0 9
        %2130 = vperm.xlu0 %2129, %v202
        %v2131 = vpop.permute.xlu0 %2130
        %2133 = vset.pattern.permute.xlu0 9
        %2134 = vperm.xlu0 %2133, %v203
        %v2135 = vpop.permute.xlu0 %2134
        %v2137 = vlaneseq
        %v2138 = vshrl.u32 %v2137, 7
        %v2139 = vsub.s32 1, %v2138
        %v2140 = vrot.slane %v205, %v2139
        %v2141 = vmul.f32 %v2011, %v2140
        %v2142 = vmul.f32 %v2015, %v2140
        %v2143 = vmul.f32 %v2019, %v2140
        %v2144 = vmul.f32 %v2023, %v2140
        %v2145 = vmul.f32 %v2027, %v2140
        %v2146 = vmul.f32 %v2031, %v2140
        %v2147 = vmul.f32 %v2035, %v2140
        %v2148 = vmul.f32 %v2039, %v2140
        %v2149 = vmul.f32 %v2043, %v2140
        %v2150 = vmul.f32 %v2047, %v2140
        %v2151 = vmul.f32 %v2051, %v2140
        %v2152 = vmul.f32 %v2055, %v2140
        %v2153 = vmul.f32 %v2059, %v2140
        %v2154 = vmul.f32 %v2063, %v2140
        %v2155 = vmul.f32 %v2067, %v2140
        %v2156 = vmul.f32 %v2071, %v2140
        %v2157 = vmul.f32 %v2075, %v2140
        %v2158 = vmul.f32 %v2079, %v2140
        %v2159 = vmul.f32 %v2083, %v2140
        %v2160 = vmul.f32 %v2087, %v2140
        %v2161 = vmul.f32 %v2091, %v2140
        %v2162 = vmul.f32 %v2095, %v2140
        %v2163 = vmul.f32 %v2099, %v2140
        %v2164 = vmul.f32 %v2103, %v2140
        %v2165 = vmul.f32 %v2107, %v2140
        %v2166 = vmul.f32 %v2111, %v2140
        %v2167 = vmul.f32 %v2115, %v2140
        %v2168 = vmul.f32 %v2119, %v2140
        %v2169 = vmul.f32 %v2123, %v2140
        %v2170 = vmul.f32 %v2127, %v2140
        %v2171 = vmul.f32 %v2131, %v2140
        %v2172 = vmul.f32 %v2135, %v2140
        %v2173 = vadd.f32 %v1977, %v2141
        %v2174 = vadd.f32 %v1978, %v2142
        %v2175 = vadd.f32 %v1979, %v2143
        %v2176 = vadd.f32 %v1980, %v2144
        %v2177 = vadd.f32 %v1981, %v2145
        %v2178 = vadd.f32 %v1982, %v2146
        %v2179 = vadd.f32 %v1983, %v2147
        %v2180 = vadd.f32 %v1984, %v2148
        %v2181 = vadd.f32 %v1985, %v2149
        %v2182 = vadd.f32 %v1986, %v2150
        %v2183 = vadd.f32 %v1987, %v2151
        %v2184 = vadd.f32 %v1988, %v2152
        %v2185 = vadd.f32 %v1989, %v2153
        %v2186 = vadd.f32 %v1990, %v2154
        %v2187 = vadd.f32 %v1991, %v2155
        %v2188 = vadd.f32 %v1992, %v2156
        %v2189 = vadd.f32 %v1993, %v2157
        %v2190 = vadd.f32 %v1994, %v2158
        %v2191 = vadd.f32 %v1995, %v2159
        %v2192 = vadd.f32 %v1996, %v2160
        %v2193 = vadd.f32 %v1997, %v2161
        %v2194 = vadd.f32 %v1998, %v2162
        %v2195 = vadd.f32 %v1999, %v2163
        %v2196 = vadd.f32 %v2000, %v2164
        %v2197 = vadd.f32 %v2001, %v2165
        %v2198 = vadd.f32 %v2002, %v2166
        %v2199 = vadd.f32 %v2003, %v2167
        %v2200 = vadd.f32 %v2004, %v2168
        %v2201 = vadd.f32 %v2005, %v2169
        %v2202 = vadd.f32 %v2006, %v2170
        %v2203 = vadd.f32 %v2007, %v2171
        %v2204 = vadd.f32 %v2008, %v2172
        %2205 = vset.pattern.permute.xlu0 10
        %2206 = vperm.xlu0 %2205, %v172
        %v2207 = vpop.permute.xlu0 %2206
        %2209 = vset.pattern.permute.xlu0 10
        %2210 = vperm.xlu0 %2209, %v173
        %v2211 = vpop.permute.xlu0 %2210
        %2213 = vset.pattern.permute.xlu0 10
        %2214 = vperm.xlu0 %2213, %v174
        %v2215 = vpop.permute.xlu0 %2214
        %2217 = vset.pattern.permute.xlu0 10
        %2218 = vperm.xlu0 %2217, %v175
        %v2219 = vpop.permute.xlu0 %2218
        %2221 = vset.pattern.permute.xlu0 10
        %2222 = vperm.xlu0 %2221, %v176
        %v2223 = vpop.permute.xlu0 %2222
        %2225 = vset.pattern.permute.xlu0 10
        %2226 = vperm.xlu0 %2225, %v177
        %v2227 = vpop.permute.xlu0 %2226
        %2229 = vset.pattern.permute.xlu0 10
        %2230 = vperm.xlu0 %2229, %v178
        %v2231 = vpop.permute.xlu0 %2230
        %2233 = vset.pattern.permute.xlu0 10
        %2234 = vperm.xlu0 %2233, %v179
        %v2235 = vpop.permute.xlu0 %2234
        %2237 = vset.pattern.permute.xlu0 10
        %2238 = vperm.xlu0 %2237, %v180
        %v2239 = vpop.permute.xlu0 %2238
        %2241 = vset.pattern.permute.xlu0 10
        %2242 = vperm.xlu0 %2241, %v181
        %v2243 = vpop.permute.xlu0 %2242
        %2245 = vset.pattern.permute.xlu0 10
        %2246 = vperm.xlu0 %2245, %v182
        %v2247 = vpop.permute.xlu0 %2246
        %2249 = vset.pattern.permute.xlu0 10
        %2250 = vperm.xlu0 %2249, %v183
        %v2251 = vpop.permute.xlu0 %2250
        %2253 = vset.pattern.permute.xlu0 10
        %2254 = vperm.xlu0 %2253, %v184
        %v2255 = vpop.permute.xlu0 %2254
        %2257 = vset.pattern.permute.xlu0 10
        %2258 = vperm.xlu0 %2257, %v185
        %v2259 = vpop.permute.xlu0 %2258
        %2261 = vset.pattern.permute.xlu0 10
        %2262 = vperm.xlu0 %2261, %v186
        %v2263 = vpop.permute.xlu0 %2262
        %2265 = vset.pattern.permute.xlu0 10
        %2266 = vperm.xlu0 %2265, %v187
        %v2267 = vpop.permute.xlu0 %2266
        %2269 = vset.pattern.permute.xlu0 10
        %2270 = vperm.xlu0 %2269, %v188
        %v2271 = vpop.permute.xlu0 %2270
        %2273 = vset.pattern.permute.xlu0 10
        %2274 = vperm.xlu0 %2273, %v189
        %v2275 = vpop.permute.xlu0 %2274
        %2277 = vset.pattern.permute.xlu0 10
        %2278 = vperm.xlu0 %2277, %v190
        %v2279 = vpop.permute.xlu0 %2278
        %2281 = vset.pattern.permute.xlu0 10
        %2282 = vperm.xlu0 %2281, %v191
        %v2283 = vpop.permute.xlu0 %2282
        %2285 = vset.pattern.permute.xlu0 10
        %2286 = vperm.xlu0 %2285, %v192
        %v2287 = vpop.permute.xlu0 %2286
        %2289 = vset.pattern.permute.xlu0 10
        %2290 = vperm.xlu0 %2289, %v193
        %v2291 = vpop.permute.xlu0 %2290
        %2293 = vset.pattern.permute.xlu0 10
        %2294 = vperm.xlu0 %2293, %v194
        %v2295 = vpop.permute.xlu0 %2294
        %2297 = vset.pattern.permute.xlu0 10
        %2298 = vperm.xlu0 %2297, %v195
        %v2299 = vpop.permute.xlu0 %2298
        %2301 = vset.pattern.permute.xlu0 10
        %2302 = vperm.xlu0 %2301, %v196
        %v2303 = vpop.permute.xlu0 %2302
        %2305 = vset.pattern.permute.xlu0 10
        %2306 = vperm.xlu0 %2305, %v197
        %v2307 = vpop.permute.xlu0 %2306
        %2309 = vset.pattern.permute.xlu0 10
        %2310 = vperm.xlu0 %2309, %v198
        %v2311 = vpop.permute.xlu0 %2310
        %2313 = vset.pattern.permute.xlu0 10
        %2314 = vperm.xlu0 %2313, %v199
        %v2315 = vpop.permute.xlu0 %2314
        %2317 = vset.pattern.permute.xlu0 10
        %2318 = vperm.xlu0 %2317, %v200
        %v2319 = vpop.permute.xlu0 %2318
        %2321 = vset.pattern.permute.xlu0 10
        %2322 = vperm.xlu0 %2321, %v201
        %v2323 = vpop.permute.xlu0 %2322
        %2325 = vset.pattern.permute.xlu0 10
        %2326 = vperm.xlu0 %2325, %v202
        %v2327 = vpop.permute.xlu0 %2326
        %2329 = vset.pattern.permute.xlu0 10
        %2330 = vperm.xlu0 %2329, %v203
        %v2331 = vpop.permute.xlu0 %2330
        %v2333 = vlaneseq
        %v2334 = vshrl.u32 %v2333, 7
        %v2335 = vsub.s32 2, %v2334
        %v2336 = vrot.slane %v205, %v2335
        %v2337 = vmul.f32 %v2207, %v2336
        %v2338 = vmul.f32 %v2211, %v2336
        %v2339 = vmul.f32 %v2215, %v2336
        %v2340 = vmul.f32 %v2219, %v2336
        %v2341 = vmul.f32 %v2223, %v2336
        %v2342 = vmul.f32 %v2227, %v2336
        %v2343 = vmul.f32 %v2231, %v2336
        %v2344 = vmul.f32 %v2235, %v2336
        %v2345 = vmul.f32 %v2239, %v2336
        %v2346 = vmul.f32 %v2243, %v2336
        %v2347 = vmul.f32 %v2247, %v2336
        %v2348 = vmul.f32 %v2251, %v2336
        %v2349 = vmul.f32 %v2255, %v2336
        %v2350 = vmul.f32 %v2259, %v2336
        %v2351 = vmul.f32 %v2263, %v2336
        %v2352 = vmul.f32 %v2267, %v2336
        %v2353 = vmul.f32 %v2271, %v2336
        %v2354 = vmul.f32 %v2275, %v2336
        %v2355 = vmul.f32 %v2279, %v2336
        %v2356 = vmul.f32 %v2283, %v2336
        %v2357 = vmul.f32 %v2287, %v2336
        %v2358 = vmul.f32 %v2291, %v2336
        %v2359 = vmul.f32 %v2295, %v2336
        %v2360 = vmul.f32 %v2299, %v2336
        %v2361 = vmul.f32 %v2303, %v2336
        %v2362 = vmul.f32 %v2307, %v2336
        %v2363 = vmul.f32 %v2311, %v2336
        %v2364 = vmul.f32 %v2315, %v2336
        %v2365 = vmul.f32 %v2319, %v2336
        %v2366 = vmul.f32 %v2323, %v2336
        %v2367 = vmul.f32 %v2327, %v2336
        %v2368 = vmul.f32 %v2331, %v2336
        %v2369 = vadd.f32 %v2173, %v2337
        %v2370 = vadd.f32 %v2174, %v2338
        %v2371 = vadd.f32 %v2175, %v2339
        %v2372 = vadd.f32 %v2176, %v2340
        %v2373 = vadd.f32 %v2177, %v2341
        %v2374 = vadd.f32 %v2178, %v2342
        %v2375 = vadd.f32 %v2179, %v2343
        %v2376 = vadd.f32 %v2180, %v2344
        %v2377 = vadd.f32 %v2181, %v2345
        %v2378 = vadd.f32 %v2182, %v2346
        %v2379 = vadd.f32 %v2183, %v2347
        %v2380 = vadd.f32 %v2184, %v2348
        %v2381 = vadd.f32 %v2185, %v2349
        %v2382 = vadd.f32 %v2186, %v2350
        %v2383 = vadd.f32 %v2187, %v2351
        %v2384 = vadd.f32 %v2188, %v2352
        %v2385 = vadd.f32 %v2189, %v2353
        %v2386 = vadd.f32 %v2190, %v2354
        %v2387 = vadd.f32 %v2191, %v2355
        %v2388 = vadd.f32 %v2192, %v2356
        %v2389 = vadd.f32 %v2193, %v2357
        %v2390 = vadd.f32 %v2194, %v2358
        %v2391 = vadd.f32 %v2195, %v2359
        %v2392 = vadd.f32 %v2196, %v2360
        %v2393 = vadd.f32 %v2197, %v2361
        %v2394 = vadd.f32 %v2198, %v2362
        %v2395 = vadd.f32 %v2199, %v2363
        %v2396 = vadd.f32 %v2200, %v2364
        %v2397 = vadd.f32 %v2201, %v2365
        %v2398 = vadd.f32 %v2202, %v2366
        %v2399 = vadd.f32 %v2203, %v2367
        %v2400 = vadd.f32 %v2204, %v2368
        %2401 = vset.pattern.permute.xlu0 11
        %2402 = vperm.xlu0 %2401, %v172
        %v2403 = vpop.permute.xlu0 %2402
        %2405 = vset.pattern.permute.xlu0 11
        %2406 = vperm.xlu0 %2405, %v173
        %v2407 = vpop.permute.xlu0 %2406
        %2409 = vset.pattern.permute.xlu0 11
        %2410 = vperm.xlu0 %2409, %v174
        %v2411 = vpop.permute.xlu0 %2410
        %2413 = vset.pattern.permute.xlu0 11
        %2414 = vperm.xlu0 %2413, %v175
        %v2415 = vpop.permute.xlu0 %2414
        %2417 = vset.pattern.permute.xlu0 11
        %2418 = vperm.xlu0 %2417, %v176
        %v2419 = vpop.permute.xlu0 %2418
        %2421 = vset.pattern.permute.xlu0 11
        %2422 = vperm.xlu0 %2421, %v177
        %v2423 = vpop.permute.xlu0 %2422
        %2425 = vset.pattern.permute.xlu0 11
        %2426 = vperm.xlu0 %2425, %v178
        %v2427 = vpop.permute.xlu0 %2426
        %2429 = vset.pattern.permute.xlu0 11
        %2430 = vperm.xlu0 %2429, %v179
        %v2431 = vpop.permute.xlu0 %2430
        %2433 = vset.pattern.permute.xlu0 11
        %2434 = vperm.xlu0 %2433, %v180
        %v2435 = vpop.permute.xlu0 %2434
        %2437 = vset.pattern.permute.xlu0 11
        %2438 = vperm.xlu0 %2437, %v181
        %v2439 = vpop.permute.xlu0 %2438
        %2441 = vset.pattern.permute.xlu0 11
        %2442 = vperm.xlu0 %2441, %v182
        %v2443 = vpop.permute.xlu0 %2442
        %2445 = vset.pattern.permute.xlu0 11
        %2446 = vperm.xlu0 %2445, %v183
        %v2447 = vpop.permute.xlu0 %2446
        %2449 = vset.pattern.permute.xlu0 11
        %2450 = vperm.xlu0 %2449, %v184
        %v2451 = vpop.permute.xlu0 %2450
        %2453 = vset.pattern.permute.xlu0 11
        %2454 = vperm.xlu0 %2453, %v185
        %v2455 = vpop.permute.xlu0 %2454
        %2457 = vset.pattern.permute.xlu0 11
        %2458 = vperm.xlu0 %2457, %v186
        %v2459 = vpop.permute.xlu0 %2458
        %2461 = vset.pattern.permute.xlu0 11
        %2462 = vperm.xlu0 %2461, %v187
        %v2463 = vpop.permute.xlu0 %2462
        %2465 = vset.pattern.permute.xlu0 11
        %2466 = vperm.xlu0 %2465, %v188
        %v2467 = vpop.permute.xlu0 %2466
        %2469 = vset.pattern.permute.xlu0 11
        %2470 = vperm.xlu0 %2469, %v189
        %v2471 = vpop.permute.xlu0 %2470
        %2473 = vset.pattern.permute.xlu0 11
        %2474 = vperm.xlu0 %2473, %v190
        %v2475 = vpop.permute.xlu0 %2474
        %2477 = vset.pattern.permute.xlu0 11
        %2478 = vperm.xlu0 %2477, %v191
        %v2479 = vpop.permute.xlu0 %2478
        %2481 = vset.pattern.permute.xlu0 11
        %2482 = vperm.xlu0 %2481, %v192
        %v2483 = vpop.permute.xlu0 %2482
        %2485 = vset.pattern.permute.xlu0 11
        %2486 = vperm.xlu0 %2485, %v193
        %v2487 = vpop.permute.xlu0 %2486
        %2489 = vset.pattern.permute.xlu0 11
        %2490 = vperm.xlu0 %2489, %v194
        %v2491 = vpop.permute.xlu0 %2490
        %2493 = vset.pattern.permute.xlu0 11
        %2494 = vperm.xlu0 %2493, %v195
        %v2495 = vpop.permute.xlu0 %2494
        %2497 = vset.pattern.permute.xlu0 11
        %2498 = vperm.xlu0 %2497, %v196
        %v2499 = vpop.permute.xlu0 %2498
        %2501 = vset.pattern.permute.xlu0 11
        %2502 = vperm.xlu0 %2501, %v197
        %v2503 = vpop.permute.xlu0 %2502
        %2505 = vset.pattern.permute.xlu0 11
        %2506 = vperm.xlu0 %2505, %v198
        %v2507 = vpop.permute.xlu0 %2506
        %2509 = vset.pattern.permute.xlu0 11
        %2510 = vperm.xlu0 %2509, %v199
        %v2511 = vpop.permute.xlu0 %2510
        %2513 = vset.pattern.permute.xlu0 11
        %2514 = vperm.xlu0 %2513, %v200
        %v2515 = vpop.permute.xlu0 %2514
        %2517 = vset.pattern.permute.xlu0 11
        %2518 = vperm.xlu0 %2517, %v201
        %v2519 = vpop.permute.xlu0 %2518
        %2521 = vset.pattern.permute.xlu0 11
        %2522 = vperm.xlu0 %2521, %v202
        %v2523 = vpop.permute.xlu0 %2522
        %2525 = vset.pattern.permute.xlu0 11
        %2526 = vperm.xlu0 %2525, %v203
        %v2527 = vpop.permute.xlu0 %2526
        %v2529 = vlaneseq
        %v2530 = vshrl.u32 %v2529, 7
        %v2531 = vsub.s32 3, %v2530
        %v2532 = vrot.slane %v205, %v2531
        %v2533 = vmul.f32 %v2403, %v2532
        %v2534 = vmul.f32 %v2407, %v2532
        %v2535 = vmul.f32 %v2411, %v2532
        %v2536 = vmul.f32 %v2415, %v2532
        %v2537 = vmul.f32 %v2419, %v2532
        %v2538 = vmul.f32 %v2423, %v2532
        %v2539 = vmul.f32 %v2427, %v2532
        %v2540 = vmul.f32 %v2431, %v2532
        %v2541 = vmul.f32 %v2435, %v2532
        %v2542 = vmul.f32 %v2439, %v2532
        %v2543 = vmul.f32 %v2443, %v2532
        %v2544 = vmul.f32 %v2447, %v2532
        %v2545 = vmul.f32 %v2451, %v2532
        %v2546 = vmul.f32 %v2455, %v2532
        %v2547 = vmul.f32 %v2459, %v2532
        %v2548 = vmul.f32 %v2463, %v2532
        %v2549 = vmul.f32 %v2467, %v2532
        %v2550 = vmul.f32 %v2471, %v2532
        %v2551 = vmul.f32 %v2475, %v2532
        %v2552 = vmul.f32 %v2479, %v2532
        %v2553 = vmul.f32 %v2483, %v2532
        %v2554 = vmul.f32 %v2487, %v2532
        %v2555 = vmul.f32 %v2491, %v2532
        %v2556 = vmul.f32 %v2495, %v2532
        %v2557 = vmul.f32 %v2499, %v2532
        %v2558 = vmul.f32 %v2503, %v2532
        %v2559 = vmul.f32 %v2507, %v2532
        %v2560 = vmul.f32 %v2511, %v2532
        %v2561 = vmul.f32 %v2515, %v2532
        %v2562 = vmul.f32 %v2519, %v2532
        %v2563 = vmul.f32 %v2523, %v2532
        %v2564 = vmul.f32 %v2527, %v2532
        %v2565 = vadd.f32 %v2369, %v2533
        %v2566 = vadd.f32 %v2370, %v2534
        %v2567 = vadd.f32 %v2371, %v2535
        %v2568 = vadd.f32 %v2372, %v2536
        %v2569 = vadd.f32 %v2373, %v2537
        %v2570 = vadd.f32 %v2374, %v2538
        %v2571 = vadd.f32 %v2375, %v2539
        %v2572 = vadd.f32 %v2376, %v2540
        %v2573 = vadd.f32 %v2377, %v2541
        %v2574 = vadd.f32 %v2378, %v2542
        %v2575 = vadd.f32 %v2379, %v2543
        %v2576 = vadd.f32 %v2380, %v2544
        %v2577 = vadd.f32 %v2381, %v2545
        %v2578 = vadd.f32 %v2382, %v2546
        %v2579 = vadd.f32 %v2383, %v2547
        %v2580 = vadd.f32 %v2384, %v2548
        %v2581 = vadd.f32 %v2385, %v2549
        %v2582 = vadd.f32 %v2386, %v2550
        %v2583 = vadd.f32 %v2387, %v2551
        %v2584 = vadd.f32 %v2388, %v2552
        %v2585 = vadd.f32 %v2389, %v2553
        %v2586 = vadd.f32 %v2390, %v2554
        %v2587 = vadd.f32 %v2391, %v2555
        %v2588 = vadd.f32 %v2392, %v2556
        %v2589 = vadd.f32 %v2393, %v2557
        %v2590 = vadd.f32 %v2394, %v2558
        %v2591 = vadd.f32 %v2395, %v2559
        %v2592 = vadd.f32 %v2396, %v2560
        %v2593 = vadd.f32 %v2397, %v2561
        %v2594 = vadd.f32 %v2398, %v2562
        %v2595 = vadd.f32 %v2399, %v2563
        %v2596 = vadd.f32 %v2400, %v2564
        %2597 = vset.pattern.permute.xlu0 12
        %2598 = vperm.xlu0 %2597, %v172
        %v2599 = vpop.permute.xlu0 %2598
        %2601 = vset.pattern.permute.xlu0 12
        %2602 = vperm.xlu0 %2601, %v173
        %v2603 = vpop.permute.xlu0 %2602
        %2605 = vset.pattern.permute.xlu0 12
        %2606 = vperm.xlu0 %2605, %v174
        %v2607 = vpop.permute.xlu0 %2606
        %2609 = vset.pattern.permute.xlu0 12
        %2610 = vperm.xlu0 %2609, %v175
        %v2611 = vpop.permute.xlu0 %2610
        %2613 = vset.pattern.permute.xlu0 12
        %2614 = vperm.xlu0 %2613, %v176
        %v2615 = vpop.permute.xlu0 %2614
        %2617 = vset.pattern.permute.xlu0 12
        %2618 = vperm.xlu0 %2617, %v177
        %v2619 = vpop.permute.xlu0 %2618
        %2621 = vset.pattern.permute.xlu0 12
        %2622 = vperm.xlu0 %2621, %v178
        %v2623 = vpop.permute.xlu0 %2622
        %2625 = vset.pattern.permute.xlu0 12
        %2626 = vperm.xlu0 %2625, %v179
        %v2627 = vpop.permute.xlu0 %2626
        %2629 = vset.pattern.permute.xlu0 12
        %2630 = vperm.xlu0 %2629, %v180
        %v2631 = vpop.permute.xlu0 %2630
        %2633 = vset.pattern.permute.xlu0 12
        %2634 = vperm.xlu0 %2633, %v181
        %v2635 = vpop.permute.xlu0 %2634
        %2637 = vset.pattern.permute.xlu0 12
        %2638 = vperm.xlu0 %2637, %v182
        %v2639 = vpop.permute.xlu0 %2638
        %2641 = vset.pattern.permute.xlu0 12
        %2642 = vperm.xlu0 %2641, %v183
        %v2643 = vpop.permute.xlu0 %2642
        %2645 = vset.pattern.permute.xlu0 12
        %2646 = vperm.xlu0 %2645, %v184
        %v2647 = vpop.permute.xlu0 %2646
        %2649 = vset.pattern.permute.xlu0 12
        %2650 = vperm.xlu0 %2649, %v185
        %v2651 = vpop.permute.xlu0 %2650
        %2653 = vset.pattern.permute.xlu0 12
        %2654 = vperm.xlu0 %2653, %v186
        %v2655 = vpop.permute.xlu0 %2654
        %2657 = vset.pattern.permute.xlu0 12
        %2658 = vperm.xlu0 %2657, %v187
        %v2659 = vpop.permute.xlu0 %2658
        %2661 = vset.pattern.permute.xlu0 12
        %2662 = vperm.xlu0 %2661, %v188
        %v2663 = vpop.permute.xlu0 %2662
        %2665 = vset.pattern.permute.xlu0 12
        %2666 = vperm.xlu0 %2665, %v189
        %v2667 = vpop.permute.xlu0 %2666
        %2669 = vset.pattern.permute.xlu0 12
        %2670 = vperm.xlu0 %2669, %v190
        %v2671 = vpop.permute.xlu0 %2670
        %2673 = vset.pattern.permute.xlu0 12
        %2674 = vperm.xlu0 %2673, %v191
        %v2675 = vpop.permute.xlu0 %2674
        %2677 = vset.pattern.permute.xlu0 12
        %2678 = vperm.xlu0 %2677, %v192
        %v2679 = vpop.permute.xlu0 %2678
        %2681 = vset.pattern.permute.xlu0 12
        %2682 = vperm.xlu0 %2681, %v193
        %v2683 = vpop.permute.xlu0 %2682
        %2685 = vset.pattern.permute.xlu0 12
        %2686 = vperm.xlu0 %2685, %v194
        %v2687 = vpop.permute.xlu0 %2686
        %2689 = vset.pattern.permute.xlu0 12
        %2690 = vperm.xlu0 %2689, %v195
        %v2691 = vpop.permute.xlu0 %2690
        %2693 = vset.pattern.permute.xlu0 12
        %2694 = vperm.xlu0 %2693, %v196
        %v2695 = vpop.permute.xlu0 %2694
        %2697 = vset.pattern.permute.xlu0 12
        %2698 = vperm.xlu0 %2697, %v197
        %v2699 = vpop.permute.xlu0 %2698
        %2701 = vset.pattern.permute.xlu0 12
        %2702 = vperm.xlu0 %2701, %v198
        %v2703 = vpop.permute.xlu0 %2702
        %2705 = vset.pattern.permute.xlu0 12
        %2706 = vperm.xlu0 %2705, %v199
        %v2707 = vpop.permute.xlu0 %2706
        %2709 = vset.pattern.permute.xlu0 12
        %2710 = vperm.xlu0 %2709, %v200
        %v2711 = vpop.permute.xlu0 %2710
        %2713 = vset.pattern.permute.xlu0 12
        %2714 = vperm.xlu0 %2713, %v201
        %v2715 = vpop.permute.xlu0 %2714
        %2717 = vset.pattern.permute.xlu0 12
        %2718 = vperm.xlu0 %2717, %v202
        %v2719 = vpop.permute.xlu0 %2718
        %2721 = vset.pattern.permute.xlu0 12
        %2722 = vperm.xlu0 %2721, %v203
        %v2723 = vpop.permute.xlu0 %2722
        %v2725 = vlaneseq
        %v2726 = vshrl.u32 %v2725, 7
        %v2727 = vsub.s32 4, %v2726
        %v2728 = vrot.slane %v205, %v2727
        %v2729 = vmul.f32 %v2599, %v2728
        %v2730 = vmul.f32 %v2603, %v2728
        %v2731 = vmul.f32 %v2607, %v2728
        %v2732 = vmul.f32 %v2611, %v2728
        %v2733 = vmul.f32 %v2615, %v2728
        %v2734 = vmul.f32 %v2619, %v2728
        %v2735 = vmul.f32 %v2623, %v2728
        %v2736 = vmul.f32 %v2627, %v2728
        %v2737 = vmul.f32 %v2631, %v2728
        %v2738 = vmul.f32 %v2635, %v2728
        %v2739 = vmul.f32 %v2639, %v2728
        %v2740 = vmul.f32 %v2643, %v2728
        %v2741 = vmul.f32 %v2647, %v2728
        %v2742 = vmul.f32 %v2651, %v2728
        %v2743 = vmul.f32 %v2655, %v2728
        %v2744 = vmul.f32 %v2659, %v2728
        %v2745 = vmul.f32 %v2663, %v2728
        %v2746 = vmul.f32 %v2667, %v2728
        %v2747 = vmul.f32 %v2671, %v2728
        %v2748 = vmul.f32 %v2675, %v2728
        %v2749 = vmul.f32 %v2679, %v2728
        %v2750 = vmul.f32 %v2683, %v2728
        %v2751 = vmul.f32 %v2687, %v2728
        %v2752 = vmul.f32 %v2691, %v2728
        %v2753 = vmul.f32 %v2695, %v2728
        %v2754 = vmul.f32 %v2699, %v2728
        %v2755 = vmul.f32 %v2703, %v2728
        %v2756 = vmul.f32 %v2707, %v2728
        %v2757 = vmul.f32 %v2711, %v2728
        %v2758 = vmul.f32 %v2715, %v2728
        %v2759 = vmul.f32 %v2719, %v2728
        %v2760 = vmul.f32 %v2723, %v2728
        %v2761 = vadd.f32 %v2565, %v2729
        %v2762 = vadd.f32 %v2566, %v2730
        %v2763 = vadd.f32 %v2567, %v2731
        %v2764 = vadd.f32 %v2568, %v2732
        %v2765 = vadd.f32 %v2569, %v2733
        %v2766 = vadd.f32 %v2570, %v2734
        %v2767 = vadd.f32 %v2571, %v2735
        %v2768 = vadd.f32 %v2572, %v2736
        %v2769 = vadd.f32 %v2573, %v2737
        %v2770 = vadd.f32 %v2574, %v2738
        %v2771 = vadd.f32 %v2575, %v2739
        %v2772 = vadd.f32 %v2576, %v2740
        %v2773 = vadd.f32 %v2577, %v2741
        %v2774 = vadd.f32 %v2578, %v2742
        %v2775 = vadd.f32 %v2579, %v2743
        %v2776 = vadd.f32 %v2580, %v2744
        %v2777 = vadd.f32 %v2581, %v2745
        %v2778 = vadd.f32 %v2582, %v2746
        %v2779 = vadd.f32 %v2583, %v2747
        %v2780 = vadd.f32 %v2584, %v2748
        %v2781 = vadd.f32 %v2585, %v2749
        %v2782 = vadd.f32 %v2586, %v2750
        %v2783 = vadd.f32 %v2587, %v2751
        %v2784 = vadd.f32 %v2588, %v2752
        %v2785 = vadd.f32 %v2589, %v2753
        %v2786 = vadd.f32 %v2590, %v2754
        %v2787 = vadd.f32 %v2591, %v2755
        %v2788 = vadd.f32 %v2592, %v2756
        %v2789 = vadd.f32 %v2593, %v2757
        %v2790 = vadd.f32 %v2594, %v2758
        %v2791 = vadd.f32 %v2595, %v2759
        %v2792 = vadd.f32 %v2596, %v2760
        %2793 = vset.pattern.permute.xlu0 13
        %2794 = vperm.xlu0 %2793, %v172
        %v2795 = vpop.permute.xlu0 %2794
        %2797 = vset.pattern.permute.xlu0 13
        %2798 = vperm.xlu0 %2797, %v173
        %v2799 = vpop.permute.xlu0 %2798
        %2801 = vset.pattern.permute.xlu0 13
        %2802 = vperm.xlu0 %2801, %v174
        %v2803 = vpop.permute.xlu0 %2802
        %2805 = vset.pattern.permute.xlu0 13
        %2806 = vperm.xlu0 %2805, %v175
        %v2807 = vpop.permute.xlu0 %2806
        %2809 = vset.pattern.permute.xlu0 13
        %2810 = vperm.xlu0 %2809, %v176
        %v2811 = vpop.permute.xlu0 %2810
        %2813 = vset.pattern.permute.xlu0 13
        %2814 = vperm.xlu0 %2813, %v177
        %v2815 = vpop.permute.xlu0 %2814
        %2817 = vset.pattern.permute.xlu0 13
        %2818 = vperm.xlu0 %2817, %v178
        %v2819 = vpop.permute.xlu0 %2818
        %2821 = vset.pattern.permute.xlu0 13
        %2822 = vperm.xlu0 %2821, %v179
        %v2823 = vpop.permute.xlu0 %2822
        %2825 = vset.pattern.permute.xlu0 13
        %2826 = vperm.xlu0 %2825, %v180
        %v2827 = vpop.permute.xlu0 %2826
        %2829 = vset.pattern.permute.xlu0 13
        %2830 = vperm.xlu0 %2829, %v181
        %v2831 = vpop.permute.xlu0 %2830
        %2833 = vset.pattern.permute.xlu0 13
        %2834 = vperm.xlu0 %2833, %v182
        %v2835 = vpop.permute.xlu0 %2834
        %2837 = vset.pattern.permute.xlu0 13
        %2838 = vperm.xlu0 %2837, %v183
        %v2839 = vpop.permute.xlu0 %2838
        %2841 = vset.pattern.permute.xlu0 13
        %2842 = vperm.xlu0 %2841, %v184
        %v2843 = vpop.permute.xlu0 %2842
        %2845 = vset.pattern.permute.xlu0 13
        %2846 = vperm.xlu0 %2845, %v185
        %v2847 = vpop.permute.xlu0 %2846
        %2849 = vset.pattern.permute.xlu0 13
        %2850 = vperm.xlu0 %2849, %v186
        %v2851 = vpop.permute.xlu0 %2850
        %2853 = vset.pattern.permute.xlu0 13
        %2854 = vperm.xlu0 %2853, %v187
        %v2855 = vpop.permute.xlu0 %2854
        %2857 = vset.pattern.permute.xlu0 13
        %2858 = vperm.xlu0 %2857, %v188
        %v2859 = vpop.permute.xlu0 %2858
        %2861 = vset.pattern.permute.xlu0 13
        %2862 = vperm.xlu0 %2861, %v189
        %v2863 = vpop.permute.xlu0 %2862
        %2865 = vset.pattern.permute.xlu0 13
        %2866 = vperm.xlu0 %2865, %v190
        %v2867 = vpop.permute.xlu0 %2866
        %2869 = vset.pattern.permute.xlu0 13
        %2870 = vperm.xlu0 %2869, %v191
        %v2871 = vpop.permute.xlu0 %2870
        %2873 = vset.pattern.permute.xlu0 13
        %2874 = vperm.xlu0 %2873, %v192
        %v2875 = vpop.permute.xlu0 %2874
        %2877 = vset.pattern.permute.xlu0 13
        %2878 = vperm.xlu0 %2877, %v193
        %v2879 = vpop.permute.xlu0 %2878
        %2881 = vset.pattern.permute.xlu0 13
        %2882 = vperm.xlu0 %2881, %v194
        %v2883 = vpop.permute.xlu0 %2882
        %2885 = vset.pattern.permute.xlu0 13
        %2886 = vperm.xlu0 %2885, %v195
        %v2887 = vpop.permute.xlu0 %2886
        %2889 = vset.pattern.permute.xlu0 13
        %2890 = vperm.xlu0 %2889, %v196
        %v2891 = vpop.permute.xlu0 %2890
        %2893 = vset.pattern.permute.xlu0 13
        %2894 = vperm.xlu0 %2893, %v197
        %v2895 = vpop.permute.xlu0 %2894
        %2897 = vset.pattern.permute.xlu0 13
        %2898 = vperm.xlu0 %2897, %v198
        %v2899 = vpop.permute.xlu0 %2898
        %2901 = vset.pattern.permute.xlu0 13
        %2902 = vperm.xlu0 %2901, %v199
        %v2903 = vpop.permute.xlu0 %2902
        %2905 = vset.pattern.permute.xlu0 13
        %2906 = vperm.xlu0 %2905, %v200
        %v2907 = vpop.permute.xlu0 %2906
        %2909 = vset.pattern.permute.xlu0 13
        %2910 = vperm.xlu0 %2909, %v201
        %v2911 = vpop.permute.xlu0 %2910
        %2913 = vset.pattern.permute.xlu0 13
        %2914 = vperm.xlu0 %2913, %v202
        %v2915 = vpop.permute.xlu0 %2914
        %2917 = vset.pattern.permute.xlu0 13
        %2918 = vperm.xlu0 %2917, %v203
        %v2919 = vpop.permute.xlu0 %2918
        %v2921 = vlaneseq
        %v2922 = vshrl.u32 %v2921, 7
        %v2923 = vsub.s32 5, %v2922
        %v2924 = vrot.slane %v205, %v2923
        %v2925 = vmul.f32 %v2795, %v2924
        %v2926 = vmul.f32 %v2799, %v2924
        %v2927 = vmul.f32 %v2803, %v2924
        %v2928 = vmul.f32 %v2807, %v2924
        %v2929 = vmul.f32 %v2811, %v2924
        %v2930 = vmul.f32 %v2815, %v2924
        %v2931 = vmul.f32 %v2819, %v2924
        %v2932 = vmul.f32 %v2823, %v2924
        %v2933 = vmul.f32 %v2827, %v2924
        %v2934 = vmul.f32 %v2831, %v2924
        %v2935 = vmul.f32 %v2835, %v2924
        %v2936 = vmul.f32 %v2839, %v2924
        %v2937 = vmul.f32 %v2843, %v2924
        %v2938 = vmul.f32 %v2847, %v2924
        %v2939 = vmul.f32 %v2851, %v2924
        %v2940 = vmul.f32 %v2855, %v2924
        %v2941 = vmul.f32 %v2859, %v2924
        %v2942 = vmul.f32 %v2863, %v2924
        %v2943 = vmul.f32 %v2867, %v2924
        %v2944 = vmul.f32 %v2871, %v2924
        %v2945 = vmul.f32 %v2875, %v2924
        %v2946 = vmul.f32 %v2879, %v2924
        %v2947 = vmul.f32 %v2883, %v2924
        %v2948 = vmul.f32 %v2887, %v2924
        %v2949 = vmul.f32 %v2891, %v2924
        %v2950 = vmul.f32 %v2895, %v2924
        %v2951 = vmul.f32 %v2899, %v2924
        %v2952 = vmul.f32 %v2903, %v2924
        %v2953 = vmul.f32 %v2907, %v2924
        %v2954 = vmul.f32 %v2911, %v2924
        %v2955 = vmul.f32 %v2915, %v2924
        %v2956 = vmul.f32 %v2919, %v2924
        %v2957 = vadd.f32 %v2761, %v2925
        %v2958 = vadd.f32 %v2762, %v2926
        %v2959 = vadd.f32 %v2763, %v2927
        %v2960 = vadd.f32 %v2764, %v2928
        %v2961 = vadd.f32 %v2765, %v2929
        %v2962 = vadd.f32 %v2766, %v2930
        %v2963 = vadd.f32 %v2767, %v2931
        %v2964 = vadd.f32 %v2768, %v2932
        %v2965 = vadd.f32 %v2769, %v2933
        %v2966 = vadd.f32 %v2770, %v2934
        %v2967 = vadd.f32 %v2771, %v2935
        %v2968 = vadd.f32 %v2772, %v2936
        %v2969 = vadd.f32 %v2773, %v2937
        %v2970 = vadd.f32 %v2774, %v2938
        %v2971 = vadd.f32 %v2775, %v2939
        %v2972 = vadd.f32 %v2776, %v2940
        %v2973 = vadd.f32 %v2777, %v2941
        %v2974 = vadd.f32 %v2778, %v2942
        %v2975 = vadd.f32 %v2779, %v2943
        %v2976 = vadd.f32 %v2780, %v2944
        %v2977 = vadd.f32 %v2781, %v2945
        %v2978 = vadd.f32 %v2782, %v2946
        %v2979 = vadd.f32 %v2783, %v2947
        %v2980 = vadd.f32 %v2784, %v2948
        %v2981 = vadd.f32 %v2785, %v2949
        %v2982 = vadd.f32 %v2786, %v2950
        %v2983 = vadd.f32 %v2787, %v2951
        %v2984 = vadd.f32 %v2788, %v2952
        %v2985 = vadd.f32 %v2789, %v2953
        %v2986 = vadd.f32 %v2790, %v2954
        %v2987 = vadd.f32 %v2791, %v2955
        %v2988 = vadd.f32 %v2792, %v2956
        %2989 = vset.pattern.permute.xlu0 14
        %2990 = vperm.xlu0 %2989, %v172
        %v2991 = vpop.permute.xlu0 %2990
        %2993 = vset.pattern.permute.xlu0 14
        %2994 = vperm.xlu0 %2993, %v173
        %v2995 = vpop.permute.xlu0 %2994
        %2997 = vset.pattern.permute.xlu0 14
        %2998 = vperm.xlu0 %2997, %v174
        %v2999 = vpop.permute.xlu0 %2998
        %3001 = vset.pattern.permute.xlu0 14
        %3002 = vperm.xlu0 %3001, %v175
        %v3003 = vpop.permute.xlu0 %3002
        %3005 = vset.pattern.permute.xlu0 14
        %3006 = vperm.xlu0 %3005, %v176
        %v3007 = vpop.permute.xlu0 %3006
        %3009 = vset.pattern.permute.xlu0 14
        %3010 = vperm.xlu0 %3009, %v177
        %v3011 = vpop.permute.xlu0 %3010
        %3013 = vset.pattern.permute.xlu0 14
        %3014 = vperm.xlu0 %3013, %v178
        %v3015 = vpop.permute.xlu0 %3014
        %3017 = vset.pattern.permute.xlu0 14
        %3018 = vperm.xlu0 %3017, %v179
        %v3019 = vpop.permute.xlu0 %3018
        %3021 = vset.pattern.permute.xlu0 14
        %3022 = vperm.xlu0 %3021, %v180
        %v3023 = vpop.permute.xlu0 %3022
        %3025 = vset.pattern.permute.xlu0 14
        %3026 = vperm.xlu0 %3025, %v181
        %v3027 = vpop.permute.xlu0 %3026
        %3029 = vset.pattern.permute.xlu0 14
        %3030 = vperm.xlu0 %3029, %v182
        %v3031 = vpop.permute.xlu0 %3030
        %3033 = vset.pattern.permute.xlu0 14
        %3034 = vperm.xlu0 %3033, %v183
        %v3035 = vpop.permute.xlu0 %3034
        %3037 = vset.pattern.permute.xlu0 14
        %3038 = vperm.xlu0 %3037, %v184
        %v3039 = vpop.permute.xlu0 %3038
        %3041 = vset.pattern.permute.xlu0 14
        %3042 = vperm.xlu0 %3041, %v185
        %v3043 = vpop.permute.xlu0 %3042
        %3045 = vset.pattern.permute.xlu0 14
        %3046 = vperm.xlu0 %3045, %v186
        %v3047 = vpop.permute.xlu0 %3046
        %3049 = vset.pattern.permute.xlu0 14
        %3050 = vperm.xlu0 %3049, %v187
        %v3051 = vpop.permute.xlu0 %3050
        %3053 = vset.pattern.permute.xlu0 14
        %3054 = vperm.xlu0 %3053, %v188
        %v3055 = vpop.permute.xlu0 %3054
        %3057 = vset.pattern.permute.xlu0 14
        %3058 = vperm.xlu0 %3057, %v189
        %v3059 = vpop.permute.xlu0 %3058
        %3061 = vset.pattern.permute.xlu0 14
        %3062 = vperm.xlu0 %3061, %v190
        %v3063 = vpop.permute.xlu0 %3062
        %3065 = vset.pattern.permute.xlu0 14
        %3066 = vperm.xlu0 %3065, %v191
        %v3067 = vpop.permute.xlu0 %3066
        %3069 = vset.pattern.permute.xlu0 14
        %3070 = vperm.xlu0 %3069, %v192
        %v3071 = vpop.permute.xlu0 %3070
        %3073 = vset.pattern.permute.xlu0 14
        %3074 = vperm.xlu0 %3073, %v193
        %v3075 = vpop.permute.xlu0 %3074
        %3077 = vset.pattern.permute.xlu0 14
        %3078 = vperm.xlu0 %3077, %v194
        %v3079 = vpop.permute.xlu0 %3078
        %3081 = vset.pattern.permute.xlu0 14
        %3082 = vperm.xlu0 %3081, %v195
        %v3083 = vpop.permute.xlu0 %3082
        %3085 = vset.pattern.permute.xlu0 14
        %3086 = vperm.xlu0 %3085, %v196
        %v3087 = vpop.permute.xlu0 %3086
        %3089 = vset.pattern.permute.xlu0 14
        %3090 = vperm.xlu0 %3089, %v197
        %v3091 = vpop.permute.xlu0 %3090
        %3093 = vset.pattern.permute.xlu0 14
        %3094 = vperm.xlu0 %3093, %v198
        %v3095 = vpop.permute.xlu0 %3094
        %3097 = vset.pattern.permute.xlu0 14
        %3098 = vperm.xlu0 %3097, %v199
        %v3099 = vpop.permute.xlu0 %3098
        %3101 = vset.pattern.permute.xlu0 14
        %3102 = vperm.xlu0 %3101, %v200
        %v3103 = vpop.permute.xlu0 %3102
        %3105 = vset.pattern.permute.xlu0 14
        %3106 = vperm.xlu0 %3105, %v201
        %v3107 = vpop.permute.xlu0 %3106
        %3109 = vset.pattern.permute.xlu0 14
        %3110 = vperm.xlu0 %3109, %v202
        %v3111 = vpop.permute.xlu0 %3110
        %3113 = vset.pattern.permute.xlu0 14
        %3114 = vperm.xlu0 %3113, %v203
        %v3115 = vpop.permute.xlu0 %3114
        %v3117 = vlaneseq
        %v3118 = vshrl.u32 %v3117, 7
        %v3119 = vsub.s32 6, %v3118
        %v3120 = vrot.slane %v205, %v3119
        %v3121 = vmul.f32 %v2991, %v3120
        %v3122 = vmul.f32 %v2995, %v3120
        %v3123 = vmul.f32 %v2999, %v3120
        %v3124 = vmul.f32 %v3003, %v3120
        %v3125 = vmul.f32 %v3007, %v3120
        %v3126 = vmul.f32 %v3011, %v3120
        %v3127 = vmul.f32 %v3015, %v3120
        %v3128 = vmul.f32 %v3019, %v3120
        %v3129 = vmul.f32 %v3023, %v3120
        %v3130 = vmul.f32 %v3027, %v3120
        %v3131 = vmul.f32 %v3031, %v3120
        %v3132 = vmul.f32 %v3035, %v3120
        %v3133 = vmul.f32 %v3039, %v3120
        %v3134 = vmul.f32 %v3043, %v3120
        %v3135 = vmul.f32 %v3047, %v3120
        %v3136 = vmul.f32 %v3051, %v3120
        %v3137 = vmul.f32 %v3055, %v3120
        %v3138 = vmul.f32 %v3059, %v3120
        %v3139 = vmul.f32 %v3063, %v3120
        %v3140 = vmul.f32 %v3067, %v3120
        %v3141 = vmul.f32 %v3071, %v3120
        %v3142 = vmul.f32 %v3075, %v3120
        %v3143 = vmul.f32 %v3079, %v3120
        %v3144 = vmul.f32 %v3083, %v3120
        %v3145 = vmul.f32 %v3087, %v3120
        %v3146 = vmul.f32 %v3091, %v3120
        %v3147 = vmul.f32 %v3095, %v3120
        %v3148 = vmul.f32 %v3099, %v3120
        %v3149 = vmul.f32 %v3103, %v3120
        %v3150 = vmul.f32 %v3107, %v3120
        %v3151 = vmul.f32 %v3111, %v3120
        %v3152 = vmul.f32 %v3115, %v3120
        %v3153 = vadd.f32 %v2957, %v3121
        %v3154 = vadd.f32 %v2958, %v3122
        %v3155 = vadd.f32 %v2959, %v3123
        %v3156 = vadd.f32 %v2960, %v3124
        %v3157 = vadd.f32 %v2961, %v3125
        %v3158 = vadd.f32 %v2962, %v3126
        %v3159 = vadd.f32 %v2963, %v3127
        %v3160 = vadd.f32 %v2964, %v3128
        %v3161 = vadd.f32 %v2965, %v3129
        %v3162 = vadd.f32 %v2966, %v3130
        %v3163 = vadd.f32 %v2967, %v3131
        %v3164 = vadd.f32 %v2968, %v3132
        %v3165 = vadd.f32 %v2969, %v3133
        %v3166 = vadd.f32 %v2970, %v3134
        %v3167 = vadd.f32 %v2971, %v3135
        %v3168 = vadd.f32 %v2972, %v3136
        %v3169 = vadd.f32 %v2973, %v3137
        %v3170 = vadd.f32 %v2974, %v3138
        %v3171 = vadd.f32 %v2975, %v3139
        %v3172 = vadd.f32 %v2976, %v3140
        %v3173 = vadd.f32 %v2977, %v3141
        %v3174 = vadd.f32 %v2978, %v3142
        %v3175 = vadd.f32 %v2979, %v3143
        %v3176 = vadd.f32 %v2980, %v3144
        %v3177 = vadd.f32 %v2981, %v3145
        %v3178 = vadd.f32 %v2982, %v3146
        %v3179 = vadd.f32 %v2983, %v3147
        %v3180 = vadd.f32 %v2984, %v3148
        %v3181 = vadd.f32 %v2985, %v3149
        %v3182 = vadd.f32 %v2986, %v3150
        %v3183 = vadd.f32 %v2987, %v3151
        %v3184 = vadd.f32 %v2988, %v3152
        %3185 = vset.pattern.permute.xlu0 15
        %3186 = vperm.xlu0 %3185, %v172
        %v3187 = vpop.permute.xlu0 %3186
        %3189 = vset.pattern.permute.xlu0 15
        %3190 = vperm.xlu0 %3189, %v173
        %v3191 = vpop.permute.xlu0 %3190
        %3193 = vset.pattern.permute.xlu0 15
        %3194 = vperm.xlu0 %3193, %v174
        %v3195 = vpop.permute.xlu0 %3194
        %3197 = vset.pattern.permute.xlu0 15
        %3198 = vperm.xlu0 %3197, %v175
        %v3199 = vpop.permute.xlu0 %3198
        %3201 = vset.pattern.permute.xlu0 15
        %3202 = vperm.xlu0 %3201, %v176
        %v3203 = vpop.permute.xlu0 %3202
        %3205 = vset.pattern.permute.xlu0 15
        %3206 = vperm.xlu0 %3205, %v177
        %v3207 = vpop.permute.xlu0 %3206
        %3209 = vset.pattern.permute.xlu0 15
        %3210 = vperm.xlu0 %3209, %v178
        %v3211 = vpop.permute.xlu0 %3210
        %3213 = vset.pattern.permute.xlu0 15
        %3214 = vperm.xlu0 %3213, %v179
        %v3215 = vpop.permute.xlu0 %3214
        %3217 = vset.pattern.permute.xlu0 15
        %3218 = vperm.xlu0 %3217, %v180
        %v3219 = vpop.permute.xlu0 %3218
        %3221 = vset.pattern.permute.xlu0 15
        %3222 = vperm.xlu0 %3221, %v181
        %v3223 = vpop.permute.xlu0 %3222
        %3225 = vset.pattern.permute.xlu0 15
        %3226 = vperm.xlu0 %3225, %v182
        %v3227 = vpop.permute.xlu0 %3226
        %3229 = vset.pattern.permute.xlu0 15
        %3230 = vperm.xlu0 %3229, %v183
        %v3231 = vpop.permute.xlu0 %3230
        %3233 = vset.pattern.permute.xlu0 15
        %3234 = vperm.xlu0 %3233, %v184
        %v3235 = vpop.permute.xlu0 %3234
        %3237 = vset.pattern.permute.xlu0 15
        %3238 = vperm.xlu0 %3237, %v185
        %v3239 = vpop.permute.xlu0 %3238
        %3241 = vset.pattern.permute.xlu0 15
        %3242 = vperm.xlu0 %3241, %v186
        %v3243 = vpop.permute.xlu0 %3242
        %3245 = vset.pattern.permute.xlu0 15
        %3246 = vperm.xlu0 %3245, %v187
        %v3247 = vpop.permute.xlu0 %3246
        %3249 = vset.pattern.permute.xlu0 15
        %3250 = vperm.xlu0 %3249, %v188
        %v3251 = vpop.permute.xlu0 %3250
        %3253 = vset.pattern.permute.xlu0 15
        %3254 = vperm.xlu0 %3253, %v189
        %v3255 = vpop.permute.xlu0 %3254
        %3257 = vset.pattern.permute.xlu0 15
        %3258 = vperm.xlu0 %3257, %v190
        %v3259 = vpop.permute.xlu0 %3258
        %3261 = vset.pattern.permute.xlu0 15
        %3262 = vperm.xlu0 %3261, %v191
        %v3263 = vpop.permute.xlu0 %3262
        %3265 = vset.pattern.permute.xlu0 15
        %3266 = vperm.xlu0 %3265, %v192
        %v3267 = vpop.permute.xlu0 %3266
        %3269 = vset.pattern.permute.xlu0 15
        %3270 = vperm.xlu0 %3269, %v193
        %v3271 = vpop.permute.xlu0 %3270
        %3273 = vset.pattern.permute.xlu0 15
        %3274 = vperm.xlu0 %3273, %v194
        %v3275 = vpop.permute.xlu0 %3274
        %3277 = vset.pattern.permute.xlu0 15
        %3278 = vperm.xlu0 %3277, %v195
        %v3279 = vpop.permute.xlu0 %3278
        %3281 = vset.pattern.permute.xlu0 15
        %3282 = vperm.xlu0 %3281, %v196
        %v3283 = vpop.permute.xlu0 %3282
        %3285 = vset.pattern.permute.xlu0 15
        %3286 = vperm.xlu0 %3285, %v197
        %v3287 = vpop.permute.xlu0 %3286
        %3289 = vset.pattern.permute.xlu0 15
        %3290 = vperm.xlu0 %3289, %v198
        %v3291 = vpop.permute.xlu0 %3290
        %3293 = vset.pattern.permute.xlu0 15
        %3294 = vperm.xlu0 %3293, %v199
        %v3295 = vpop.permute.xlu0 %3294
        %3297 = vset.pattern.permute.xlu0 15
        %3298 = vperm.xlu0 %3297, %v200
        %v3299 = vpop.permute.xlu0 %3298
        %3301 = vset.pattern.permute.xlu0 15
        %3302 = vperm.xlu0 %3301, %v201
        %v3303 = vpop.permute.xlu0 %3302
        %3305 = vset.pattern.permute.xlu0 15
        %3306 = vperm.xlu0 %3305, %v202
        %v3307 = vpop.permute.xlu0 %3306
        %3309 = vset.pattern.permute.xlu0 15
        %3310 = vperm.xlu0 %3309, %v203
        %v3311 = vpop.permute.xlu0 %3310
        %v3313 = vlaneseq
        %v3314 = vshrl.u32 %v3313, 7
        %v3315 = vsub.s32 7, %v3314
        %v3316 = vrot.slane %v205, %v3315
        %v3317 = vmul.f32 %v3187, %v3316
        %v3318 = vmul.f32 %v3191, %v3316
        %v3319 = vmul.f32 %v3195, %v3316
        %v3320 = vmul.f32 %v3199, %v3316
        %v3321 = vmul.f32 %v3203, %v3316
        %v3322 = vmul.f32 %v3207, %v3316
        %v3323 = vmul.f32 %v3211, %v3316
        %v3324 = vmul.f32 %v3215, %v3316
        %v3325 = vmul.f32 %v3219, %v3316
        %v3326 = vmul.f32 %v3223, %v3316
        %v3327 = vmul.f32 %v3227, %v3316
        %v3328 = vmul.f32 %v3231, %v3316
        %v3329 = vmul.f32 %v3235, %v3316
        %v3330 = vmul.f32 %v3239, %v3316
        %v3331 = vmul.f32 %v3243, %v3316
        %v3332 = vmul.f32 %v3247, %v3316
        %v3333 = vmul.f32 %v3251, %v3316
        %v3334 = vmul.f32 %v3255, %v3316
        %v3335 = vmul.f32 %v3259, %v3316
        %v3336 = vmul.f32 %v3263, %v3316
        %v3337 = vmul.f32 %v3267, %v3316
        %v3338 = vmul.f32 %v3271, %v3316
        %v3339 = vmul.f32 %v3275, %v3316
        %v3340 = vmul.f32 %v3279, %v3316
        %v3341 = vmul.f32 %v3283, %v3316
        %v3342 = vmul.f32 %v3287, %v3316
        %v3343 = vmul.f32 %v3291, %v3316
        %v3344 = vmul.f32 %v3295, %v3316
        %v3345 = vmul.f32 %v3299, %v3316
        %v3346 = vmul.f32 %v3303, %v3316
        %v3347 = vmul.f32 %v3307, %v3316
        %v3348 = vmul.f32 %v3311, %v3316
        %v3349 = vadd.f32 %v3153, %v3317
        %v3350 = vadd.f32 %v3154, %v3318
        %v3351 = vadd.f32 %v3155, %v3319
        %v3352 = vadd.f32 %v3156, %v3320
        %v3353 = vadd.f32 %v3157, %v3321
        %v3354 = vadd.f32 %v3158, %v3322
        %v3355 = vadd.f32 %v3159, %v3323
        %v3356 = vadd.f32 %v3160, %v3324
        %v3357 = vadd.f32 %v3161, %v3325
        %v3358 = vadd.f32 %v3162, %v3326
        %v3359 = vadd.f32 %v3163, %v3327
        %v3360 = vadd.f32 %v3164, %v3328
        %v3361 = vadd.f32 %v3165, %v3329
        %v3362 = vadd.f32 %v3166, %v3330
        %v3363 = vadd.f32 %v3167, %v3331
        %v3364 = vadd.f32 %v3168, %v3332
        %v3365 = vadd.f32 %v3169, %v3333
        %v3366 = vadd.f32 %v3170, %v3334
        %v3367 = vadd.f32 %v3171, %v3335
        %v3368 = vadd.f32 %v3172, %v3336
        %v3369 = vadd.f32 %v3173, %v3337
        %v3370 = vadd.f32 %v3174, %v3338
        %v3371 = vadd.f32 %v3175, %v3339
        %v3372 = vadd.f32 %v3176, %v3340
        %v3373 = vadd.f32 %v3177, %v3341
        %v3374 = vadd.f32 %v3178, %v3342
        %v3375 = vadd.f32 %v3179, %v3343
        %v3376 = vadd.f32 %v3180, %v3344
        %v3377 = vadd.f32 %v3181, %v3345
        %v3378 = vadd.f32 %v3182, %v3346
        %v3379 = vadd.f32 %v3183, %v3347
        %v3380 = vadd.f32 %v3184, %v3348
        %v3381 = vand.u32 2147483647, %v3349
        %vm3382 = vcmp.le.f32.partialorder %v3381, 0.7853982
        %vm3383 = vcmp.lt.s32.totalorder %v3349, 0
        %v3384 = vand.u32 %v3349, 2139095040
        %v3385 = vshrl.u32 %v3384, 23
        %v3386 = vsub.s32 %v3385, 127
        %v3387 = vand.u32 2147483647, %v3349
        %v3388 = vand.u32 %v3387, 8388607
        %v3389 = vor.u32 %v3388, 8388608
        %v3390 = vsub.s32 0, %v3389
        %v3391 = vadd.s32 %v3386, 1
        %vm3392 = vcmp.gt.s32.totalorder %v3391, 0
        %v3393 = vsel %vm3392, %v3391, 0
        %v3394 = vshrl.u32 %v3393, 5
        %v3395 = vand.u32 %v3393, 31
        %v3396 = vsub.s32 32, %v3395
        %v3397 = vshrl.u32 683565275, %v3396
        %v3398 = vshll.u32 683565275, %v3395
        %v3399 = vshrl.u32 2475754826, %v3396
        %v3400 = vor.u32 %v3398, %v3399
        %v3401 = vshll.u32 2475754826, %v3395
        %v3402 = vshrl.u32 2131351028, %v3396
        %v3403 = vor.u32 %v3401, %v3402
        %v3404 = vshll.u32 2131351028, %v3395
        %v3405 = vshrl.u32 2102212464, %v3396
        %v3406 = vor.u32 %v3404, %v3405
        %v3407 = vshll.u32 2102212464, %v3395
        %v3408 = vshrl.u32 920167782, %v3396
        %v3409 = vor.u32 %v3407, %v3408
        %v3410 = vshll.u32 920167782, %v3395
        %v3411 = vshrl.u32 1326507024, %v3396
        %v3412 = vor.u32 %v3410, %v3411
        %vm3413 = vcmp.lt.s32.totalorder %v3394, 1
        %vm3414 = vcmp.lt.s32.totalorder %v3394, 2
        %vm3415 = vcmp.lt.s32.totalorder %v3394, 3
        %vm3416 = vcmp.lt.s32.totalorder %v3394, 4
        %v3417 = vsel %vm3413, %v3397, %v3400
        %v3418 = vsel %vm3416, %v3406, 2102212464
        %v3419 = vsel %vm3415, %v3403, %v3418
        %v3420 = vsel %vm3414, %v3417, %v3419
        %v3421 = vsel %vm3413, %v3400, %v3403
        %v3422 = vsel %vm3416, %v3409, 920167782
        %v3423 = vsel %vm3415, %v3406, %v3422
        %v3424 = vsel %vm3414, %v3421, %v3423
        %v3425 = vsel %vm3413, %v3403, %v3406
        %v3426 = vsel %vm3416, %v3412, 1326507024
        %v3427 = vsel %vm3415, %v3409, %v3426
        %v3428 = vsel %vm3414, %v3425, %v3427
        %v3429 = vshll.u32 %v3389, 8
        %v3430 = vmul.u32.u64.compose %v3429, %v3428
        %v3431 = vextract.low.u32 %v3430
        %v3432 = vextract.high.u32 %v3430
        %v3433 = vmul.u32.u64.compose %v3429, %v3424
        %v3434 = vextract.low.u32 %v3433
        %v3435 = vextract.high.u32 %v3433
        %v3436 = vmul.u32 %v3429, %v3420
        %v3437 = vadd.s32 %v3432, %v3434
        %vm3438 = vc.u32 %v3432, %v3434
        %v3439 = vadd.s32 %v3435, 1
        %v3440 = vsel %vm3438, %v3439, %v3435
        %v3441 = vadd.s32 %v3436, %v3440
        %v3442 = vadd.s32 %v3441, 536870912
        %v3443 = vshrl.u32 %v3442, 30
        %v3444 = vshll.u32 %v3443, 30
        %v3445 = vsub.s32 %v3441, %v3444
        %vm3446 = vcmp.lt.s32.totalorder %v3445, 0
        %v3447 = vsub.s32 0, %v3445
        %v3448 = vsel %vm3446, %v3447, %v3445
        %v3449 = vclz %v3448
        %v3450 = vsub.s32 %v3449, 2
        %vm3451 = vcmp.gt.s32.totalorder 0, %v3450
        %v3452 = vsel %vm3451, 0, %v3450
        %v3453 = vsub.s32 32, %v3452
        %v3454 = vshll.u32 %v3445, %v3452
        %v3455 = vshrl.u32 %v3437, %v3453
        %v3456 = vor.u32 %v3454, %v3455
        %v3457 = vsub.s32 4294967266, %v3452
        %v3458 = vadd.s32 %v3457, 127
        %v3459 = vshll.u32 %v3458, 23
        %v3460 = vor.u32 4788187, %v3459
        %v3461 = vand.u32 2147483647, %v3460
        %v3463 = vcvt.s32.f32 %v3456
        %v3464 = vmul.f32 %v3463, %v3461
        %v3465 = vxor.u32 %v3464, 2147483648
        %v3466 = vsel %vm3383, %v3465, %v3464
        %v3467 = vsub.s32 4, %v3443
        %v3468 = vsel %vm3383, %v3467, %v3443
        %v3469 = vsel %vm3382, %v3349, %v3466
        %v3470 = vsel %vm3382, 0, %v3468
        %v3471 = vcosq.f32.pop %v3469
        %v3472 = vsinq.f32.pop %v3469
        %vm3473 = vweird.f32 %v3349
        %v3474 = vadd.s32 %v3470, 3
        %v3475 = vand.u32 %v3474, 3
        %vm3476 = vcmp.lt.s32.totalorder %v3475, 2
        %vm3477 = vcmp.eq.s32.totalorder %v3475, 0
        %v3478 = vxor.u32 %v3472, 2147483648
        %v3479 = vsel %vm3477, %v3471, %v3478
        %vm3480 = vcmp.eq.s32.totalorder %v3475, 2
        %v3481 = vxor.u32 %v3471, 2147483648
        %v3482 = vsel %vm3480, %v3481, %v3472
        %v3483 = vsel %vm3476, %v3479, %v3482
        %v3484 = vsel %vm3473, nan, %v3483
        %v3485 = vand.u32 2147483647, %v3350
        %vm3486 = vcmp.le.f32.partialorder %v3485, 0.7853982
        %vm3487 = vcmp.lt.s32.totalorder %v3350, 0
        %v3488 = vand.u32 %v3350, 2139095040
        %v3489 = vshrl.u32 %v3488, 23
        %v3490 = vsub.s32 %v3489, 127
        %v3491 = vand.u32 2147483647, %v3350
        %v3492 = vand.u32 %v3491, 8388607
        %v3493 = vor.u32 %v3492, 8388608
        %v3494 = vsub.s32 0, %v3493
        %v3495 = vadd.s32 %v3490, 1
        %vm3496 = vcmp.gt.s32.totalorder %v3495, 0
        %v3497 = vsel %vm3496, %v3495, 0
        %v3498 = vshrl.u32 %v3497, 5
        %v3499 = vand.u32 %v3497, 31
        %v3500 = vsub.s32 32, %v3499
        %v3501 = vshrl.u32 683565275, %v3500
        %v3502 = vshll.u32 683565275, %v3499
        %v3503 = vshrl.u32 2475754826, %v3500
        %v3504 = vor.u32 %v3502, %v3503
        %v3505 = vshll.u32 2475754826, %v3499
        %v3506 = vshrl.u32 2131351028, %v3500
        %v3507 = vor.u32 %v3505, %v3506
        %v3508 = vshll.u32 2131351028, %v3499
        %v3509 = vshrl.u32 2102212464, %v3500
        %v3510 = vor.u32 %v3508, %v3509
        %v3511 = vshll.u32 2102212464, %v3499
        %v3512 = vshrl.u32 920167782, %v3500
        %v3513 = vor.u32 %v3511, %v3512
        %v3514 = vshll.u32 920167782, %v3499
        %v3515 = vshrl.u32 1326507024, %v3500
        %v3516 = vor.u32 %v3514, %v3515
        %vm3517 = vcmp.lt.s32.totalorder %v3498, 1
        %vm3518 = vcmp.lt.s32.totalorder %v3498, 2
        %vm3519 = vcmp.lt.s32.totalorder %v3498, 3
        %vm3520 = vcmp.lt.s32.totalorder %v3498, 4
        %v3521 = vsel %vm3517, %v3501, %v3504
        %v3522 = vsel %vm3520, %v3510, 2102212464
        %v3523 = vsel %vm3519, %v3507, %v3522
        %v3524 = vsel %vm3518, %v3521, %v3523
        %v3525 = vsel %vm3517, %v3504, %v3507
        %v3526 = vsel %vm3520, %v3513, 920167782
        %v3527 = vsel %vm3519, %v3510, %v3526
        %v3528 = vsel %vm3518, %v3525, %v3527
        %v3529 = vsel %vm3517, %v3507, %v3510
        %v3530 = vsel %vm3520, %v3516, 1326507024
        %v3531 = vsel %vm3519, %v3513, %v3530
        %v3532 = vsel %vm3518, %v3529, %v3531
        %v3533 = vshll.u32 %v3493, 8
        %v3534 = vmul.u32.u64.compose %v3533, %v3532
        %v3535 = vextract.low.u32 %v3534
        %v3536 = vextract.high.u32 %v3534
        %v3537 = vmul.u32.u64.compose %v3533, %v3528
        %v3538 = vextract.low.u32 %v3537
        %v3539 = vextract.high.u32 %v3537
        %v3540 = vmul.u32 %v3533, %v3524
        %v3541 = vadd.s32 %v3536, %v3538
        %vm3542 = vc.u32 %v3536, %v3538
        %v3543 = vadd.s32 %v3539, 1
        %v3544 = vsel %vm3542, %v3543, %v3539
        %v3545 = vadd.s32 %v3540, %v3544
        %v3546 = vadd.s32 %v3545, 536870912
        %v3547 = vshrl.u32 %v3546, 30
        %v3548 = vshll.u32 %v3547, 30
        %v3549 = vsub.s32 %v3545, %v3548
        %vm3550 = vcmp.lt.s32.totalorder %v3549, 0
        %v3551 = vsub.s32 0, %v3549
        %v3552 = vsel %vm3550, %v3551, %v3549
        %v3553 = vclz %v3552
        %v3554 = vsub.s32 %v3553, 2
        %vm3555 = vcmp.gt.s32.totalorder 0, %v3554
        %v3556 = vsel %vm3555, 0, %v3554
        %v3557 = vsub.s32 32, %v3556
        %v3558 = vshll.u32 %v3549, %v3556
        %v3559 = vshrl.u32 %v3541, %v3557
        %v3560 = vor.u32 %v3558, %v3559
        %v3561 = vsub.s32 4294967266, %v3556
        %v3562 = vadd.s32 %v3561, 127
        %v3563 = vshll.u32 %v3562, 23
        %v3564 = vor.u32 4788187, %v3563
        %v3565 = vand.u32 2147483647, %v3564
        %v3567 = vcvt.s32.f32 %v3560
        %v3568 = vmul.f32 %v3567, %v3565
        %v3569 = vxor.u32 %v3568, 2147483648
        %v3570 = vsel %vm3487, %v3569, %v3568
        %v3571 = vsub.s32 4, %v3547
        %v3572 = vsel %vm3487, %v3571, %v3547
        %v3573 = vsel %vm3486, %v3350, %v3570
        %v3574 = vsel %vm3486, 0, %v3572
        %v3575 = vcosq.f32.pop %v3573
        %v3576 = vsinq.f32.pop %v3573
        %vm3577 = vweird.f32 %v3350
        %v3578 = vadd.s32 %v3574, 3
        %v3579 = vand.u32 %v3578, 3
        %vm3580 = vcmp.lt.s32.totalorder %v3579, 2
        %vm3581 = vcmp.eq.s32.totalorder %v3579, 0
        %v3582 = vxor.u32 %v3576, 2147483648
        %v3583 = vsel %vm3581, %v3575, %v3582
        %vm3584 = vcmp.eq.s32.totalorder %v3579, 2
        %v3585 = vxor.u32 %v3575, 2147483648
        %v3586 = vsel %vm3584, %v3585, %v3576
        %v3587 = vsel %vm3580, %v3583, %v3586
        %v3588 = vsel %vm3577, nan, %v3587
        %v3589 = vand.u32 2147483647, %v3351
        %vm3590 = vcmp.le.f32.partialorder %v3589, 0.7853982
        %vm3591 = vcmp.lt.s32.totalorder %v3351, 0
        %v3592 = vand.u32 %v3351, 2139095040
        %v3593 = vshrl.u32 %v3592, 23
        %v3594 = vsub.s32 %v3593, 127
        %v3595 = vand.u32 2147483647, %v3351
        %v3596 = vand.u32 %v3595, 8388607
        %v3597 = vor.u32 %v3596, 8388608
        %v3598 = vsub.s32 0, %v3597
        %v3599 = vadd.s32 %v3594, 1
        %vm3600 = vcmp.gt.s32.totalorder %v3599, 0
        %v3601 = vsel %vm3600, %v3599, 0
        %v3602 = vshrl.u32 %v3601, 5
        %v3603 = vand.u32 %v3601, 31
        %v3604 = vsub.s32 32, %v3603
        %v3605 = vshrl.u32 683565275, %v3604
        %v3606 = vshll.u32 683565275, %v3603
        %v3607 = vshrl.u32 2475754826, %v3604
        %v3608 = vor.u32 %v3606, %v3607
        %v3609 = vshll.u32 2475754826, %v3603
        %v3610 = vshrl.u32 2131351028, %v3604
        %v3611 = vor.u32 %v3609, %v3610
        %v3612 = vshll.u32 2131351028, %v3603
        %v3613 = vshrl.u32 2102212464, %v3604
        %v3614 = vor.u32 %v3612, %v3613
        %v3615 = vshll.u32 2102212464, %v3603
        %v3616 = vshrl.u32 920167782, %v3604
        %v3617 = vor.u32 %v3615, %v3616
        %v3618 = vshll.u32 920167782, %v3603
        %v3619 = vshrl.u32 1326507024, %v3604
        %v3620 = vor.u32 %v3618, %v3619
        %vm3621 = vcmp.lt.s32.totalorder %v3602, 1
        %vm3622 = vcmp.lt.s32.totalorder %v3602, 2
        %vm3623 = vcmp.lt.s32.totalorder %v3602, 3
        %vm3624 = vcmp.lt.s32.totalorder %v3602, 4
        %v3625 = vsel %vm3621, %v3605, %v3608
        %v3626 = vsel %vm3624, %v3614, 2102212464
        %v3627 = vsel %vm3623, %v3611, %v3626
        %v3628 = vsel %vm3622, %v3625, %v3627
        %v3629 = vsel %vm3621, %v3608, %v3611
        %v3630 = vsel %vm3624, %v3617, 920167782
        %v3631 = vsel %vm3623, %v3614, %v3630
        %v3632 = vsel %vm3622, %v3629, %v3631
        %v3633 = vsel %vm3621, %v3611, %v3614
        %v3634 = vsel %vm3624, %v3620, 1326507024
        %v3635 = vsel %vm3623, %v3617, %v3634
        %v3636 = vsel %vm3622, %v3633, %v3635
        %v3637 = vshll.u32 %v3597, 8
        %v3638 = vmul.u32.u64.compose %v3637, %v3636
        %v3639 = vextract.low.u32 %v3638
        %v3640 = vextract.high.u32 %v3638
        %v3641 = vmul.u32.u64.compose %v3637, %v3632
        %v3642 = vextract.low.u32 %v3641
        %v3643 = vextract.high.u32 %v3641
        %v3644 = vmul.u32 %v3637, %v3628
        %v3645 = vadd.s32 %v3640, %v3642
        %vm3646 = vc.u32 %v3640, %v3642
        %v3647 = vadd.s32 %v3643, 1
        %v3648 = vsel %vm3646, %v3647, %v3643
        %v3649 = vadd.s32 %v3644, %v3648
        %v3650 = vadd.s32 %v3649, 536870912
        %v3651 = vshrl.u32 %v3650, 30
        %v3652 = vshll.u32 %v3651, 30
        %v3653 = vsub.s32 %v3649, %v3652
        %vm3654 = vcmp.lt.s32.totalorder %v3653, 0
        %v3655 = vsub.s32 0, %v3653
        %v3656 = vsel %vm3654, %v3655, %v3653
        %v3657 = vclz %v3656
        %v3658 = vsub.s32 %v3657, 2
        %vm3659 = vcmp.gt.s32.totalorder 0, %v3658
        %v3660 = vsel %vm3659, 0, %v3658
        %v3661 = vsub.s32 32, %v3660
        %v3662 = vshll.u32 %v3653, %v3660
        %v3663 = vshrl.u32 %v3645, %v3661
        %v3664 = vor.u32 %v3662, %v3663
        %v3665 = vsub.s32 4294967266, %v3660
        %v3666 = vadd.s32 %v3665, 127
        %v3667 = vshll.u32 %v3666, 23
        %v3668 = vor.u32 4788187, %v3667
        %v3669 = vand.u32 2147483647, %v3668
        %v3671 = vcvt.s32.f32 %v3664
        %v3672 = vmul.f32 %v3671, %v3669
        %v3673 = vxor.u32 %v3672, 2147483648
        %v3674 = vsel %vm3591, %v3673, %v3672
        %v3675 = vsub.s32 4, %v3651
        %v3676 = vsel %vm3591, %v3675, %v3651
        %v3677 = vsel %vm3590, %v3351, %v3674
        %v3678 = vsel %vm3590, 0, %v3676
        %v3679 = vcosq.f32.pop %v3677
        %v3680 = vsinq.f32.pop %v3677
        %vm3681 = vweird.f32 %v3351
        %v3682 = vadd.s32 %v3678, 3
        %v3683 = vand.u32 %v3682, 3
        %vm3684 = vcmp.lt.s32.totalorder %v3683, 2
        %vm3685 = vcmp.eq.s32.totalorder %v3683, 0
        %v3686 = vxor.u32 %v3680, 2147483648
        %v3687 = vsel %vm3685, %v3679, %v3686
        %vm3688 = vcmp.eq.s32.totalorder %v3683, 2
        %v3689 = vxor.u32 %v3679, 2147483648
        %v3690 = vsel %vm3688, %v3689, %v3680
        %v3691 = vsel %vm3684, %v3687, %v3690
        %v3692 = vsel %vm3681, nan, %v3691
        %v3693 = vand.u32 2147483647, %v3352
        %vm3694 = vcmp.le.f32.partialorder %v3693, 0.7853982
        %vm3695 = vcmp.lt.s32.totalorder %v3352, 0
        %v3696 = vand.u32 %v3352, 2139095040
        %v3697 = vshrl.u32 %v3696, 23
        %v3698 = vsub.s32 %v3697, 127
        %v3699 = vand.u32 2147483647, %v3352
        %v3700 = vand.u32 %v3699, 8388607
        %v3701 = vor.u32 %v3700, 8388608
        %v3702 = vsub.s32 0, %v3701
        %v3703 = vadd.s32 %v3698, 1
        %vm3704 = vcmp.gt.s32.totalorder %v3703, 0
        %v3705 = vsel %vm3704, %v3703, 0
        %v3706 = vshrl.u32 %v3705, 5
        %v3707 = vand.u32 %v3705, 31
        %v3708 = vsub.s32 32, %v3707
        %v3709 = vshrl.u32 683565275, %v3708
        %v3710 = vshll.u32 683565275, %v3707
        %v3711 = vshrl.u32 2475754826, %v3708
        %v3712 = vor.u32 %v3710, %v3711
        %v3713 = vshll.u32 2475754826, %v3707
        %v3714 = vshrl.u32 2131351028, %v3708
        %v3715 = vor.u32 %v3713, %v3714
        %v3716 = vshll.u32 2131351028, %v3707
        %v3717 = vshrl.u32 2102212464, %v3708
        %v3718 = vor.u32 %v3716, %v3717
        %v3719 = vshll.u32 2102212464, %v3707
        %v3720 = vshrl.u32 920167782, %v3708
        %v3721 = vor.u32 %v3719, %v3720
        %v3722 = vshll.u32 920167782, %v3707
        %v3723 = vshrl.u32 1326507024, %v3708
        %v3724 = vor.u32 %v3722, %v3723
        %vm3725 = vcmp.lt.s32.totalorder %v3706, 1
        %vm3726 = vcmp.lt.s32.totalorder %v3706, 2
        %vm3727 = vcmp.lt.s32.totalorder %v3706, 3
        %vm3728 = vcmp.lt.s32.totalorder %v3706, 4
        %v3729 = vsel %vm3725, %v3709, %v3712
        %v3730 = vsel %vm3728, %v3718, 2102212464
        %v3731 = vsel %vm3727, %v3715, %v3730
        %v3732 = vsel %vm3726, %v3729, %v3731
        %v3733 = vsel %vm3725, %v3712, %v3715
        %v3734 = vsel %vm3728, %v3721, 920167782
        %v3735 = vsel %vm3727, %v3718, %v3734
        %v3736 = vsel %vm3726, %v3733, %v3735
        %v3737 = vsel %vm3725, %v3715, %v3718
        %v3738 = vsel %vm3728, %v3724, 1326507024
        %v3739 = vsel %vm3727, %v3721, %v3738
        %v3740 = vsel %vm3726, %v3737, %v3739
        %v3741 = vshll.u32 %v3701, 8
        %v3742 = vmul.u32.u64.compose %v3741, %v3740
        %v3743 = vextract.low.u32 %v3742
        %v3744 = vextract.high.u32 %v3742
        %v3745 = vmul.u32.u64.compose %v3741, %v3736
        %v3746 = vextract.low.u32 %v3745
        %v3747 = vextract.high.u32 %v3745
        %v3748 = vmul.u32 %v3741, %v3732
        %v3749 = vadd.s32 %v3744, %v3746
        %vm3750 = vc.u32 %v3744, %v3746
        %v3751 = vadd.s32 %v3747, 1
        %v3752 = vsel %vm3750, %v3751, %v3747
        %v3753 = vadd.s32 %v3748, %v3752
        %v3754 = vadd.s32 %v3753, 536870912
        %v3755 = vshrl.u32 %v3754, 30
        %v3756 = vshll.u32 %v3755, 30
        %v3757 = vsub.s32 %v3753, %v3756
        %vm3758 = vcmp.lt.s32.totalorder %v3757, 0
        %v3759 = vsub.s32 0, %v3757
        %v3760 = vsel %vm3758, %v3759, %v3757
        %v3761 = vclz %v3760
        %v3762 = vsub.s32 %v3761, 2
        %vm3763 = vcmp.gt.s32.totalorder 0, %v3762
        %v3764 = vsel %vm3763, 0, %v3762
        %v3765 = vsub.s32 32, %v3764
        %v3766 = vshll.u32 %v3757, %v3764
        %v3767 = vshrl.u32 %v3749, %v3765
        %v3768 = vor.u32 %v3766, %v3767
        %v3769 = vsub.s32 4294967266, %v3764
        %v3770 = vadd.s32 %v3769, 127
        %v3771 = vshll.u32 %v3770, 23
        %v3772 = vor.u32 4788187, %v3771
        %v3773 = vand.u32 2147483647, %v3772
        %v3775 = vcvt.s32.f32 %v3768
        %v3776 = vmul.f32 %v3775, %v3773
        %v3777 = vxor.u32 %v3776, 2147483648
        %v3778 = vsel %vm3695, %v3777, %v3776
        %v3779 = vsub.s32 4, %v3755
        %v3780 = vsel %vm3695, %v3779, %v3755
        %v3781 = vsel %vm3694, %v3352, %v3778
        %v3782 = vsel %vm3694, 0, %v3780
        %v3783 = vcosq.f32.pop %v3781
        %v3784 = vsinq.f32.pop %v3781
        %vm3785 = vweird.f32 %v3352
        %v3786 = vadd.s32 %v3782, 3
        %v3787 = vand.u32 %v3786, 3
        %vm3788 = vcmp.lt.s32.totalorder %v3787, 2
        %vm3789 = vcmp.eq.s32.totalorder %v3787, 0
        %v3790 = vxor.u32 %v3784, 2147483648
        %v3791 = vsel %vm3789, %v3783, %v3790
        %vm3792 = vcmp.eq.s32.totalorder %v3787, 2
        %v3793 = vxor.u32 %v3783, 2147483648
        %v3794 = vsel %vm3792, %v3793, %v3784
        %v3795 = vsel %vm3788, %v3791, %v3794
        %v3796 = vsel %vm3785, nan, %v3795
        %v3797 = vand.u32 2147483647, %v3353
        %vm3798 = vcmp.le.f32.partialorder %v3797, 0.7853982
        %vm3799 = vcmp.lt.s32.totalorder %v3353, 0
        %v3800 = vand.u32 %v3353, 2139095040
        %v3801 = vshrl.u32 %v3800, 23
        %v3802 = vsub.s32 %v3801, 127
        %v3803 = vand.u32 2147483647, %v3353
        %v3804 = vand.u32 %v3803, 8388607
        %v3805 = vor.u32 %v3804, 8388608
        %v3806 = vsub.s32 0, %v3805
        %v3807 = vadd.s32 %v3802, 1
        %vm3808 = vcmp.gt.s32.totalorder %v3807, 0
        %v3809 = vsel %vm3808, %v3807, 0
        %v3810 = vshrl.u32 %v3809, 5
        %v3811 = vand.u32 %v3809, 31
        %v3812 = vsub.s32 32, %v3811
        %v3813 = vshrl.u32 683565275, %v3812
        %v3814 = vshll.u32 683565275, %v3811
        %v3815 = vshrl.u32 2475754826, %v3812
        %v3816 = vor.u32 %v3814, %v3815
        %v3817 = vshll.u32 2475754826, %v3811
        %v3818 = vshrl.u32 2131351028, %v3812
        %v3819 = vor.u32 %v3817, %v3818
        %v3820 = vshll.u32 2131351028, %v3811
        %v3821 = vshrl.u32 2102212464, %v3812
        %v3822 = vor.u32 %v3820, %v3821
        %v3823 = vshll.u32 2102212464, %v3811
        %v3824 = vshrl.u32 920167782, %v3812
        %v3825 = vor.u32 %v3823, %v3824
        %v3826 = vshll.u32 920167782, %v3811
        %v3827 = vshrl.u32 1326507024, %v3812
        %v3828 = vor.u32 %v3826, %v3827
        %vm3829 = vcmp.lt.s32.totalorder %v3810, 1
        %vm3830 = vcmp.lt.s32.totalorder %v3810, 2
        %vm3831 = vcmp.lt.s32.totalorder %v3810, 3
        %vm3832 = vcmp.lt.s32.totalorder %v3810, 4
        %v3833 = vsel %vm3829, %v3813, %v3816
        %v3834 = vsel %vm3832, %v3822, 2102212464
        %v3835 = vsel %vm3831, %v3819, %v3834
        %v3836 = vsel %vm3830, %v3833, %v3835
        %v3837 = vsel %vm3829, %v3816, %v3819
        %v3838 = vsel %vm3832, %v3825, 920167782
        %v3839 = vsel %vm3831, %v3822, %v3838
        %v3840 = vsel %vm3830, %v3837, %v3839
        %v3841 = vsel %vm3829, %v3819, %v3822
        %v3842 = vsel %vm3832, %v3828, 1326507024
        %v3843 = vsel %vm3831, %v3825, %v3842
        %v3844 = vsel %vm3830, %v3841, %v3843
        %v3845 = vshll.u32 %v3805, 8
        %v3846 = vmul.u32.u64.compose %v3845, %v3844
        %v3847 = vextract.low.u32 %v3846
        %v3848 = vextract.high.u32 %v3846
        %v3849 = vmul.u32.u64.compose %v3845, %v3840
        %v3850 = vextract.low.u32 %v3849
        %v3851 = vextract.high.u32 %v3849
        %v3852 = vmul.u32 %v3845, %v3836
        %v3853 = vadd.s32 %v3848, %v3850
        %vm3854 = vc.u32 %v3848, %v3850
        %v3855 = vadd.s32 %v3851, 1
        %v3856 = vsel %vm3854, %v3855, %v3851
        %v3857 = vadd.s32 %v3852, %v3856
        %v3858 = vadd.s32 %v3857, 536870912
        %v3859 = vshrl.u32 %v3858, 30
        %v3860 = vshll.u32 %v3859, 30
        %v3861 = vsub.s32 %v3857, %v3860
        %vm3862 = vcmp.lt.s32.totalorder %v3861, 0
        %v3863 = vsub.s32 0, %v3861
        %v3864 = vsel %vm3862, %v3863, %v3861
        %v3865 = vclz %v3864
        %v3866 = vsub.s32 %v3865, 2
        %vm3867 = vcmp.gt.s32.totalorder 0, %v3866
        %v3868 = vsel %vm3867, 0, %v3866
        %v3869 = vsub.s32 32, %v3868
        %v3870 = vshll.u32 %v3861, %v3868
        %v3871 = vshrl.u32 %v3853, %v3869
        %v3872 = vor.u32 %v3870, %v3871
        %v3873 = vsub.s32 4294967266, %v3868
        %v3874 = vadd.s32 %v3873, 127
        %v3875 = vshll.u32 %v3874, 23
        %v3876 = vor.u32 4788187, %v3875
        %v3877 = vand.u32 2147483647, %v3876
        %v3879 = vcvt.s32.f32 %v3872
        %v3880 = vmul.f32 %v3879, %v3877
        %v3881 = vxor.u32 %v3880, 2147483648
        %v3882 = vsel %vm3799, %v3881, %v3880
        %v3883 = vsub.s32 4, %v3859
        %v3884 = vsel %vm3799, %v3883, %v3859
        %v3885 = vsel %vm3798, %v3353, %v3882
        %v3886 = vsel %vm3798, 0, %v3884
        %v3887 = vcosq.f32.pop %v3885
        %v3888 = vsinq.f32.pop %v3885
        %vm3889 = vweird.f32 %v3353
        %v3890 = vadd.s32 %v3886, 3
        %v3891 = vand.u32 %v3890, 3
        %vm3892 = vcmp.lt.s32.totalorder %v3891, 2
        %vm3893 = vcmp.eq.s32.totalorder %v3891, 0
        %v3894 = vxor.u32 %v3888, 2147483648
        %v3895 = vsel %vm3893, %v3887, %v3894
        %vm3896 = vcmp.eq.s32.totalorder %v3891, 2
        %v3897 = vxor.u32 %v3887, 2147483648
        %v3898 = vsel %vm3896, %v3897, %v3888
        %v3899 = vsel %vm3892, %v3895, %v3898
        %v3900 = vsel %vm3889, nan, %v3899
        %v3901 = vand.u32 2147483647, %v3354
        %vm3902 = vcmp.le.f32.partialorder %v3901, 0.7853982
        %vm3903 = vcmp.lt.s32.totalorder %v3354, 0
        %v3904 = vand.u32 %v3354, 2139095040
        %v3905 = vshrl.u32 %v3904, 23
        %v3906 = vsub.s32 %v3905, 127
        %v3907 = vand.u32 2147483647, %v3354
        %v3908 = vand.u32 %v3907, 8388607
        %v3909 = vor.u32 %v3908, 8388608
        %v3910 = vsub.s32 0, %v3909
        %v3911 = vadd.s32 %v3906, 1
        %vm3912 = vcmp.gt.s32.totalorder %v3911, 0
        %v3913 = vsel %vm3912, %v3911, 0
        %v3914 = vshrl.u32 %v3913, 5
        %v3915 = vand.u32 %v3913, 31
        %v3916 = vsub.s32 32, %v3915
        %v3917 = vshrl.u32 683565275, %v3916
        %v3918 = vshll.u32 683565275, %v3915
        %v3919 = vshrl.u32 2475754826, %v3916
        %v3920 = vor.u32 %v3918, %v3919
        %v3921 = vshll.u32 2475754826, %v3915
        %v3922 = vshrl.u32 2131351028, %v3916
        %v3923 = vor.u32 %v3921, %v3922
        %v3924 = vshll.u32 2131351028, %v3915
        %v3925 = vshrl.u32 2102212464, %v3916
        %v3926 = vor.u32 %v3924, %v3925
        %v3927 = vshll.u32 2102212464, %v3915
        %v3928 = vshrl.u32 920167782, %v3916
        %v3929 = vor.u32 %v3927, %v3928
        %v3930 = vshll.u32 920167782, %v3915
        %v3931 = vshrl.u32 1326507024, %v3916
        %v3932 = vor.u32 %v3930, %v3931
        %vm3933 = vcmp.lt.s32.totalorder %v3914, 1
        %vm3934 = vcmp.lt.s32.totalorder %v3914, 2
        %vm3935 = vcmp.lt.s32.totalorder %v3914, 3
        %vm3936 = vcmp.lt.s32.totalorder %v3914, 4
        %v3937 = vsel %vm3933, %v3917, %v3920
        %v3938 = vsel %vm3936, %v3926, 2102212464
        %v3939 = vsel %vm3935, %v3923, %v3938
        %v3940 = vsel %vm3934, %v3937, %v3939
        %v3941 = vsel %vm3933, %v3920, %v3923
        %v3942 = vsel %vm3936, %v3929, 920167782
        %v3943 = vsel %vm3935, %v3926, %v3942
        %v3944 = vsel %vm3934, %v3941, %v3943
        %v3945 = vsel %vm3933, %v3923, %v3926
        %v3946 = vsel %vm3936, %v3932, 1326507024
        %v3947 = vsel %vm3935, %v3929, %v3946
        %v3948 = vsel %vm3934, %v3945, %v3947
        %v3949 = vshll.u32 %v3909, 8
        %v3950 = vmul.u32.u64.compose %v3949, %v3948
        %v3951 = vextract.low.u32 %v3950
        %v3952 = vextract.high.u32 %v3950
        %v3953 = vmul.u32.u64.compose %v3949, %v3944
        %v3954 = vextract.low.u32 %v3953
        %v3955 = vextract.high.u32 %v3953
        %v3956 = vmul.u32 %v3949, %v3940
        %v3957 = vadd.s32 %v3952, %v3954
        %vm3958 = vc.u32 %v3952, %v3954
        %v3959 = vadd.s32 %v3955, 1
        %v3960 = vsel %vm3958, %v3959, %v3955
        %v3961 = vadd.s32 %v3956, %v3960
        %v3962 = vadd.s32 %v3961, 536870912
        %v3963 = vshrl.u32 %v3962, 30
        %v3964 = vshll.u32 %v3963, 30
        %v3965 = vsub.s32 %v3961, %v3964
        %vm3966 = vcmp.lt.s32.totalorder %v3965, 0
        %v3967 = vsub.s32 0, %v3965
        %v3968 = vsel %vm3966, %v3967, %v3965
        %v3969 = vclz %v3968
        %v3970 = vsub.s32 %v3969, 2
        %vm3971 = vcmp.gt.s32.totalorder 0, %v3970
        %v3972 = vsel %vm3971, 0, %v3970
        %v3973 = vsub.s32 32, %v3972
        %v3974 = vshll.u32 %v3965, %v3972
        %v3975 = vshrl.u32 %v3957, %v3973
        %v3976 = vor.u32 %v3974, %v3975
        %v3977 = vsub.s32 4294967266, %v3972
        %v3978 = vadd.s32 %v3977, 127
        %v3979 = vshll.u32 %v3978, 23
        %v3980 = vor.u32 4788187, %v3979
        %v3981 = vand.u32 2147483647, %v3980
        %v3983 = vcvt.s32.f32 %v3976
        %v3984 = vmul.f32 %v3983, %v3981
        %v3985 = vxor.u32 %v3984, 2147483648
        %v3986 = vsel %vm3903, %v3985, %v3984
        %v3987 = vsub.s32 4, %v3963
        %v3988 = vsel %vm3903, %v3987, %v3963
        %v3989 = vsel %vm3902, %v3354, %v3986
        %v3990 = vsel %vm3902, 0, %v3988
        %v3991 = vcosq.f32.pop %v3989
        %v3992 = vsinq.f32.pop %v3989
        %vm3993 = vweird.f32 %v3354
        %v3994 = vadd.s32 %v3990, 3
        %v3995 = vand.u32 %v3994, 3
        %vm3996 = vcmp.lt.s32.totalorder %v3995, 2
        %vm3997 = vcmp.eq.s32.totalorder %v3995, 0
        %v3998 = vxor.u32 %v3992, 2147483648
        %v3999 = vsel %vm3997, %v3991, %v3998
        %vm4000 = vcmp.eq.s32.totalorder %v3995, 2
        %v4001 = vxor.u32 %v3991, 2147483648
        %v4002 = vsel %vm4000, %v4001, %v3992
        %v4003 = vsel %vm3996, %v3999, %v4002
        %v4004 = vsel %vm3993, nan, %v4003
        %v4005 = vand.u32 2147483647, %v3355
        %vm4006 = vcmp.le.f32.partialorder %v4005, 0.7853982
        %vm4007 = vcmp.lt.s32.totalorder %v3355, 0
        %v4008 = vand.u32 %v3355, 2139095040
        %v4009 = vshrl.u32 %v4008, 23
        %v4010 = vsub.s32 %v4009, 127
        %v4011 = vand.u32 2147483647, %v3355
        %v4012 = vand.u32 %v4011, 8388607
        %v4013 = vor.u32 %v4012, 8388608
        %v4014 = vsub.s32 0, %v4013
        %v4015 = vadd.s32 %v4010, 1
        %vm4016 = vcmp.gt.s32.totalorder %v4015, 0
        %v4017 = vsel %vm4016, %v4015, 0
        %v4018 = vshrl.u32 %v4017, 5
        %v4019 = vand.u32 %v4017, 31
        %v4020 = vsub.s32 32, %v4019
        %v4021 = vshrl.u32 683565275, %v4020
        %v4022 = vshll.u32 683565275, %v4019
        %v4023 = vshrl.u32 2475754826, %v4020
        %v4024 = vor.u32 %v4022, %v4023
        %v4025 = vshll.u32 2475754826, %v4019
        %v4026 = vshrl.u32 2131351028, %v4020
        %v4027 = vor.u32 %v4025, %v4026
        %v4028 = vshll.u32 2131351028, %v4019
        %v4029 = vshrl.u32 2102212464, %v4020
        %v4030 = vor.u32 %v4028, %v4029
        %v4031 = vshll.u32 2102212464, %v4019
        %v4032 = vshrl.u32 920167782, %v4020
        %v4033 = vor.u32 %v4031, %v4032
        %v4034 = vshll.u32 920167782, %v4019
        %v4035 = vshrl.u32 1326507024, %v4020
        %v4036 = vor.u32 %v4034, %v4035
        %vm4037 = vcmp.lt.s32.totalorder %v4018, 1
        %vm4038 = vcmp.lt.s32.totalorder %v4018, 2
        %vm4039 = vcmp.lt.s32.totalorder %v4018, 3
        %vm4040 = vcmp.lt.s32.totalorder %v4018, 4
        %v4041 = vsel %vm4037, %v4021, %v4024
        %v4042 = vsel %vm4040, %v4030, 2102212464
        %v4043 = vsel %vm4039, %v4027, %v4042
        %v4044 = vsel %vm4038, %v4041, %v4043
        %v4045 = vsel %vm4037, %v4024, %v4027
        %v4046 = vsel %vm4040, %v4033, 920167782
        %v4047 = vsel %vm4039, %v4030, %v4046
        %v4048 = vsel %vm4038, %v4045, %v4047
        %v4049 = vsel %vm4037, %v4027, %v4030
        %v4050 = vsel %vm4040, %v4036, 1326507024
        %v4051 = vsel %vm4039, %v4033, %v4050
        %v4052 = vsel %vm4038, %v4049, %v4051
        %v4053 = vshll.u32 %v4013, 8
        %v4054 = vmul.u32.u64.compose %v4053, %v4052
        %v4055 = vextract.low.u32 %v4054
        %v4056 = vextract.high.u32 %v4054
        %v4057 = vmul.u32.u64.compose %v4053, %v4048
        %v4058 = vextract.low.u32 %v4057
        %v4059 = vextract.high.u32 %v4057
        %v4060 = vmul.u32 %v4053, %v4044
        %v4061 = vadd.s32 %v4056, %v4058
        %vm4062 = vc.u32 %v4056, %v4058
        %v4063 = vadd.s32 %v4059, 1
        %v4064 = vsel %vm4062, %v4063, %v4059
        %v4065 = vadd.s32 %v4060, %v4064
        %v4066 = vadd.s32 %v4065, 536870912
        %v4067 = vshrl.u32 %v4066, 30
        %v4068 = vshll.u32 %v4067, 30
        %v4069 = vsub.s32 %v4065, %v4068
        %vm4070 = vcmp.lt.s32.totalorder %v4069, 0
        %v4071 = vsub.s32 0, %v4069
        %v4072 = vsel %vm4070, %v4071, %v4069
        %v4073 = vclz %v4072
        %v4074 = vsub.s32 %v4073, 2
        %vm4075 = vcmp.gt.s32.totalorder 0, %v4074
        %v4076 = vsel %vm4075, 0, %v4074
        %v4077 = vsub.s32 32, %v4076
        %v4078 = vshll.u32 %v4069, %v4076
        %v4079 = vshrl.u32 %v4061, %v4077
        %v4080 = vor.u32 %v4078, %v4079
        %v4081 = vsub.s32 4294967266, %v4076
        %v4082 = vadd.s32 %v4081, 127
        %v4083 = vshll.u32 %v4082, 23
        %v4084 = vor.u32 4788187, %v4083
        %v4085 = vand.u32 2147483647, %v4084
        %v4087 = vcvt.s32.f32 %v4080
        %v4088 = vmul.f32 %v4087, %v4085
        %v4089 = vxor.u32 %v4088, 2147483648
        %v4090 = vsel %vm4007, %v4089, %v4088
        %v4091 = vsub.s32 4, %v4067
        %v4092 = vsel %vm4007, %v4091, %v4067
        %v4093 = vsel %vm4006, %v3355, %v4090
        %v4094 = vsel %vm4006, 0, %v4092
        %v4095 = vcosq.f32.pop %v4093
        %v4096 = vsinq.f32.pop %v4093
        %vm4097 = vweird.f32 %v3355
        %v4098 = vadd.s32 %v4094, 3
        %v4099 = vand.u32 %v4098, 3
        %vm4100 = vcmp.lt.s32.totalorder %v4099, 2
        %vm4101 = vcmp.eq.s32.totalorder %v4099, 0
        %v4102 = vxor.u32 %v4096, 2147483648
        %v4103 = vsel %vm4101, %v4095, %v4102
        %vm4104 = vcmp.eq.s32.totalorder %v4099, 2
        %v4105 = vxor.u32 %v4095, 2147483648
        %v4106 = vsel %vm4104, %v4105, %v4096
        %v4107 = vsel %vm4100, %v4103, %v4106
        %v4108 = vsel %vm4097, nan, %v4107
        %v4109 = vand.u32 2147483647, %v3356
        %vm4110 = vcmp.le.f32.partialorder %v4109, 0.7853982
        %vm4111 = vcmp.lt.s32.totalorder %v3356, 0
        %v4112 = vand.u32 %v3356, 2139095040
        %v4113 = vshrl.u32 %v4112, 23
        %v4114 = vsub.s32 %v4113, 127
        %v4115 = vand.u32 2147483647, %v3356
        %v4116 = vand.u32 %v4115, 8388607
        %v4117 = vor.u32 %v4116, 8388608
        %v4118 = vsub.s32 0, %v4117
        %v4119 = vadd.s32 %v4114, 1
        %vm4120 = vcmp.gt.s32.totalorder %v4119, 0
        %v4121 = vsel %vm4120, %v4119, 0
        %v4122 = vshrl.u32 %v4121, 5
        %v4123 = vand.u32 %v4121, 31
        %v4124 = vsub.s32 32, %v4123
        %v4125 = vshrl.u32 683565275, %v4124
        %v4126 = vshll.u32 683565275, %v4123
        %v4127 = vshrl.u32 2475754826, %v4124
        %v4128 = vor.u32 %v4126, %v4127
        %v4129 = vshll.u32 2475754826, %v4123
        %v4130 = vshrl.u32 2131351028, %v4124
        %v4131 = vor.u32 %v4129, %v4130
        %v4132 = vshll.u32 2131351028, %v4123
        %v4133 = vshrl.u32 2102212464, %v4124
        %v4134 = vor.u32 %v4132, %v4133
        %v4135 = vshll.u32 2102212464, %v4123
        %v4136 = vshrl.u32 920167782, %v4124
        %v4137 = vor.u32 %v4135, %v4136
        %v4138 = vshll.u32 920167782, %v4123
        %v4139 = vshrl.u32 1326507024, %v4124
        %v4140 = vor.u32 %v4138, %v4139
        %vm4141 = vcmp.lt.s32.totalorder %v4122, 1
        %vm4142 = vcmp.lt.s32.totalorder %v4122, 2
        %vm4143 = vcmp.lt.s32.totalorder %v4122, 3
        %vm4144 = vcmp.lt.s32.totalorder %v4122, 4
        %v4145 = vsel %vm4141, %v4125, %v4128
        %v4146 = vsel %vm4144, %v4134, 2102212464
        %v4147 = vsel %vm4143, %v4131, %v4146
        %v4148 = vsel %vm4142, %v4145, %v4147
        %v4149 = vsel %vm4141, %v4128, %v4131
        %v4150 = vsel %vm4144, %v4137, 920167782
        %v4151 = vsel %vm4143, %v4134, %v4150
        %v4152 = vsel %vm4142, %v4149, %v4151
        %v4153 = vsel %vm4141, %v4131, %v4134
        %v4154 = vsel %vm4144, %v4140, 1326507024
        %v4155 = vsel %vm4143, %v4137, %v4154
        %v4156 = vsel %vm4142, %v4153, %v4155
        %v4157 = vshll.u32 %v4117, 8
        %v4158 = vmul.u32.u64.compose %v4157, %v4156
        %v4159 = vextract.low.u32 %v4158
        %v4160 = vextract.high.u32 %v4158
        %v4161 = vmul.u32.u64.compose %v4157, %v4152
        %v4162 = vextract.low.u32 %v4161
        %v4163 = vextract.high.u32 %v4161
        %v4164 = vmul.u32 %v4157, %v4148
        %v4165 = vadd.s32 %v4160, %v4162
        %vm4166 = vc.u32 %v4160, %v4162
        %v4167 = vadd.s32 %v4163, 1
        %v4168 = vsel %vm4166, %v4167, %v4163
        %v4169 = vadd.s32 %v4164, %v4168
        %v4170 = vadd.s32 %v4169, 536870912
        %v4171 = vshrl.u32 %v4170, 30
        %v4172 = vshll.u32 %v4171, 30
        %v4173 = vsub.s32 %v4169, %v4172
        %vm4174 = vcmp.lt.s32.totalorder %v4173, 0
        %v4175 = vsub.s32 0, %v4173
        %v4176 = vsel %vm4174, %v4175, %v4173
        %v4177 = vclz %v4176
        %v4178 = vsub.s32 %v4177, 2
        %vm4179 = vcmp.gt.s32.totalorder 0, %v4178
        %v4180 = vsel %vm4179, 0, %v4178
        %v4181 = vsub.s32 32, %v4180
        %v4182 = vshll.u32 %v4173, %v4180
        %v4183 = vshrl.u32 %v4165, %v4181
        %v4184 = vor.u32 %v4182, %v4183
        %v4185 = vsub.s32 4294967266, %v4180
        %v4186 = vadd.s32 %v4185, 127
        %v4187 = vshll.u32 %v4186, 23
        %v4188 = vor.u32 4788187, %v4187
        %v4189 = vand.u32 2147483647, %v4188
        %v4191 = vcvt.s32.f32 %v4184
        %v4192 = vmul.f32 %v4191, %v4189
        %v4193 = vxor.u32 %v4192, 2147483648
        %v4194 = vsel %vm4111, %v4193, %v4192
        %v4195 = vsub.s32 4, %v4171
        %v4196 = vsel %vm4111, %v4195, %v4171
        %v4197 = vsel %vm4110, %v3356, %v4194
        %v4198 = vsel %vm4110, 0, %v4196
        %v4199 = vcosq.f32.pop %v4197
        %v4200 = vsinq.f32.pop %v4197
        %vm4201 = vweird.f32 %v3356
        %v4202 = vadd.s32 %v4198, 3
        %v4203 = vand.u32 %v4202, 3
        %vm4204 = vcmp.lt.s32.totalorder %v4203, 2
        %vm4205 = vcmp.eq.s32.totalorder %v4203, 0
        %v4206 = vxor.u32 %v4200, 2147483648
        %v4207 = vsel %vm4205, %v4199, %v4206
        %vm4208 = vcmp.eq.s32.totalorder %v4203, 2
        %v4209 = vxor.u32 %v4199, 2147483648
        %v4210 = vsel %vm4208, %v4209, %v4200
        %v4211 = vsel %vm4204, %v4207, %v4210
        %v4212 = vsel %vm4201, nan, %v4211
        %v4213 = vand.u32 2147483647, %v3357
        %vm4214 = vcmp.le.f32.partialorder %v4213, 0.7853982
        %vm4215 = vcmp.lt.s32.totalorder %v3357, 0
        %v4216 = vand.u32 %v3357, 2139095040
        %v4217 = vshrl.u32 %v4216, 23
        %v4218 = vsub.s32 %v4217, 127
        %v4219 = vand.u32 2147483647, %v3357
        %v4220 = vand.u32 %v4219, 8388607
        %v4221 = vor.u32 %v4220, 8388608
        %v4222 = vsub.s32 0, %v4221
        %v4223 = vadd.s32 %v4218, 1
        %vm4224 = vcmp.gt.s32.totalorder %v4223, 0
        %v4225 = vsel %vm4224, %v4223, 0
        %v4226 = vshrl.u32 %v4225, 5
        %v4227 = vand.u32 %v4225, 31
        %v4228 = vsub.s32 32, %v4227
        %v4229 = vshrl.u32 683565275, %v4228
        %v4230 = vshll.u32 683565275, %v4227
        %v4231 = vshrl.u32 2475754826, %v4228
        %v4232 = vor.u32 %v4230, %v4231
        %v4233 = vshll.u32 2475754826, %v4227
        %v4234 = vshrl.u32 2131351028, %v4228
        %v4235 = vor.u32 %v4233, %v4234
        %v4236 = vshll.u32 2131351028, %v4227
        %v4237 = vshrl.u32 2102212464, %v4228
        %v4238 = vor.u32 %v4236, %v4237
        %v4239 = vshll.u32 2102212464, %v4227
        %v4240 = vshrl.u32 920167782, %v4228
        %v4241 = vor.u32 %v4239, %v4240
        %v4242 = vshll.u32 920167782, %v4227
        %v4243 = vshrl.u32 1326507024, %v4228
        %v4244 = vor.u32 %v4242, %v4243
        %vm4245 = vcmp.lt.s32.totalorder %v4226, 1
        %vm4246 = vcmp.lt.s32.totalorder %v4226, 2
        %vm4247 = vcmp.lt.s32.totalorder %v4226, 3
        %vm4248 = vcmp.lt.s32.totalorder %v4226, 4
        %v4249 = vsel %vm4245, %v4229, %v4232
        %v4250 = vsel %vm4248, %v4238, 2102212464
        %v4251 = vsel %vm4247, %v4235, %v4250
        %v4252 = vsel %vm4246, %v4249, %v4251
        %v4253 = vsel %vm4245, %v4232, %v4235
        %v4254 = vsel %vm4248, %v4241, 920167782
        %v4255 = vsel %vm4247, %v4238, %v4254
        %v4256 = vsel %vm4246, %v4253, %v4255
        %v4257 = vsel %vm4245, %v4235, %v4238
        %v4258 = vsel %vm4248, %v4244, 1326507024
        %v4259 = vsel %vm4247, %v4241, %v4258
        %v4260 = vsel %vm4246, %v4257, %v4259
        %v4261 = vshll.u32 %v4221, 8
        %v4262 = vmul.u32.u64.compose %v4261, %v4260
        %v4263 = vextract.low.u32 %v4262
        %v4264 = vextract.high.u32 %v4262
        %v4265 = vmul.u32.u64.compose %v4261, %v4256
        %v4266 = vextract.low.u32 %v4265
        %v4267 = vextract.high.u32 %v4265
        %v4268 = vmul.u32 %v4261, %v4252
        %v4269 = vadd.s32 %v4264, %v4266
        %vm4270 = vc.u32 %v4264, %v4266
        %v4271 = vadd.s32 %v4267, 1
        %v4272 = vsel %vm4270, %v4271, %v4267
        %v4273 = vadd.s32 %v4268, %v4272
        %v4274 = vadd.s32 %v4273, 536870912
        %v4275 = vshrl.u32 %v4274, 30
        %v4276 = vshll.u32 %v4275, 30
        %v4277 = vsub.s32 %v4273, %v4276
        %vm4278 = vcmp.lt.s32.totalorder %v4277, 0
        %v4279 = vsub.s32 0, %v4277
        %v4280 = vsel %vm4278, %v4279, %v4277
        %v4281 = vclz %v4280
        %v4282 = vsub.s32 %v4281, 2
        %vm4283 = vcmp.gt.s32.totalorder 0, %v4282
        %v4284 = vsel %vm4283, 0, %v4282
        %v4285 = vsub.s32 32, %v4284
        %v4286 = vshll.u32 %v4277, %v4284
        %v4287 = vshrl.u32 %v4269, %v4285
        %v4288 = vor.u32 %v4286, %v4287
        %v4289 = vsub.s32 4294967266, %v4284
        %v4290 = vadd.s32 %v4289, 127
        %v4291 = vshll.u32 %v4290, 23
        %v4292 = vor.u32 4788187, %v4291
        %v4293 = vand.u32 2147483647, %v4292
        %v4295 = vcvt.s32.f32 %v4288
        %v4296 = vmul.f32 %v4295, %v4293
        %v4297 = vxor.u32 %v4296, 2147483648
        %v4298 = vsel %vm4215, %v4297, %v4296
        %v4299 = vsub.s32 4, %v4275
        %v4300 = vsel %vm4215, %v4299, %v4275
        %v4301 = vsel %vm4214, %v3357, %v4298
        %v4302 = vsel %vm4214, 0, %v4300
        %v4303 = vcosq.f32.pop %v4301
        %v4304 = vsinq.f32.pop %v4301
        %vm4305 = vweird.f32 %v3357
        %v4306 = vadd.s32 %v4302, 3
        %v4307 = vand.u32 %v4306, 3
        %vm4308 = vcmp.lt.s32.totalorder %v4307, 2
        %vm4309 = vcmp.eq.s32.totalorder %v4307, 0
        %v4310 = vxor.u32 %v4304, 2147483648
        %v4311 = vsel %vm4309, %v4303, %v4310
        %vm4312 = vcmp.eq.s32.totalorder %v4307, 2
        %v4313 = vxor.u32 %v4303, 2147483648
        %v4314 = vsel %vm4312, %v4313, %v4304
        %v4315 = vsel %vm4308, %v4311, %v4314
        %v4316 = vsel %vm4305, nan, %v4315
        %v4317 = vand.u32 2147483647, %v3358
        %vm4318 = vcmp.le.f32.partialorder %v4317, 0.7853982
        %vm4319 = vcmp.lt.s32.totalorder %v3358, 0
        %v4320 = vand.u32 %v3358, 2139095040
        %v4321 = vshrl.u32 %v4320, 23
        %v4322 = vsub.s32 %v4321, 127
        %v4323 = vand.u32 2147483647, %v3358
        %v4324 = vand.u32 %v4323, 8388607
        %v4325 = vor.u32 %v4324, 8388608
        %v4326 = vsub.s32 0, %v4325
        %v4327 = vadd.s32 %v4322, 1
        %vm4328 = vcmp.gt.s32.totalorder %v4327, 0
        %v4329 = vsel %vm4328, %v4327, 0
        %v4330 = vshrl.u32 %v4329, 5
        %v4331 = vand.u32 %v4329, 31
        %v4332 = vsub.s32 32, %v4331
        %v4333 = vshrl.u32 683565275, %v4332
        %v4334 = vshll.u32 683565275, %v4331
        %v4335 = vshrl.u32 2475754826, %v4332
        %v4336 = vor.u32 %v4334, %v4335
        %v4337 = vshll.u32 2475754826, %v4331
        %v4338 = vshrl.u32 2131351028, %v4332
        %v4339 = vor.u32 %v4337, %v4338
        %v4340 = vshll.u32 2131351028, %v4331
        %v4341 = vshrl.u32 2102212464, %v4332
        %v4342 = vor.u32 %v4340, %v4341
        %v4343 = vshll.u32 2102212464, %v4331
        %v4344 = vshrl.u32 920167782, %v4332
        %v4345 = vor.u32 %v4343, %v4344
        %v4346 = vshll.u32 920167782, %v4331
        %v4347 = vshrl.u32 1326507024, %v4332
        %v4348 = vor.u32 %v4346, %v4347
        %vm4349 = vcmp.lt.s32.totalorder %v4330, 1
        %vm4350 = vcmp.lt.s32.totalorder %v4330, 2
        %vm4351 = vcmp.lt.s32.totalorder %v4330, 3
        %vm4352 = vcmp.lt.s32.totalorder %v4330, 4
        %v4353 = vsel %vm4349, %v4333, %v4336
        %v4354 = vsel %vm4352, %v4342, 2102212464
        %v4355 = vsel %vm4351, %v4339, %v4354
        %v4356 = vsel %vm4350, %v4353, %v4355
        %v4357 = vsel %vm4349, %v4336, %v4339
        %v4358 = vsel %vm4352, %v4345, 920167782
        %v4359 = vsel %vm4351, %v4342, %v4358
        %v4360 = vsel %vm4350, %v4357, %v4359
        %v4361 = vsel %vm4349, %v4339, %v4342
        %v4362 = vsel %vm4352, %v4348, 1326507024
        %v4363 = vsel %vm4351, %v4345, %v4362
        %v4364 = vsel %vm4350, %v4361, %v4363
        %v4365 = vshll.u32 %v4325, 8
        %v4366 = vmul.u32.u64.compose %v4365, %v4364
        %v4367 = vextract.low.u32 %v4366
        %v4368 = vextract.high.u32 %v4366
        %v4369 = vmul.u32.u64.compose %v4365, %v4360
        %v4370 = vextract.low.u32 %v4369
        %v4371 = vextract.high.u32 %v4369
        %v4372 = vmul.u32 %v4365, %v4356
        %v4373 = vadd.s32 %v4368, %v4370
        %vm4374 = vc.u32 %v4368, %v4370
        %v4375 = vadd.s32 %v4371, 1
        %v4376 = vsel %vm4374, %v4375, %v4371
        %v4377 = vadd.s32 %v4372, %v4376
        %v4378 = vadd.s32 %v4377, 536870912
        %v4379 = vshrl.u32 %v4378, 30
        %v4380 = vshll.u32 %v4379, 30
        %v4381 = vsub.s32 %v4377, %v4380
        %vm4382 = vcmp.lt.s32.totalorder %v4381, 0
        %v4383 = vsub.s32 0, %v4381
        %v4384 = vsel %vm4382, %v4383, %v4381
        %v4385 = vclz %v4384
        %v4386 = vsub.s32 %v4385, 2
        %vm4387 = vcmp.gt.s32.totalorder 0, %v4386
        %v4388 = vsel %vm4387, 0, %v4386
        %v4389 = vsub.s32 32, %v4388
        %v4390 = vshll.u32 %v4381, %v4388
        %v4391 = vshrl.u32 %v4373, %v4389
        %v4392 = vor.u32 %v4390, %v4391
        %v4393 = vsub.s32 4294967266, %v4388
        %v4394 = vadd.s32 %v4393, 127
        %v4395 = vshll.u32 %v4394, 23
        %v4396 = vor.u32 4788187, %v4395
        %v4397 = vand.u32 2147483647, %v4396
        %v4399 = vcvt.s32.f32 %v4392
        %v4400 = vmul.f32 %v4399, %v4397
        %v4401 = vxor.u32 %v4400, 2147483648
        %v4402 = vsel %vm4319, %v4401, %v4400
        %v4403 = vsub.s32 4, %v4379
        %v4404 = vsel %vm4319, %v4403, %v4379
        %v4405 = vsel %vm4318, %v3358, %v4402
        %v4406 = vsel %vm4318, 0, %v4404
        %v4407 = vcosq.f32.pop %v4405
        %v4408 = vsinq.f32.pop %v4405
        %vm4409 = vweird.f32 %v3358
        %v4410 = vadd.s32 %v4406, 3
        %v4411 = vand.u32 %v4410, 3
        %vm4412 = vcmp.lt.s32.totalorder %v4411, 2
        %vm4413 = vcmp.eq.s32.totalorder %v4411, 0
        %v4414 = vxor.u32 %v4408, 2147483648
        %v4415 = vsel %vm4413, %v4407, %v4414
        %vm4416 = vcmp.eq.s32.totalorder %v4411, 2
        %v4417 = vxor.u32 %v4407, 2147483648
        %v4418 = vsel %vm4416, %v4417, %v4408
        %v4419 = vsel %vm4412, %v4415, %v4418
        %v4420 = vsel %vm4409, nan, %v4419
        %v4421 = vand.u32 2147483647, %v3359
        %vm4422 = vcmp.le.f32.partialorder %v4421, 0.7853982
        %vm4423 = vcmp.lt.s32.totalorder %v3359, 0
        %v4424 = vand.u32 %v3359, 2139095040
        %v4425 = vshrl.u32 %v4424, 23
        %v4426 = vsub.s32 %v4425, 127
        %v4427 = vand.u32 2147483647, %v3359
        %v4428 = vand.u32 %v4427, 8388607
        %v4429 = vor.u32 %v4428, 8388608
        %v4430 = vsub.s32 0, %v4429
        %v4431 = vadd.s32 %v4426, 1
        %vm4432 = vcmp.gt.s32.totalorder %v4431, 0
        %v4433 = vsel %vm4432, %v4431, 0
        %v4434 = vshrl.u32 %v4433, 5
        %v4435 = vand.u32 %v4433, 31
        %v4436 = vsub.s32 32, %v4435
        %v4437 = vshrl.u32 683565275, %v4436
        %v4438 = vshll.u32 683565275, %v4435
        %v4439 = vshrl.u32 2475754826, %v4436
        %v4440 = vor.u32 %v4438, %v4439
        %v4441 = vshll.u32 2475754826, %v4435
        %v4442 = vshrl.u32 2131351028, %v4436
        %v4443 = vor.u32 %v4441, %v4442
        %v4444 = vshll.u32 2131351028, %v4435
        %v4445 = vshrl.u32 2102212464, %v4436
        %v4446 = vor.u32 %v4444, %v4445
        %v4447 = vshll.u32 2102212464, %v4435
        %v4448 = vshrl.u32 920167782, %v4436
        %v4449 = vor.u32 %v4447, %v4448
        %v4450 = vshll.u32 920167782, %v4435
        %v4451 = vshrl.u32 1326507024, %v4436
        %v4452 = vor.u32 %v4450, %v4451
        %vm4453 = vcmp.lt.s32.totalorder %v4434, 1
        %vm4454 = vcmp.lt.s32.totalorder %v4434, 2
        %vm4455 = vcmp.lt.s32.totalorder %v4434, 3
        %vm4456 = vcmp.lt.s32.totalorder %v4434, 4
        %v4457 = vsel %vm4453, %v4437, %v4440
        %v4458 = vsel %vm4456, %v4446, 2102212464
        %v4459 = vsel %vm4455, %v4443, %v4458
        %v4460 = vsel %vm4454, %v4457, %v4459
        %v4461 = vsel %vm4453, %v4440, %v4443
        %v4462 = vsel %vm4456, %v4449, 920167782
        %v4463 = vsel %vm4455, %v4446, %v4462
        %v4464 = vsel %vm4454, %v4461, %v4463
        %v4465 = vsel %vm4453, %v4443, %v4446
        %v4466 = vsel %vm4456, %v4452, 1326507024
        %v4467 = vsel %vm4455, %v4449, %v4466
        %v4468 = vsel %vm4454, %v4465, %v4467
        %v4469 = vshll.u32 %v4429, 8
        %v4470 = vmul.u32.u64.compose %v4469, %v4468
        %v4471 = vextract.low.u32 %v4470
        %v4472 = vextract.high.u32 %v4470
        %v4473 = vmul.u32.u64.compose %v4469, %v4464
        %v4474 = vextract.low.u32 %v4473
        %v4475 = vextract.high.u32 %v4473
        %v4476 = vmul.u32 %v4469, %v4460
        %v4477 = vadd.s32 %v4472, %v4474
        %vm4478 = vc.u32 %v4472, %v4474
        %v4479 = vadd.s32 %v4475, 1
        %v4480 = vsel %vm4478, %v4479, %v4475
        %v4481 = vadd.s32 %v4476, %v4480
        %v4482 = vadd.s32 %v4481, 536870912
        %v4483 = vshrl.u32 %v4482, 30
        %v4484 = vshll.u32 %v4483, 30
        %v4485 = vsub.s32 %v4481, %v4484
        %vm4486 = vcmp.lt.s32.totalorder %v4485, 0
        %v4487 = vsub.s32 0, %v4485
        %v4488 = vsel %vm4486, %v4487, %v4485
        %v4489 = vclz %v4488
        %v4490 = vsub.s32 %v4489, 2
        %vm4491 = vcmp.gt.s32.totalorder 0, %v4490
        %v4492 = vsel %vm4491, 0, %v4490
        %v4493 = vsub.s32 32, %v4492
        %v4494 = vshll.u32 %v4485, %v4492
        %v4495 = vshrl.u32 %v4477, %v4493
        %v4496 = vor.u32 %v4494, %v4495
        %v4497 = vsub.s32 4294967266, %v4492
        %v4498 = vadd.s32 %v4497, 127
        %v4499 = vshll.u32 %v4498, 23
        %v4500 = vor.u32 4788187, %v4499
        %v4501 = vand.u32 2147483647, %v4500
        %v4503 = vcvt.s32.f32 %v4496
        %v4504 = vmul.f32 %v4503, %v4501
        %v4505 = vxor.u32 %v4504, 2147483648
        %v4506 = vsel %vm4423, %v4505, %v4504
        %v4507 = vsub.s32 4, %v4483
        %v4508 = vsel %vm4423, %v4507, %v4483
        %v4509 = vsel %vm4422, %v3359, %v4506
        %v4510 = vsel %vm4422, 0, %v4508
        %v4511 = vcosq.f32.pop %v4509
        %v4512 = vsinq.f32.pop %v4509
        %vm4513 = vweird.f32 %v3359
        %v4514 = vadd.s32 %v4510, 3
        %v4515 = vand.u32 %v4514, 3
        %vm4516 = vcmp.lt.s32.totalorder %v4515, 2
        %vm4517 = vcmp.eq.s32.totalorder %v4515, 0
        %v4518 = vxor.u32 %v4512, 2147483648
        %v4519 = vsel %vm4517, %v4511, %v4518
        %vm4520 = vcmp.eq.s32.totalorder %v4515, 2
        %v4521 = vxor.u32 %v4511, 2147483648
        %v4522 = vsel %vm4520, %v4521, %v4512
        %v4523 = vsel %vm4516, %v4519, %v4522
        %v4524 = vsel %vm4513, nan, %v4523
        %v4525 = vand.u32 2147483647, %v3360
        %vm4526 = vcmp.le.f32.partialorder %v4525, 0.7853982
        %vm4527 = vcmp.lt.s32.totalorder %v3360, 0
        %v4528 = vand.u32 %v3360, 2139095040
        %v4529 = vshrl.u32 %v4528, 23
        %v4530 = vsub.s32 %v4529, 127
        %v4531 = vand.u32 2147483647, %v3360
        %v4532 = vand.u32 %v4531, 8388607
        %v4533 = vor.u32 %v4532, 8388608
        %v4534 = vsub.s32 0, %v4533
        %v4535 = vadd.s32 %v4530, 1
        %vm4536 = vcmp.gt.s32.totalorder %v4535, 0
        %v4537 = vsel %vm4536, %v4535, 0
        %v4538 = vshrl.u32 %v4537, 5
        %v4539 = vand.u32 %v4537, 31
        %v4540 = vsub.s32 32, %v4539
        %v4541 = vshrl.u32 683565275, %v4540
        %v4542 = vshll.u32 683565275, %v4539
        %v4543 = vshrl.u32 2475754826, %v4540
        %v4544 = vor.u32 %v4542, %v4543
        %v4545 = vshll.u32 2475754826, %v4539
        %v4546 = vshrl.u32 2131351028, %v4540
        %v4547 = vor.u32 %v4545, %v4546
        %v4548 = vshll.u32 2131351028, %v4539
        %v4549 = vshrl.u32 2102212464, %v4540
        %v4550 = vor.u32 %v4548, %v4549
        %v4551 = vshll.u32 2102212464, %v4539
        %v4552 = vshrl.u32 920167782, %v4540
        %v4553 = vor.u32 %v4551, %v4552
        %v4554 = vshll.u32 920167782, %v4539
        %v4555 = vshrl.u32 1326507024, %v4540
        %v4556 = vor.u32 %v4554, %v4555
        %vm4557 = vcmp.lt.s32.totalorder %v4538, 1
        %vm4558 = vcmp.lt.s32.totalorder %v4538, 2
        %vm4559 = vcmp.lt.s32.totalorder %v4538, 3
        %vm4560 = vcmp.lt.s32.totalorder %v4538, 4
        %v4561 = vsel %vm4557, %v4541, %v4544
        %v4562 = vsel %vm4560, %v4550, 2102212464
        %v4563 = vsel %vm4559, %v4547, %v4562
        %v4564 = vsel %vm4558, %v4561, %v4563
        %v4565 = vsel %vm4557, %v4544, %v4547
        %v4566 = vsel %vm4560, %v4553, 920167782
        %v4567 = vsel %vm4559, %v4550, %v4566
        %v4568 = vsel %vm4558, %v4565, %v4567
        %v4569 = vsel %vm4557, %v4547, %v4550
        %v4570 = vsel %vm4560, %v4556, 1326507024
        %v4571 = vsel %vm4559, %v4553, %v4570
        %v4572 = vsel %vm4558, %v4569, %v4571
        %v4573 = vshll.u32 %v4533, 8
        %v4574 = vmul.u32.u64.compose %v4573, %v4572
        %v4575 = vextract.low.u32 %v4574
        %v4576 = vextract.high.u32 %v4574
        %v4577 = vmul.u32.u64.compose %v4573, %v4568
        %v4578 = vextract.low.u32 %v4577
        %v4579 = vextract.high.u32 %v4577
        %v4580 = vmul.u32 %v4573, %v4564
        %v4581 = vadd.s32 %v4576, %v4578
        %vm4582 = vc.u32 %v4576, %v4578
        %v4583 = vadd.s32 %v4579, 1
        %v4584 = vsel %vm4582, %v4583, %v4579
        %v4585 = vadd.s32 %v4580, %v4584
        %v4586 = vadd.s32 %v4585, 536870912
        %v4587 = vshrl.u32 %v4586, 30
        %v4588 = vshll.u32 %v4587, 30
        %v4589 = vsub.s32 %v4585, %v4588
        %vm4590 = vcmp.lt.s32.totalorder %v4589, 0
        %v4591 = vsub.s32 0, %v4589
        %v4592 = vsel %vm4590, %v4591, %v4589
        %v4593 = vclz %v4592
        %v4594 = vsub.s32 %v4593, 2
        %vm4595 = vcmp.gt.s32.totalorder 0, %v4594
        %v4596 = vsel %vm4595, 0, %v4594
        %v4597 = vsub.s32 32, %v4596
        %v4598 = vshll.u32 %v4589, %v4596
        %v4599 = vshrl.u32 %v4581, %v4597
        %v4600 = vor.u32 %v4598, %v4599
        %v4601 = vsub.s32 4294967266, %v4596
        %v4602 = vadd.s32 %v4601, 127
        %v4603 = vshll.u32 %v4602, 23
        %v4604 = vor.u32 4788187, %v4603
        %v4605 = vand.u32 2147483647, %v4604
        %v4607 = vcvt.s32.f32 %v4600
        %v4608 = vmul.f32 %v4607, %v4605
        %v4609 = vxor.u32 %v4608, 2147483648
        %v4610 = vsel %vm4527, %v4609, %v4608
        %v4611 = vsub.s32 4, %v4587
        %v4612 = vsel %vm4527, %v4611, %v4587
        %v4613 = vsel %vm4526, %v3360, %v4610
        %v4614 = vsel %vm4526, 0, %v4612
        %v4615 = vcosq.f32.pop %v4613
        %v4616 = vsinq.f32.pop %v4613
        %vm4617 = vweird.f32 %v3360
        %v4618 = vadd.s32 %v4614, 3
        %v4619 = vand.u32 %v4618, 3
        %vm4620 = vcmp.lt.s32.totalorder %v4619, 2
        %vm4621 = vcmp.eq.s32.totalorder %v4619, 0
        %v4622 = vxor.u32 %v4616, 2147483648
        %v4623 = vsel %vm4621, %v4615, %v4622
        %vm4624 = vcmp.eq.s32.totalorder %v4619, 2
        %v4625 = vxor.u32 %v4615, 2147483648
        %v4626 = vsel %vm4624, %v4625, %v4616
        %v4627 = vsel %vm4620, %v4623, %v4626
        %v4628 = vsel %vm4617, nan, %v4627
        %v4629 = vand.u32 2147483647, %v3361
        %vm4630 = vcmp.le.f32.partialorder %v4629, 0.7853982
        %vm4631 = vcmp.lt.s32.totalorder %v3361, 0
        %v4632 = vand.u32 %v3361, 2139095040
        %v4633 = vshrl.u32 %v4632, 23
        %v4634 = vsub.s32 %v4633, 127
        %v4635 = vand.u32 2147483647, %v3361
        %v4636 = vand.u32 %v4635, 8388607
        %v4637 = vor.u32 %v4636, 8388608
        %v4638 = vsub.s32 0, %v4637
        %v4639 = vadd.s32 %v4634, 1
        %vm4640 = vcmp.gt.s32.totalorder %v4639, 0
        %v4641 = vsel %vm4640, %v4639, 0
        %v4642 = vshrl.u32 %v4641, 5
        %v4643 = vand.u32 %v4641, 31
        %v4644 = vsub.s32 32, %v4643
        %v4645 = vshrl.u32 683565275, %v4644
        %v4646 = vshll.u32 683565275, %v4643
        %v4647 = vshrl.u32 2475754826, %v4644
        %v4648 = vor.u32 %v4646, %v4647
        %v4649 = vshll.u32 2475754826, %v4643
        %v4650 = vshrl.u32 2131351028, %v4644
        %v4651 = vor.u32 %v4649, %v4650
        %v4652 = vshll.u32 2131351028, %v4643
        %v4653 = vshrl.u32 2102212464, %v4644
        %v4654 = vor.u32 %v4652, %v4653
        %v4655 = vshll.u32 2102212464, %v4643
        %v4656 = vshrl.u32 920167782, %v4644
        %v4657 = vor.u32 %v4655, %v4656
        %v4658 = vshll.u32 920167782, %v4643
        %v4659 = vshrl.u32 1326507024, %v4644
        %v4660 = vor.u32 %v4658, %v4659
        %vm4661 = vcmp.lt.s32.totalorder %v4642, 1
        %vm4662 = vcmp.lt.s32.totalorder %v4642, 2
        %vm4663 = vcmp.lt.s32.totalorder %v4642, 3
        %vm4664 = vcmp.lt.s32.totalorder %v4642, 4
        %v4665 = vsel %vm4661, %v4645, %v4648
        %v4666 = vsel %vm4664, %v4654, 2102212464
        %v4667 = vsel %vm4663, %v4651, %v4666
        %v4668 = vsel %vm4662, %v4665, %v4667
        %v4669 = vsel %vm4661, %v4648, %v4651
        %v4670 = vsel %vm4664, %v4657, 920167782
        %v4671 = vsel %vm4663, %v4654, %v4670
        %v4672 = vsel %vm4662, %v4669, %v4671
        %v4673 = vsel %vm4661, %v4651, %v4654
        %v4674 = vsel %vm4664, %v4660, 1326507024
        %v4675 = vsel %vm4663, %v4657, %v4674
        %v4676 = vsel %vm4662, %v4673, %v4675
        %v4677 = vshll.u32 %v4637, 8
        %v4678 = vmul.u32.u64.compose %v4677, %v4676
        %v4679 = vextract.low.u32 %v4678
        %v4680 = vextract.high.u32 %v4678
        %v4681 = vmul.u32.u64.compose %v4677, %v4672
        %v4682 = vextract.low.u32 %v4681
        %v4683 = vextract.high.u32 %v4681
        %v4684 = vmul.u32 %v4677, %v4668
        %v4685 = vadd.s32 %v4680, %v4682
        %vm4686 = vc.u32 %v4680, %v4682
        %v4687 = vadd.s32 %v4683, 1
        %v4688 = vsel %vm4686, %v4687, %v4683
        %v4689 = vadd.s32 %v4684, %v4688
        %v4690 = vadd.s32 %v4689, 536870912
        %v4691 = vshrl.u32 %v4690, 30
        %v4692 = vshll.u32 %v4691, 30
        %v4693 = vsub.s32 %v4689, %v4692
        %vm4694 = vcmp.lt.s32.totalorder %v4693, 0
        %v4695 = vsub.s32 0, %v4693
        %v4696 = vsel %vm4694, %v4695, %v4693
        %v4697 = vclz %v4696
        %v4698 = vsub.s32 %v4697, 2
        %vm4699 = vcmp.gt.s32.totalorder 0, %v4698
        %v4700 = vsel %vm4699, 0, %v4698
        %v4701 = vsub.s32 32, %v4700
        %v4702 = vshll.u32 %v4693, %v4700
        %v4703 = vshrl.u32 %v4685, %v4701
        %v4704 = vor.u32 %v4702, %v4703
        %v4705 = vsub.s32 4294967266, %v4700
        %v4706 = vadd.s32 %v4705, 127
        %v4707 = vshll.u32 %v4706, 23
        %v4708 = vor.u32 4788187, %v4707
        %v4709 = vand.u32 2147483647, %v4708
        %v4711 = vcvt.s32.f32 %v4704
        %v4712 = vmul.f32 %v4711, %v4709
        %v4713 = vxor.u32 %v4712, 2147483648
        %v4714 = vsel %vm4631, %v4713, %v4712
        %v4715 = vsub.s32 4, %v4691
        %v4716 = vsel %vm4631, %v4715, %v4691
        %v4717 = vsel %vm4630, %v3361, %v4714
        %v4718 = vsel %vm4630, 0, %v4716
        %v4719 = vcosq.f32.pop %v4717
        %v4720 = vsinq.f32.pop %v4717
        %vm4721 = vweird.f32 %v3361
        %v4722 = vadd.s32 %v4718, 3
        %v4723 = vand.u32 %v4722, 3
        %vm4724 = vcmp.lt.s32.totalorder %v4723, 2
        %vm4725 = vcmp.eq.s32.totalorder %v4723, 0
        %v4726 = vxor.u32 %v4720, 2147483648
        %v4727 = vsel %vm4725, %v4719, %v4726
        %vm4728 = vcmp.eq.s32.totalorder %v4723, 2
        %v4729 = vxor.u32 %v4719, 2147483648
        %v4730 = vsel %vm4728, %v4729, %v4720
        %v4731 = vsel %vm4724, %v4727, %v4730
        %v4732 = vsel %vm4721, nan, %v4731
        %v4733 = vand.u32 2147483647, %v3362
        %vm4734 = vcmp.le.f32.partialorder %v4733, 0.7853982
        %vm4735 = vcmp.lt.s32.totalorder %v3362, 0
        %v4736 = vand.u32 %v3362, 2139095040
        %v4737 = vshrl.u32 %v4736, 23
        %v4738 = vsub.s32 %v4737, 127
        %v4739 = vand.u32 2147483647, %v3362
        %v4740 = vand.u32 %v4739, 8388607
        %v4741 = vor.u32 %v4740, 8388608
        %v4742 = vsub.s32 0, %v4741
        %v4743 = vadd.s32 %v4738, 1
        %vm4744 = vcmp.gt.s32.totalorder %v4743, 0
        %v4745 = vsel %vm4744, %v4743, 0
        %v4746 = vshrl.u32 %v4745, 5
        %v4747 = vand.u32 %v4745, 31
        %v4748 = vsub.s32 32, %v4747
        %v4749 = vshrl.u32 683565275, %v4748
        %v4750 = vshll.u32 683565275, %v4747
        %v4751 = vshrl.u32 2475754826, %v4748
        %v4752 = vor.u32 %v4750, %v4751
        %v4753 = vshll.u32 2475754826, %v4747
        %v4754 = vshrl.u32 2131351028, %v4748
        %v4755 = vor.u32 %v4753, %v4754
        %v4756 = vshll.u32 2131351028, %v4747
        %v4757 = vshrl.u32 2102212464, %v4748
        %v4758 = vor.u32 %v4756, %v4757
        %v4759 = vshll.u32 2102212464, %v4747
        %v4760 = vshrl.u32 920167782, %v4748
        %v4761 = vor.u32 %v4759, %v4760
        %v4762 = vshll.u32 920167782, %v4747
        %v4763 = vshrl.u32 1326507024, %v4748
        %v4764 = vor.u32 %v4762, %v4763
        %vm4765 = vcmp.lt.s32.totalorder %v4746, 1
        %vm4766 = vcmp.lt.s32.totalorder %v4746, 2
        %vm4767 = vcmp.lt.s32.totalorder %v4746, 3
        %vm4768 = vcmp.lt.s32.totalorder %v4746, 4
        %v4769 = vsel %vm4765, %v4749, %v4752
        %v4770 = vsel %vm4768, %v4758, 2102212464
        %v4771 = vsel %vm4767, %v4755, %v4770
        %v4772 = vsel %vm4766, %v4769, %v4771
        %v4773 = vsel %vm4765, %v4752, %v4755
        %v4774 = vsel %vm4768, %v4761, 920167782
        %v4775 = vsel %vm4767, %v4758, %v4774
        %v4776 = vsel %vm4766, %v4773, %v4775
        %v4777 = vsel %vm4765, %v4755, %v4758
        %v4778 = vsel %vm4768, %v4764, 1326507024
        %v4779 = vsel %vm4767, %v4761, %v4778
        %v4780 = vsel %vm4766, %v4777, %v4779
        %v4781 = vshll.u32 %v4741, 8
        %v4782 = vmul.u32.u64.compose %v4781, %v4780
        %v4783 = vextract.low.u32 %v4782
        %v4784 = vextract.high.u32 %v4782
        %v4785 = vmul.u32.u64.compose %v4781, %v4776
        %v4786 = vextract.low.u32 %v4785
        %v4787 = vextract.high.u32 %v4785
        %v4788 = vmul.u32 %v4781, %v4772
        %v4789 = vadd.s32 %v4784, %v4786
        %vm4790 = vc.u32 %v4784, %v4786
        %v4791 = vadd.s32 %v4787, 1
        %v4792 = vsel %vm4790, %v4791, %v4787
        %v4793 = vadd.s32 %v4788, %v4792
        %v4794 = vadd.s32 %v4793, 536870912
        %v4795 = vshrl.u32 %v4794, 30
        %v4796 = vshll.u32 %v4795, 30
        %v4797 = vsub.s32 %v4793, %v4796
        %vm4798 = vcmp.lt.s32.totalorder %v4797, 0
        %v4799 = vsub.s32 0, %v4797
        %v4800 = vsel %vm4798, %v4799, %v4797
        %v4801 = vclz %v4800
        %v4802 = vsub.s32 %v4801, 2
        %vm4803 = vcmp.gt.s32.totalorder 0, %v4802
        %v4804 = vsel %vm4803, 0, %v4802
        %v4805 = vsub.s32 32, %v4804
        %v4806 = vshll.u32 %v4797, %v4804
        %v4807 = vshrl.u32 %v4789, %v4805
        %v4808 = vor.u32 %v4806, %v4807
        %v4809 = vsub.s32 4294967266, %v4804
        %v4810 = vadd.s32 %v4809, 127
        %v4811 = vshll.u32 %v4810, 23
        %v4812 = vor.u32 4788187, %v4811
        %v4813 = vand.u32 2147483647, %v4812
        %v4815 = vcvt.s32.f32 %v4808
        %v4816 = vmul.f32 %v4815, %v4813
        %v4817 = vxor.u32 %v4816, 2147483648
        %v4818 = vsel %vm4735, %v4817, %v4816
        %v4819 = vsub.s32 4, %v4795
        %v4820 = vsel %vm4735, %v4819, %v4795
        %v4821 = vsel %vm4734, %v3362, %v4818
        %v4822 = vsel %vm4734, 0, %v4820
        %v4823 = vcosq.f32.pop %v4821
        %v4824 = vsinq.f32.pop %v4821
        %vm4825 = vweird.f32 %v3362
        %v4826 = vadd.s32 %v4822, 3
        %v4827 = vand.u32 %v4826, 3
        %vm4828 = vcmp.lt.s32.totalorder %v4827, 2
        %vm4829 = vcmp.eq.s32.totalorder %v4827, 0
        %v4830 = vxor.u32 %v4824, 2147483648
        %v4831 = vsel %vm4829, %v4823, %v4830
        %vm4832 = vcmp.eq.s32.totalorder %v4827, 2
        %v4833 = vxor.u32 %v4823, 2147483648
        %v4834 = vsel %vm4832, %v4833, %v4824
        %v4835 = vsel %vm4828, %v4831, %v4834
        %v4836 = vsel %vm4825, nan, %v4835
        %v4837 = vand.u32 2147483647, %v3363
        %vm4838 = vcmp.le.f32.partialorder %v4837, 0.7853982
        %vm4839 = vcmp.lt.s32.totalorder %v3363, 0
        %v4840 = vand.u32 %v3363, 2139095040
        %v4841 = vshrl.u32 %v4840, 23
        %v4842 = vsub.s32 %v4841, 127
        %v4843 = vand.u32 2147483647, %v3363
        %v4844 = vand.u32 %v4843, 8388607
        %v4845 = vor.u32 %v4844, 8388608
        %v4846 = vsub.s32 0, %v4845
        %v4847 = vadd.s32 %v4842, 1
        %vm4848 = vcmp.gt.s32.totalorder %v4847, 0
        %v4849 = vsel %vm4848, %v4847, 0
        %v4850 = vshrl.u32 %v4849, 5
        %v4851 = vand.u32 %v4849, 31
        %v4852 = vsub.s32 32, %v4851
        %v4853 = vshrl.u32 683565275, %v4852
        %v4854 = vshll.u32 683565275, %v4851
        %v4855 = vshrl.u32 2475754826, %v4852
        %v4856 = vor.u32 %v4854, %v4855
        %v4857 = vshll.u32 2475754826, %v4851
        %v4858 = vshrl.u32 2131351028, %v4852
        %v4859 = vor.u32 %v4857, %v4858
        %v4860 = vshll.u32 2131351028, %v4851
        %v4861 = vshrl.u32 2102212464, %v4852
        %v4862 = vor.u32 %v4860, %v4861
        %v4863 = vshll.u32 2102212464, %v4851
        %v4864 = vshrl.u32 920167782, %v4852
        %v4865 = vor.u32 %v4863, %v4864
        %v4866 = vshll.u32 920167782, %v4851
        %v4867 = vshrl.u32 1326507024, %v4852
        %v4868 = vor.u32 %v4866, %v4867
        %vm4869 = vcmp.lt.s32.totalorder %v4850, 1
        %vm4870 = vcmp.lt.s32.totalorder %v4850, 2
        %vm4871 = vcmp.lt.s32.totalorder %v4850, 3
        %vm4872 = vcmp.lt.s32.totalorder %v4850, 4
        %v4873 = vsel %vm4869, %v4853, %v4856
        %v4874 = vsel %vm4872, %v4862, 2102212464
        %v4875 = vsel %vm4871, %v4859, %v4874
        %v4876 = vsel %vm4870, %v4873, %v4875
        %v4877 = vsel %vm4869, %v4856, %v4859
        %v4878 = vsel %vm4872, %v4865, 920167782
        %v4879 = vsel %vm4871, %v4862, %v4878
        %v4880 = vsel %vm4870, %v4877, %v4879
        %v4881 = vsel %vm4869, %v4859, %v4862
        %v4882 = vsel %vm4872, %v4868, 1326507024
        %v4883 = vsel %vm4871, %v4865, %v4882
        %v4884 = vsel %vm4870, %v4881, %v4883
        %v4885 = vshll.u32 %v4845, 8
        %v4886 = vmul.u32.u64.compose %v4885, %v4884
        %v4887 = vextract.low.u32 %v4886
        %v4888 = vextract.high.u32 %v4886
        %v4889 = vmul.u32.u64.compose %v4885, %v4880
        %v4890 = vextract.low.u32 %v4889
        %v4891 = vextract.high.u32 %v4889
        %v4892 = vmul.u32 %v4885, %v4876
        %v4893 = vadd.s32 %v4888, %v4890
        %vm4894 = vc.u32 %v4888, %v4890
        %v4895 = vadd.s32 %v4891, 1
        %v4896 = vsel %vm4894, %v4895, %v4891
        %v4897 = vadd.s32 %v4892, %v4896
        %v4898 = vadd.s32 %v4897, 536870912
        %v4899 = vshrl.u32 %v4898, 30
        %v4900 = vshll.u32 %v4899, 30
        %v4901 = vsub.s32 %v4897, %v4900
        %vm4902 = vcmp.lt.s32.totalorder %v4901, 0
        %v4903 = vsub.s32 0, %v4901
        %v4904 = vsel %vm4902, %v4903, %v4901
        %v4905 = vclz %v4904
        %v4906 = vsub.s32 %v4905, 2
        %vm4907 = vcmp.gt.s32.totalorder 0, %v4906
        %v4908 = vsel %vm4907, 0, %v4906
        %v4909 = vsub.s32 32, %v4908
        %v4910 = vshll.u32 %v4901, %v4908
        %v4911 = vshrl.u32 %v4893, %v4909
        %v4912 = vor.u32 %v4910, %v4911
        %v4913 = vsub.s32 4294967266, %v4908
        %v4914 = vadd.s32 %v4913, 127
        %v4915 = vshll.u32 %v4914, 23
        %v4916 = vor.u32 4788187, %v4915
        %v4917 = vand.u32 2147483647, %v4916
        %v4919 = vcvt.s32.f32 %v4912
        %v4920 = vmul.f32 %v4919, %v4917
        %v4921 = vxor.u32 %v4920, 2147483648
        %v4922 = vsel %vm4839, %v4921, %v4920
        %v4923 = vsub.s32 4, %v4899
        %v4924 = vsel %vm4839, %v4923, %v4899
        %v4925 = vsel %vm4838, %v3363, %v4922
        %v4926 = vsel %vm4838, 0, %v4924
        %v4927 = vcosq.f32.pop %v4925
        %v4928 = vsinq.f32.pop %v4925
        %vm4929 = vweird.f32 %v3363
        %v4930 = vadd.s32 %v4926, 3
        %v4931 = vand.u32 %v4930, 3
        %vm4932 = vcmp.lt.s32.totalorder %v4931, 2
        %vm4933 = vcmp.eq.s32.totalorder %v4931, 0
        %v4934 = vxor.u32 %v4928, 2147483648
        %v4935 = vsel %vm4933, %v4927, %v4934
        %vm4936 = vcmp.eq.s32.totalorder %v4931, 2
        %v4937 = vxor.u32 %v4927, 2147483648
        %v4938 = vsel %vm4936, %v4937, %v4928
        %v4939 = vsel %vm4932, %v4935, %v4938
        %v4940 = vsel %vm4929, nan, %v4939
        %v4941 = vand.u32 2147483647, %v3364
        %vm4942 = vcmp.le.f32.partialorder %v4941, 0.7853982
        %vm4943 = vcmp.lt.s32.totalorder %v3364, 0
        %v4944 = vand.u32 %v3364, 2139095040
        %v4945 = vshrl.u32 %v4944, 23
        %v4946 = vsub.s32 %v4945, 127
        %v4947 = vand.u32 2147483647, %v3364
        %v4948 = vand.u32 %v4947, 8388607
        %v4949 = vor.u32 %v4948, 8388608
        %v4950 = vsub.s32 0, %v4949
        %v4951 = vadd.s32 %v4946, 1
        %vm4952 = vcmp.gt.s32.totalorder %v4951, 0
        %v4953 = vsel %vm4952, %v4951, 0
        %v4954 = vshrl.u32 %v4953, 5
        %v4955 = vand.u32 %v4953, 31
        %v4956 = vsub.s32 32, %v4955
        %v4957 = vshrl.u32 683565275, %v4956
        %v4958 = vshll.u32 683565275, %v4955
        %v4959 = vshrl.u32 2475754826, %v4956
        %v4960 = vor.u32 %v4958, %v4959
        %v4961 = vshll.u32 2475754826, %v4955
        %v4962 = vshrl.u32 2131351028, %v4956
        %v4963 = vor.u32 %v4961, %v4962
        %v4964 = vshll.u32 2131351028, %v4955
        %v4965 = vshrl.u32 2102212464, %v4956
        %v4966 = vor.u32 %v4964, %v4965
        %v4967 = vshll.u32 2102212464, %v4955
        %v4968 = vshrl.u32 920167782, %v4956
        %v4969 = vor.u32 %v4967, %v4968
        %v4970 = vshll.u32 920167782, %v4955
        %v4971 = vshrl.u32 1326507024, %v4956
        %v4972 = vor.u32 %v4970, %v4971
        %vm4973 = vcmp.lt.s32.totalorder %v4954, 1
        %vm4974 = vcmp.lt.s32.totalorder %v4954, 2
        %vm4975 = vcmp.lt.s32.totalorder %v4954, 3
        %vm4976 = vcmp.lt.s32.totalorder %v4954, 4
        %v4977 = vsel %vm4973, %v4957, %v4960
        %v4978 = vsel %vm4976, %v4966, 2102212464
        %v4979 = vsel %vm4975, %v4963, %v4978
        %v4980 = vsel %vm4974, %v4977, %v4979
        %v4981 = vsel %vm4973, %v4960, %v4963
        %v4982 = vsel %vm4976, %v4969, 920167782
        %v4983 = vsel %vm4975, %v4966, %v4982
        %v4984 = vsel %vm4974, %v4981, %v4983
        %v4985 = vsel %vm4973, %v4963, %v4966
        %v4986 = vsel %vm4976, %v4972, 1326507024
        %v4987 = vsel %vm4975, %v4969, %v4986
        %v4988 = vsel %vm4974, %v4985, %v4987
        %v4989 = vshll.u32 %v4949, 8
        %v4990 = vmul.u32.u64.compose %v4989, %v4988
        %v4991 = vextract.low.u32 %v4990
        %v4992 = vextract.high.u32 %v4990
        %v4993 = vmul.u32.u64.compose %v4989, %v4984
        %v4994 = vextract.low.u32 %v4993
        %v4995 = vextract.high.u32 %v4993
        %v4996 = vmul.u32 %v4989, %v4980
        %v4997 = vadd.s32 %v4992, %v4994
        %vm4998 = vc.u32 %v4992, %v4994
        %v4999 = vadd.s32 %v4995, 1
        %v5000 = vsel %vm4998, %v4999, %v4995
        %v5001 = vadd.s32 %v4996, %v5000
        %v5002 = vadd.s32 %v5001, 536870912
        %v5003 = vshrl.u32 %v5002, 30
        %v5004 = vshll.u32 %v5003, 30
        %v5005 = vsub.s32 %v5001, %v5004
        %vm5006 = vcmp.lt.s32.totalorder %v5005, 0
        %v5007 = vsub.s32 0, %v5005
        %v5008 = vsel %vm5006, %v5007, %v5005
        %v5009 = vclz %v5008
        %v5010 = vsub.s32 %v5009, 2
        %vm5011 = vcmp.gt.s32.totalorder 0, %v5010
        %v5012 = vsel %vm5011, 0, %v5010
        %v5013 = vsub.s32 32, %v5012
        %v5014 = vshll.u32 %v5005, %v5012
        %v5015 = vshrl.u32 %v4997, %v5013
        %v5016 = vor.u32 %v5014, %v5015
        %v5017 = vsub.s32 4294967266, %v5012
        %v5018 = vadd.s32 %v5017, 127
        %v5019 = vshll.u32 %v5018, 23
        %v5020 = vor.u32 4788187, %v5019
        %v5021 = vand.u32 2147483647, %v5020
        %v5023 = vcvt.s32.f32 %v5016
        %v5024 = vmul.f32 %v5023, %v5021
        %v5025 = vxor.u32 %v5024, 2147483648
        %v5026 = vsel %vm4943, %v5025, %v5024
        %v5027 = vsub.s32 4, %v5003
        %v5028 = vsel %vm4943, %v5027, %v5003
        %v5029 = vsel %vm4942, %v3364, %v5026
        %v5030 = vsel %vm4942, 0, %v5028
        %v5031 = vcosq.f32.pop %v5029
        %v5032 = vsinq.f32.pop %v5029
        %vm5033 = vweird.f32 %v3364
        %v5034 = vadd.s32 %v5030, 3
        %v5035 = vand.u32 %v5034, 3
        %vm5036 = vcmp.lt.s32.totalorder %v5035, 2
        %vm5037 = vcmp.eq.s32.totalorder %v5035, 0
        %v5038 = vxor.u32 %v5032, 2147483648
        %v5039 = vsel %vm5037, %v5031, %v5038
        %vm5040 = vcmp.eq.s32.totalorder %v5035, 2
        %v5041 = vxor.u32 %v5031, 2147483648
        %v5042 = vsel %vm5040, %v5041, %v5032
        %v5043 = vsel %vm5036, %v5039, %v5042
        %v5044 = vsel %vm5033, nan, %v5043
        %v5045 = vand.u32 2147483647, %v3365
        %vm5046 = vcmp.le.f32.partialorder %v5045, 0.7853982
        %vm5047 = vcmp.lt.s32.totalorder %v3365, 0
        %v5048 = vand.u32 %v3365, 2139095040
        %v5049 = vshrl.u32 %v5048, 23
        %v5050 = vsub.s32 %v5049, 127
        %v5051 = vand.u32 2147483647, %v3365
        %v5052 = vand.u32 %v5051, 8388607
        %v5053 = vor.u32 %v5052, 8388608
        %v5054 = vsub.s32 0, %v5053
        %v5055 = vadd.s32 %v5050, 1
        %vm5056 = vcmp.gt.s32.totalorder %v5055, 0
        %v5057 = vsel %vm5056, %v5055, 0
        %v5058 = vshrl.u32 %v5057, 5
        %v5059 = vand.u32 %v5057, 31
        %v5060 = vsub.s32 32, %v5059
        %v5061 = vshrl.u32 683565275, %v5060
        %v5062 = vshll.u32 683565275, %v5059
        %v5063 = vshrl.u32 2475754826, %v5060
        %v5064 = vor.u32 %v5062, %v5063
        %v5065 = vshll.u32 2475754826, %v5059
        %v5066 = vshrl.u32 2131351028, %v5060
        %v5067 = vor.u32 %v5065, %v5066
        %v5068 = vshll.u32 2131351028, %v5059
        %v5069 = vshrl.u32 2102212464, %v5060
        %v5070 = vor.u32 %v5068, %v5069
        %v5071 = vshll.u32 2102212464, %v5059
        %v5072 = vshrl.u32 920167782, %v5060
        %v5073 = vor.u32 %v5071, %v5072
        %v5074 = vshll.u32 920167782, %v5059
        %v5075 = vshrl.u32 1326507024, %v5060
        %v5076 = vor.u32 %v5074, %v5075
        %vm5077 = vcmp.lt.s32.totalorder %v5058, 1
        %vm5078 = vcmp.lt.s32.totalorder %v5058, 2
        %vm5079 = vcmp.lt.s32.totalorder %v5058, 3
        %vm5080 = vcmp.lt.s32.totalorder %v5058, 4
        %v5081 = vsel %vm5077, %v5061, %v5064
        %v5082 = vsel %vm5080, %v5070, 2102212464
        %v5083 = vsel %vm5079, %v5067, %v5082
        %v5084 = vsel %vm5078, %v5081, %v5083
        %v5085 = vsel %vm5077, %v5064, %v5067
        %v5086 = vsel %vm5080, %v5073, 920167782
        %v5087 = vsel %vm5079, %v5070, %v5086
        %v5088 = vsel %vm5078, %v5085, %v5087
        %v5089 = vsel %vm5077, %v5067, %v5070
        %v5090 = vsel %vm5080, %v5076, 1326507024
        %v5091 = vsel %vm5079, %v5073, %v5090
        %v5092 = vsel %vm5078, %v5089, %v5091
        %v5093 = vshll.u32 %v5053, 8
        %v5094 = vmul.u32.u64.compose %v5093, %v5092
        %v5095 = vextract.low.u32 %v5094
        %v5096 = vextract.high.u32 %v5094
        %v5097 = vmul.u32.u64.compose %v5093, %v5088
        %v5098 = vextract.low.u32 %v5097
        %v5099 = vextract.high.u32 %v5097
        %v5100 = vmul.u32 %v5093, %v5084
        %v5101 = vadd.s32 %v5096, %v5098
        %vm5102 = vc.u32 %v5096, %v5098
        %v5103 = vadd.s32 %v5099, 1
        %v5104 = vsel %vm5102, %v5103, %v5099
        %v5105 = vadd.s32 %v5100, %v5104
        %v5106 = vadd.s32 %v5105, 536870912
        %v5107 = vshrl.u32 %v5106, 30
        %v5108 = vshll.u32 %v5107, 30
        %v5109 = vsub.s32 %v5105, %v5108
        %vm5110 = vcmp.lt.s32.totalorder %v5109, 0
        %v5111 = vsub.s32 0, %v5109
        %v5112 = vsel %vm5110, %v5111, %v5109
        %v5113 = vclz %v5112
        %v5114 = vsub.s32 %v5113, 2
        %vm5115 = vcmp.gt.s32.totalorder 0, %v5114
        %v5116 = vsel %vm5115, 0, %v5114
        %v5117 = vsub.s32 32, %v5116
        %v5118 = vshll.u32 %v5109, %v5116
        %v5119 = vshrl.u32 %v5101, %v5117
        %v5120 = vor.u32 %v5118, %v5119
        %v5121 = vsub.s32 4294967266, %v5116
        %v5122 = vadd.s32 %v5121, 127
        %v5123 = vshll.u32 %v5122, 23
        %v5124 = vor.u32 4788187, %v5123
        %v5125 = vand.u32 2147483647, %v5124
        %v5127 = vcvt.s32.f32 %v5120
        %v5128 = vmul.f32 %v5127, %v5125
        %v5129 = vxor.u32 %v5128, 2147483648
        %v5130 = vsel %vm5047, %v5129, %v5128
        %v5131 = vsub.s32 4, %v5107
        %v5132 = vsel %vm5047, %v5131, %v5107
        %v5133 = vsel %vm5046, %v3365, %v5130
        %v5134 = vsel %vm5046, 0, %v5132
        %v5135 = vcosq.f32.pop %v5133
        %v5136 = vsinq.f32.pop %v5133
        %vm5137 = vweird.f32 %v3365
        %v5138 = vadd.s32 %v5134, 3
        %v5139 = vand.u32 %v5138, 3
        %vm5140 = vcmp.lt.s32.totalorder %v5139, 2
        %vm5141 = vcmp.eq.s32.totalorder %v5139, 0
        %v5142 = vxor.u32 %v5136, 2147483648
        %v5143 = vsel %vm5141, %v5135, %v5142
        %vm5144 = vcmp.eq.s32.totalorder %v5139, 2
        %v5145 = vxor.u32 %v5135, 2147483648
        %v5146 = vsel %vm5144, %v5145, %v5136
        %v5147 = vsel %vm5140, %v5143, %v5146
        %v5148 = vsel %vm5137, nan, %v5147
        %v5149 = vand.u32 2147483647, %v3366
        %vm5150 = vcmp.le.f32.partialorder %v5149, 0.7853982
        %vm5151 = vcmp.lt.s32.totalorder %v3366, 0
        %v5152 = vand.u32 %v3366, 2139095040
        %v5153 = vshrl.u32 %v5152, 23
        %v5154 = vsub.s32 %v5153, 127
        %v5155 = vand.u32 2147483647, %v3366
        %v5156 = vand.u32 %v5155, 8388607
        %v5157 = vor.u32 %v5156, 8388608
        %v5158 = vsub.s32 0, %v5157
        %v5159 = vadd.s32 %v5154, 1
        %vm5160 = vcmp.gt.s32.totalorder %v5159, 0
        %v5161 = vsel %vm5160, %v5159, 0
        %v5162 = vshrl.u32 %v5161, 5
        %v5163 = vand.u32 %v5161, 31
        %v5164 = vsub.s32 32, %v5163
        %v5165 = vshrl.u32 683565275, %v5164
        %v5166 = vshll.u32 683565275, %v5163
        %v5167 = vshrl.u32 2475754826, %v5164
        %v5168 = vor.u32 %v5166, %v5167
        %v5169 = vshll.u32 2475754826, %v5163
        %v5170 = vshrl.u32 2131351028, %v5164
        %v5171 = vor.u32 %v5169, %v5170
        %v5172 = vshll.u32 2131351028, %v5163
        %v5173 = vshrl.u32 2102212464, %v5164
        %v5174 = vor.u32 %v5172, %v5173
        %v5175 = vshll.u32 2102212464, %v5163
        %v5176 = vshrl.u32 920167782, %v5164
        %v5177 = vor.u32 %v5175, %v5176
        %v5178 = vshll.u32 920167782, %v5163
        %v5179 = vshrl.u32 1326507024, %v5164
        %v5180 = vor.u32 %v5178, %v5179
        %vm5181 = vcmp.lt.s32.totalorder %v5162, 1
        %vm5182 = vcmp.lt.s32.totalorder %v5162, 2
        %vm5183 = vcmp.lt.s32.totalorder %v5162, 3
        %vm5184 = vcmp.lt.s32.totalorder %v5162, 4
        %v5185 = vsel %vm5181, %v5165, %v5168
        %v5186 = vsel %vm5184, %v5174, 2102212464
        %v5187 = vsel %vm5183, %v5171, %v5186
        %v5188 = vsel %vm5182, %v5185, %v5187
        %v5189 = vsel %vm5181, %v5168, %v5171
        %v5190 = vsel %vm5184, %v5177, 920167782
        %v5191 = vsel %vm5183, %v5174, %v5190
        %v5192 = vsel %vm5182, %v5189, %v5191
        %v5193 = vsel %vm5181, %v5171, %v5174
        %v5194 = vsel %vm5184, %v5180, 1326507024
        %v5195 = vsel %vm5183, %v5177, %v5194
        %v5196 = vsel %vm5182, %v5193, %v5195
        %v5197 = vshll.u32 %v5157, 8
        %v5198 = vmul.u32.u64.compose %v5197, %v5196
        %v5199 = vextract.low.u32 %v5198
        %v5200 = vextract.high.u32 %v5198
        %v5201 = vmul.u32.u64.compose %v5197, %v5192
        %v5202 = vextract.low.u32 %v5201
        %v5203 = vextract.high.u32 %v5201
        %v5204 = vmul.u32 %v5197, %v5188
        %v5205 = vadd.s32 %v5200, %v5202
        %vm5206 = vc.u32 %v5200, %v5202
        %v5207 = vadd.s32 %v5203, 1
        %v5208 = vsel %vm5206, %v5207, %v5203
        %v5209 = vadd.s32 %v5204, %v5208
        %v5210 = vadd.s32 %v5209, 536870912
        %v5211 = vshrl.u32 %v5210, 30
        %v5212 = vshll.u32 %v5211, 30
        %v5213 = vsub.s32 %v5209, %v5212
        %vm5214 = vcmp.lt.s32.totalorder %v5213, 0
        %v5215 = vsub.s32 0, %v5213
        %v5216 = vsel %vm5214, %v5215, %v5213
        %v5217 = vclz %v5216
        %v5218 = vsub.s32 %v5217, 2
        %vm5219 = vcmp.gt.s32.totalorder 0, %v5218
        %v5220 = vsel %vm5219, 0, %v5218
        %v5221 = vsub.s32 32, %v5220
        %v5222 = vshll.u32 %v5213, %v5220
        %v5223 = vshrl.u32 %v5205, %v5221
        %v5224 = vor.u32 %v5222, %v5223
        %v5225 = vsub.s32 4294967266, %v5220
        %v5226 = vadd.s32 %v5225, 127
        %v5227 = vshll.u32 %v5226, 23
        %v5228 = vor.u32 4788187, %v5227
        %v5229 = vand.u32 2147483647, %v5228
        %v5231 = vcvt.s32.f32 %v5224
        %v5232 = vmul.f32 %v5231, %v5229
        %v5233 = vxor.u32 %v5232, 2147483648
        %v5234 = vsel %vm5151, %v5233, %v5232
        %v5235 = vsub.s32 4, %v5211
        %v5236 = vsel %vm5151, %v5235, %v5211
        %v5237 = vsel %vm5150, %v3366, %v5234
        %v5238 = vsel %vm5150, 0, %v5236
        %v5239 = vcosq.f32.pop %v5237
        %v5240 = vsinq.f32.pop %v5237
        %vm5241 = vweird.f32 %v3366
        %v5242 = vadd.s32 %v5238, 3
        %v5243 = vand.u32 %v5242, 3
        %vm5244 = vcmp.lt.s32.totalorder %v5243, 2
        %vm5245 = vcmp.eq.s32.totalorder %v5243, 0
        %v5246 = vxor.u32 %v5240, 2147483648
        %v5247 = vsel %vm5245, %v5239, %v5246
        %vm5248 = vcmp.eq.s32.totalorder %v5243, 2
        %v5249 = vxor.u32 %v5239, 2147483648
        %v5250 = vsel %vm5248, %v5249, %v5240
        %v5251 = vsel %vm5244, %v5247, %v5250
        %v5252 = vsel %vm5241, nan, %v5251
        %v5253 = vand.u32 2147483647, %v3367
        %vm5254 = vcmp.le.f32.partialorder %v5253, 0.7853982
        %vm5255 = vcmp.lt.s32.totalorder %v3367, 0
        %v5256 = vand.u32 %v3367, 2139095040
        %v5257 = vshrl.u32 %v5256, 23
        %v5258 = vsub.s32 %v5257, 127
        %v5259 = vand.u32 2147483647, %v3367
        %v5260 = vand.u32 %v5259, 8388607
        %v5261 = vor.u32 %v5260, 8388608
        %v5262 = vsub.s32 0, %v5261
        %v5263 = vadd.s32 %v5258, 1
        %vm5264 = vcmp.gt.s32.totalorder %v5263, 0
        %v5265 = vsel %vm5264, %v5263, 0
        %v5266 = vshrl.u32 %v5265, 5
        %v5267 = vand.u32 %v5265, 31
        %v5268 = vsub.s32 32, %v5267
        %v5269 = vshrl.u32 683565275, %v5268
        %v5270 = vshll.u32 683565275, %v5267
        %v5271 = vshrl.u32 2475754826, %v5268
        %v5272 = vor.u32 %v5270, %v5271
        %v5273 = vshll.u32 2475754826, %v5267
        %v5274 = vshrl.u32 2131351028, %v5268
        %v5275 = vor.u32 %v5273, %v5274
        %v5276 = vshll.u32 2131351028, %v5267
        %v5277 = vshrl.u32 2102212464, %v5268
        %v5278 = vor.u32 %v5276, %v5277
        %v5279 = vshll.u32 2102212464, %v5267
        %v5280 = vshrl.u32 920167782, %v5268
        %v5281 = vor.u32 %v5279, %v5280
        %v5282 = vshll.u32 920167782, %v5267
        %v5283 = vshrl.u32 1326507024, %v5268
        %v5284 = vor.u32 %v5282, %v5283
        %vm5285 = vcmp.lt.s32.totalorder %v5266, 1
        %vm5286 = vcmp.lt.s32.totalorder %v5266, 2
        %vm5287 = vcmp.lt.s32.totalorder %v5266, 3
        %vm5288 = vcmp.lt.s32.totalorder %v5266, 4
        %v5289 = vsel %vm5285, %v5269, %v5272
        %v5290 = vsel %vm5288, %v5278, 2102212464
        %v5291 = vsel %vm5287, %v5275, %v5290
        %v5292 = vsel %vm5286, %v5289, %v5291
        %v5293 = vsel %vm5285, %v5272, %v5275
        %v5294 = vsel %vm5288, %v5281, 920167782
        %v5295 = vsel %vm5287, %v5278, %v5294
        %v5296 = vsel %vm5286, %v5293, %v5295
        %v5297 = vsel %vm5285, %v5275, %v5278
        %v5298 = vsel %vm5288, %v5284, 1326507024
        %v5299 = vsel %vm5287, %v5281, %v5298
        %v5300 = vsel %vm5286, %v5297, %v5299
        %v5301 = vshll.u32 %v5261, 8
        %v5302 = vmul.u32.u64.compose %v5301, %v5300
        %v5303 = vextract.low.u32 %v5302
        %v5304 = vextract.high.u32 %v5302
        %v5305 = vmul.u32.u64.compose %v5301, %v5296
        %v5306 = vextract.low.u32 %v5305
        %v5307 = vextract.high.u32 %v5305
        %v5308 = vmul.u32 %v5301, %v5292
        %v5309 = vadd.s32 %v5304, %v5306
        %vm5310 = vc.u32 %v5304, %v5306
        %v5311 = vadd.s32 %v5307, 1
        %v5312 = vsel %vm5310, %v5311, %v5307
        %v5313 = vadd.s32 %v5308, %v5312
        %v5314 = vadd.s32 %v5313, 536870912
        %v5315 = vshrl.u32 %v5314, 30
        %v5316 = vshll.u32 %v5315, 30
        %v5317 = vsub.s32 %v5313, %v5316
        %vm5318 = vcmp.lt.s32.totalorder %v5317, 0
        %v5319 = vsub.s32 0, %v5317
        %v5320 = vsel %vm5318, %v5319, %v5317
        %v5321 = vclz %v5320
        %v5322 = vsub.s32 %v5321, 2
        %vm5323 = vcmp.gt.s32.totalorder 0, %v5322
        %v5324 = vsel %vm5323, 0, %v5322
        %v5325 = vsub.s32 32, %v5324
        %v5326 = vshll.u32 %v5317, %v5324
        %v5327 = vshrl.u32 %v5309, %v5325
        %v5328 = vor.u32 %v5326, %v5327
        %v5329 = vsub.s32 4294967266, %v5324
        %v5330 = vadd.s32 %v5329, 127
        %v5331 = vshll.u32 %v5330, 23
        %v5332 = vor.u32 4788187, %v5331
        %v5333 = vand.u32 2147483647, %v5332
        %v5335 = vcvt.s32.f32 %v5328
        %v5336 = vmul.f32 %v5335, %v5333
        %v5337 = vxor.u32 %v5336, 2147483648
        %v5338 = vsel %vm5255, %v5337, %v5336
        %v5339 = vsub.s32 4, %v5315
        %v5340 = vsel %vm5255, %v5339, %v5315
        %v5341 = vsel %vm5254, %v3367, %v5338
        %v5342 = vsel %vm5254, 0, %v5340
        %v5343 = vcosq.f32.pop %v5341
        %v5344 = vsinq.f32.pop %v5341
        %vm5345 = vweird.f32 %v3367
        %v5346 = vadd.s32 %v5342, 3
        %v5347 = vand.u32 %v5346, 3
        %vm5348 = vcmp.lt.s32.totalorder %v5347, 2
        %vm5349 = vcmp.eq.s32.totalorder %v5347, 0
        %v5350 = vxor.u32 %v5344, 2147483648
        %v5351 = vsel %vm5349, %v5343, %v5350
        %vm5352 = vcmp.eq.s32.totalorder %v5347, 2
        %v5353 = vxor.u32 %v5343, 2147483648
        %v5354 = vsel %vm5352, %v5353, %v5344
        %v5355 = vsel %vm5348, %v5351, %v5354
        %v5356 = vsel %vm5345, nan, %v5355
        %v5357 = vand.u32 2147483647, %v3368
        %vm5358 = vcmp.le.f32.partialorder %v5357, 0.7853982
        %vm5359 = vcmp.lt.s32.totalorder %v3368, 0
        %v5360 = vand.u32 %v3368, 2139095040
        %v5361 = vshrl.u32 %v5360, 23
        %v5362 = vsub.s32 %v5361, 127
        %v5363 = vand.u32 2147483647, %v3368
        %v5364 = vand.u32 %v5363, 8388607
        %v5365 = vor.u32 %v5364, 8388608
        %v5366 = vsub.s32 0, %v5365
        %v5367 = vadd.s32 %v5362, 1
        %vm5368 = vcmp.gt.s32.totalorder %v5367, 0
        %v5369 = vsel %vm5368, %v5367, 0
        %v5370 = vshrl.u32 %v5369, 5
        %v5371 = vand.u32 %v5369, 31
        %v5372 = vsub.s32 32, %v5371
        %v5373 = vshrl.u32 683565275, %v5372
        %v5374 = vshll.u32 683565275, %v5371
        %v5375 = vshrl.u32 2475754826, %v5372
        %v5376 = vor.u32 %v5374, %v5375
        %v5377 = vshll.u32 2475754826, %v5371
        %v5378 = vshrl.u32 2131351028, %v5372
        %v5379 = vor.u32 %v5377, %v5378
        %v5380 = vshll.u32 2131351028, %v5371
        %v5381 = vshrl.u32 2102212464, %v5372
        %v5382 = vor.u32 %v5380, %v5381
        %v5383 = vshll.u32 2102212464, %v5371
        %v5384 = vshrl.u32 920167782, %v5372
        %v5385 = vor.u32 %v5383, %v5384
        %v5386 = vshll.u32 920167782, %v5371
        %v5387 = vshrl.u32 1326507024, %v5372
        %v5388 = vor.u32 %v5386, %v5387
        %vm5389 = vcmp.lt.s32.totalorder %v5370, 1
        %vm5390 = vcmp.lt.s32.totalorder %v5370, 2
        %vm5391 = vcmp.lt.s32.totalorder %v5370, 3
        %vm5392 = vcmp.lt.s32.totalorder %v5370, 4
        %v5393 = vsel %vm5389, %v5373, %v5376
        %v5394 = vsel %vm5392, %v5382, 2102212464
        %v5395 = vsel %vm5391, %v5379, %v5394
        %v5396 = vsel %vm5390, %v5393, %v5395
        %v5397 = vsel %vm5389, %v5376, %v5379
        %v5398 = vsel %vm5392, %v5385, 920167782
        %v5399 = vsel %vm5391, %v5382, %v5398
        %v5400 = vsel %vm5390, %v5397, %v5399
        %v5401 = vsel %vm5389, %v5379, %v5382
        %v5402 = vsel %vm5392, %v5388, 1326507024
        %v5403 = vsel %vm5391, %v5385, %v5402
        %v5404 = vsel %vm5390, %v5401, %v5403
        %v5405 = vshll.u32 %v5365, 8
        %v5406 = vmul.u32.u64.compose %v5405, %v5404
        %v5407 = vextract.low.u32 %v5406
        %v5408 = vextract.high.u32 %v5406
        %v5409 = vmul.u32.u64.compose %v5405, %v5400
        %v5410 = vextract.low.u32 %v5409
        %v5411 = vextract.high.u32 %v5409
        %v5412 = vmul.u32 %v5405, %v5396
        %v5413 = vadd.s32 %v5408, %v5410
        %vm5414 = vc.u32 %v5408, %v5410
        %v5415 = vadd.s32 %v5411, 1
        %v5416 = vsel %vm5414, %v5415, %v5411
        %v5417 = vadd.s32 %v5412, %v5416
        %v5418 = vadd.s32 %v5417, 536870912
        %v5419 = vshrl.u32 %v5418, 30
        %v5420 = vshll.u32 %v5419, 30
        %v5421 = vsub.s32 %v5417, %v5420
        %vm5422 = vcmp.lt.s32.totalorder %v5421, 0
        %v5423 = vsub.s32 0, %v5421
        %v5424 = vsel %vm5422, %v5423, %v5421
        %v5425 = vclz %v5424
        %v5426 = vsub.s32 %v5425, 2
        %vm5427 = vcmp.gt.s32.totalorder 0, %v5426
        %v5428 = vsel %vm5427, 0, %v5426
        %v5429 = vsub.s32 32, %v5428
        %v5430 = vshll.u32 %v5421, %v5428
        %v5431 = vshrl.u32 %v5413, %v5429
        %v5432 = vor.u32 %v5430, %v5431
        %v5433 = vsub.s32 4294967266, %v5428
        %v5434 = vadd.s32 %v5433, 127
        %v5435 = vshll.u32 %v5434, 23
        %v5436 = vor.u32 4788187, %v5435
        %v5437 = vand.u32 2147483647, %v5436
        %v5439 = vcvt.s32.f32 %v5432
        %v5440 = vmul.f32 %v5439, %v5437
        %v5441 = vxor.u32 %v5440, 2147483648
        %v5442 = vsel %vm5359, %v5441, %v5440
        %v5443 = vsub.s32 4, %v5419
        %v5444 = vsel %vm5359, %v5443, %v5419
        %v5445 = vsel %vm5358, %v3368, %v5442
        %v5446 = vsel %vm5358, 0, %v5444
        %v5447 = vcosq.f32.pop %v5445
        %v5448 = vsinq.f32.pop %v5445
        %vm5449 = vweird.f32 %v3368
        %v5450 = vadd.s32 %v5446, 3
        %v5451 = vand.u32 %v5450, 3
        %vm5452 = vcmp.lt.s32.totalorder %v5451, 2
        %vm5453 = vcmp.eq.s32.totalorder %v5451, 0
        %v5454 = vxor.u32 %v5448, 2147483648
        %v5455 = vsel %vm5453, %v5447, %v5454
        %vm5456 = vcmp.eq.s32.totalorder %v5451, 2
        %v5457 = vxor.u32 %v5447, 2147483648
        %v5458 = vsel %vm5456, %v5457, %v5448
        %v5459 = vsel %vm5452, %v5455, %v5458
        %v5460 = vsel %vm5449, nan, %v5459
        %v5461 = vand.u32 2147483647, %v3369
        %vm5462 = vcmp.le.f32.partialorder %v5461, 0.7853982
        %vm5463 = vcmp.lt.s32.totalorder %v3369, 0
        %v5464 = vand.u32 %v3369, 2139095040
        %v5465 = vshrl.u32 %v5464, 23
        %v5466 = vsub.s32 %v5465, 127
        %v5467 = vand.u32 2147483647, %v3369
        %v5468 = vand.u32 %v5467, 8388607
        %v5469 = vor.u32 %v5468, 8388608
        %v5470 = vsub.s32 0, %v5469
        %v5471 = vadd.s32 %v5466, 1
        %vm5472 = vcmp.gt.s32.totalorder %v5471, 0
        %v5473 = vsel %vm5472, %v5471, 0
        %v5474 = vshrl.u32 %v5473, 5
        %v5475 = vand.u32 %v5473, 31
        %v5476 = vsub.s32 32, %v5475
        %v5477 = vshrl.u32 683565275, %v5476
        %v5478 = vshll.u32 683565275, %v5475
        %v5479 = vshrl.u32 2475754826, %v5476
        %v5480 = vor.u32 %v5478, %v5479
        %v5481 = vshll.u32 2475754826, %v5475
        %v5482 = vshrl.u32 2131351028, %v5476
        %v5483 = vor.u32 %v5481, %v5482
        %v5484 = vshll.u32 2131351028, %v5475
        %v5485 = vshrl.u32 2102212464, %v5476
        %v5486 = vor.u32 %v5484, %v5485
        %v5487 = vshll.u32 2102212464, %v5475
        %v5488 = vshrl.u32 920167782, %v5476
        %v5489 = vor.u32 %v5487, %v5488
        %v5490 = vshll.u32 920167782, %v5475
        %v5491 = vshrl.u32 1326507024, %v5476
        %v5492 = vor.u32 %v5490, %v5491
        %vm5493 = vcmp.lt.s32.totalorder %v5474, 1
        %vm5494 = vcmp.lt.s32.totalorder %v5474, 2
        %vm5495 = vcmp.lt.s32.totalorder %v5474, 3
        %vm5496 = vcmp.lt.s32.totalorder %v5474, 4
        %v5497 = vsel %vm5493, %v5477, %v5480
        %v5498 = vsel %vm5496, %v5486, 2102212464
        %v5499 = vsel %vm5495, %v5483, %v5498
        %v5500 = vsel %vm5494, %v5497, %v5499
        %v5501 = vsel %vm5493, %v5480, %v5483
        %v5502 = vsel %vm5496, %v5489, 920167782
        %v5503 = vsel %vm5495, %v5486, %v5502
        %v5504 = vsel %vm5494, %v5501, %v5503
        %v5505 = vsel %vm5493, %v5483, %v5486
        %v5506 = vsel %vm5496, %v5492, 1326507024
        %v5507 = vsel %vm5495, %v5489, %v5506
        %v5508 = vsel %vm5494, %v5505, %v5507
        %v5509 = vshll.u32 %v5469, 8
        %v5510 = vmul.u32.u64.compose %v5509, %v5508
        %v5511 = vextract.low.u32 %v5510
        %v5512 = vextract.high.u32 %v5510
        %v5513 = vmul.u32.u64.compose %v5509, %v5504
        %v5514 = vextract.low.u32 %v5513
        %v5515 = vextract.high.u32 %v5513
        %v5516 = vmul.u32 %v5509, %v5500
        %v5517 = vadd.s32 %v5512, %v5514
        %vm5518 = vc.u32 %v5512, %v5514
        %v5519 = vadd.s32 %v5515, 1
        %v5520 = vsel %vm5518, %v5519, %v5515
        %v5521 = vadd.s32 %v5516, %v5520
        %v5522 = vadd.s32 %v5521, 536870912
        %v5523 = vshrl.u32 %v5522, 30
        %v5524 = vshll.u32 %v5523, 30
        %v5525 = vsub.s32 %v5521, %v5524
        %vm5526 = vcmp.lt.s32.totalorder %v5525, 0
        %v5527 = vsub.s32 0, %v5525
        %v5528 = vsel %vm5526, %v5527, %v5525
        %v5529 = vclz %v5528
        %v5530 = vsub.s32 %v5529, 2
        %vm5531 = vcmp.gt.s32.totalorder 0, %v5530
        %v5532 = vsel %vm5531, 0, %v5530
        %v5533 = vsub.s32 32, %v5532
        %v5534 = vshll.u32 %v5525, %v5532
        %v5535 = vshrl.u32 %v5517, %v5533
        %v5536 = vor.u32 %v5534, %v5535
        %v5537 = vsub.s32 4294967266, %v5532
        %v5538 = vadd.s32 %v5537, 127
        %v5539 = vshll.u32 %v5538, 23
        %v5540 = vor.u32 4788187, %v5539
        %v5541 = vand.u32 2147483647, %v5540
        %v5543 = vcvt.s32.f32 %v5536
        %v5544 = vmul.f32 %v5543, %v5541
        %v5545 = vxor.u32 %v5544, 2147483648
        %v5546 = vsel %vm5463, %v5545, %v5544
        %v5547 = vsub.s32 4, %v5523
        %v5548 = vsel %vm5463, %v5547, %v5523
        %v5549 = vsel %vm5462, %v3369, %v5546
        %v5550 = vsel %vm5462, 0, %v5548
        %v5551 = vcosq.f32.pop %v5549
        %v5552 = vsinq.f32.pop %v5549
        %vm5553 = vweird.f32 %v3369
        %v5554 = vadd.s32 %v5550, 3
        %v5555 = vand.u32 %v5554, 3
        %vm5556 = vcmp.lt.s32.totalorder %v5555, 2
        %vm5557 = vcmp.eq.s32.totalorder %v5555, 0
        %v5558 = vxor.u32 %v5552, 2147483648
        %v5559 = vsel %vm5557, %v5551, %v5558
        %vm5560 = vcmp.eq.s32.totalorder %v5555, 2
        %v5561 = vxor.u32 %v5551, 2147483648
        %v5562 = vsel %vm5560, %v5561, %v5552
        %v5563 = vsel %vm5556, %v5559, %v5562
        %v5564 = vsel %vm5553, nan, %v5563
        %v5565 = vand.u32 2147483647, %v3370
        %vm5566 = vcmp.le.f32.partialorder %v5565, 0.7853982
        %vm5567 = vcmp.lt.s32.totalorder %v3370, 0
        %v5568 = vand.u32 %v3370, 2139095040
        %v5569 = vshrl.u32 %v5568, 23
        %v5570 = vsub.s32 %v5569, 127
        %v5571 = vand.u32 2147483647, %v3370
        %v5572 = vand.u32 %v5571, 8388607
        %v5573 = vor.u32 %v5572, 8388608
        %v5574 = vsub.s32 0, %v5573
        %v5575 = vadd.s32 %v5570, 1
        %vm5576 = vcmp.gt.s32.totalorder %v5575, 0
        %v5577 = vsel %vm5576, %v5575, 0
        %v5578 = vshrl.u32 %v5577, 5
        %v5579 = vand.u32 %v5577, 31
        %v5580 = vsub.s32 32, %v5579
        %v5581 = vshrl.u32 683565275, %v5580
        %v5582 = vshll.u32 683565275, %v5579
        %v5583 = vshrl.u32 2475754826, %v5580
        %v5584 = vor.u32 %v5582, %v5583
        %v5585 = vshll.u32 2475754826, %v5579
        %v5586 = vshrl.u32 2131351028, %v5580
        %v5587 = vor.u32 %v5585, %v5586
        %v5588 = vshll.u32 2131351028, %v5579
        %v5589 = vshrl.u32 2102212464, %v5580
        %v5590 = vor.u32 %v5588, %v5589
        %v5591 = vshll.u32 2102212464, %v5579
        %v5592 = vshrl.u32 920167782, %v5580
        %v5593 = vor.u32 %v5591, %v5592
        %v5594 = vshll.u32 920167782, %v5579
        %v5595 = vshrl.u32 1326507024, %v5580
        %v5596 = vor.u32 %v5594, %v5595
        %vm5597 = vcmp.lt.s32.totalorder %v5578, 1
        %vm5598 = vcmp.lt.s32.totalorder %v5578, 2
        %vm5599 = vcmp.lt.s32.totalorder %v5578, 3
        %vm5600 = vcmp.lt.s32.totalorder %v5578, 4
        %v5601 = vsel %vm5597, %v5581, %v5584
        %v5602 = vsel %vm5600, %v5590, 2102212464
        %v5603 = vsel %vm5599, %v5587, %v5602
        %v5604 = vsel %vm5598, %v5601, %v5603
        %v5605 = vsel %vm5597, %v5584, %v5587
        %v5606 = vsel %vm5600, %v5593, 920167782
        %v5607 = vsel %vm5599, %v5590, %v5606
        %v5608 = vsel %vm5598, %v5605, %v5607
        %v5609 = vsel %vm5597, %v5587, %v5590
        %v5610 = vsel %vm5600, %v5596, 1326507024
        %v5611 = vsel %vm5599, %v5593, %v5610
        %v5612 = vsel %vm5598, %v5609, %v5611
        %v5613 = vshll.u32 %v5573, 8
        %v5614 = vmul.u32.u64.compose %v5613, %v5612
        %v5615 = vextract.low.u32 %v5614
        %v5616 = vextract.high.u32 %v5614
        %v5617 = vmul.u32.u64.compose %v5613, %v5608
        %v5618 = vextract.low.u32 %v5617
        %v5619 = vextract.high.u32 %v5617
        %v5620 = vmul.u32 %v5613, %v5604
        %v5621 = vadd.s32 %v5616, %v5618
        %vm5622 = vc.u32 %v5616, %v5618
        %v5623 = vadd.s32 %v5619, 1
        %v5624 = vsel %vm5622, %v5623, %v5619
        %v5625 = vadd.s32 %v5620, %v5624
        %v5626 = vadd.s32 %v5625, 536870912
        %v5627 = vshrl.u32 %v5626, 30
        %v5628 = vshll.u32 %v5627, 30
        %v5629 = vsub.s32 %v5625, %v5628
        %vm5630 = vcmp.lt.s32.totalorder %v5629, 0
        %v5631 = vsub.s32 0, %v5629
        %v5632 = vsel %vm5630, %v5631, %v5629
        %v5633 = vclz %v5632
        %v5634 = vsub.s32 %v5633, 2
        %vm5635 = vcmp.gt.s32.totalorder 0, %v5634
        %v5636 = vsel %vm5635, 0, %v5634
        %v5637 = vsub.s32 32, %v5636
        %v5638 = vshll.u32 %v5629, %v5636
        %v5639 = vshrl.u32 %v5621, %v5637
        %v5640 = vor.u32 %v5638, %v5639
        %v5641 = vsub.s32 4294967266, %v5636
        %v5642 = vadd.s32 %v5641, 127
        %v5643 = vshll.u32 %v5642, 23
        %v5644 = vor.u32 4788187, %v5643
        %v5645 = vand.u32 2147483647, %v5644
        %v5647 = vcvt.s32.f32 %v5640
        %v5648 = vmul.f32 %v5647, %v5645
        %v5649 = vxor.u32 %v5648, 2147483648
        %v5650 = vsel %vm5567, %v5649, %v5648
        %v5651 = vsub.s32 4, %v5627
        %v5652 = vsel %vm5567, %v5651, %v5627
        %v5653 = vsel %vm5566, %v3370, %v5650
        %v5654 = vsel %vm5566, 0, %v5652
        %v5655 = vcosq.f32.pop %v5653
        %v5656 = vsinq.f32.pop %v5653
        %vm5657 = vweird.f32 %v3370
        %v5658 = vadd.s32 %v5654, 3
        %v5659 = vand.u32 %v5658, 3
        %vm5660 = vcmp.lt.s32.totalorder %v5659, 2
        %vm5661 = vcmp.eq.s32.totalorder %v5659, 0
        %v5662 = vxor.u32 %v5656, 2147483648
        %v5663 = vsel %vm5661, %v5655, %v5662
        %vm5664 = vcmp.eq.s32.totalorder %v5659, 2
        %v5665 = vxor.u32 %v5655, 2147483648
        %v5666 = vsel %vm5664, %v5665, %v5656
        %v5667 = vsel %vm5660, %v5663, %v5666
        %v5668 = vsel %vm5657, nan, %v5667
        %v5669 = vand.u32 2147483647, %v3371
        %vm5670 = vcmp.le.f32.partialorder %v5669, 0.7853982
        %vm5671 = vcmp.lt.s32.totalorder %v3371, 0
        %v5672 = vand.u32 %v3371, 2139095040
        %v5673 = vshrl.u32 %v5672, 23
        %v5674 = vsub.s32 %v5673, 127
        %v5675 = vand.u32 2147483647, %v3371
        %v5676 = vand.u32 %v5675, 8388607
        %v5677 = vor.u32 %v5676, 8388608
        %v5678 = vsub.s32 0, %v5677
        %v5679 = vadd.s32 %v5674, 1
        %vm5680 = vcmp.gt.s32.totalorder %v5679, 0
        %v5681 = vsel %vm5680, %v5679, 0
        %v5682 = vshrl.u32 %v5681, 5
        %v5683 = vand.u32 %v5681, 31
        %v5684 = vsub.s32 32, %v5683
        %v5685 = vshrl.u32 683565275, %v5684
        %v5686 = vshll.u32 683565275, %v5683
        %v5687 = vshrl.u32 2475754826, %v5684
        %v5688 = vor.u32 %v5686, %v5687
        %v5689 = vshll.u32 2475754826, %v5683
        %v5690 = vshrl.u32 2131351028, %v5684
        %v5691 = vor.u32 %v5689, %v5690
        %v5692 = vshll.u32 2131351028, %v5683
        %v5693 = vshrl.u32 2102212464, %v5684
        %v5694 = vor.u32 %v5692, %v5693
        %v5695 = vshll.u32 2102212464, %v5683
        %v5696 = vshrl.u32 920167782, %v5684
        %v5697 = vor.u32 %v5695, %v5696
        %v5698 = vshll.u32 920167782, %v5683
        %v5699 = vshrl.u32 1326507024, %v5684
        %v5700 = vor.u32 %v5698, %v5699
        %vm5701 = vcmp.lt.s32.totalorder %v5682, 1
        %vm5702 = vcmp.lt.s32.totalorder %v5682, 2
        %vm5703 = vcmp.lt.s32.totalorder %v5682, 3
        %vm5704 = vcmp.lt.s32.totalorder %v5682, 4
        %v5705 = vsel %vm5701, %v5685, %v5688
        %v5706 = vsel %vm5704, %v5694, 2102212464
        %v5707 = vsel %vm5703, %v5691, %v5706
        %v5708 = vsel %vm5702, %v5705, %v5707
        %v5709 = vsel %vm5701, %v5688, %v5691
        %v5710 = vsel %vm5704, %v5697, 920167782
        %v5711 = vsel %vm5703, %v5694, %v5710
        %v5712 = vsel %vm5702, %v5709, %v5711
        %v5713 = vsel %vm5701, %v5691, %v5694
        %v5714 = vsel %vm5704, %v5700, 1326507024
        %v5715 = vsel %vm5703, %v5697, %v5714
        %v5716 = vsel %vm5702, %v5713, %v5715
        %v5717 = vshll.u32 %v5677, 8
        %v5718 = vmul.u32.u64.compose %v5717, %v5716
        %v5719 = vextract.low.u32 %v5718
        %v5720 = vextract.high.u32 %v5718
        %v5721 = vmul.u32.u64.compose %v5717, %v5712
        %v5722 = vextract.low.u32 %v5721
        %v5723 = vextract.high.u32 %v5721
        %v5724 = vmul.u32 %v5717, %v5708
        %v5725 = vadd.s32 %v5720, %v5722
        %vm5726 = vc.u32 %v5720, %v5722
        %v5727 = vadd.s32 %v5723, 1
        %v5728 = vsel %vm5726, %v5727, %v5723
        %v5729 = vadd.s32 %v5724, %v5728
        %v5730 = vadd.s32 %v5729, 536870912
        %v5731 = vshrl.u32 %v5730, 30
        %v5732 = vshll.u32 %v5731, 30
        %v5733 = vsub.s32 %v5729, %v5732
        %vm5734 = vcmp.lt.s32.totalorder %v5733, 0
        %v5735 = vsub.s32 0, %v5733
        %v5736 = vsel %vm5734, %v5735, %v5733
        %v5737 = vclz %v5736
        %v5738 = vsub.s32 %v5737, 2
        %vm5739 = vcmp.gt.s32.totalorder 0, %v5738
        %v5740 = vsel %vm5739, 0, %v5738
        %v5741 = vsub.s32 32, %v5740
        %v5742 = vshll.u32 %v5733, %v5740
        %v5743 = vshrl.u32 %v5725, %v5741
        %v5744 = vor.u32 %v5742, %v5743
        %v5745 = vsub.s32 4294967266, %v5740
        %v5746 = vadd.s32 %v5745, 127
        %v5747 = vshll.u32 %v5746, 23
        %v5748 = vor.u32 4788187, %v5747
        %v5749 = vand.u32 2147483647, %v5748
        %v5751 = vcvt.s32.f32 %v5744
        %v5752 = vmul.f32 %v5751, %v5749
        %v5753 = vxor.u32 %v5752, 2147483648
        %v5754 = vsel %vm5671, %v5753, %v5752
        %v5755 = vsub.s32 4, %v5731
        %v5756 = vsel %vm5671, %v5755, %v5731
        %v5757 = vsel %vm5670, %v3371, %v5754
        %v5758 = vsel %vm5670, 0, %v5756
        %v5759 = vcosq.f32.pop %v5757
        %v5760 = vsinq.f32.pop %v5757
        %vm5761 = vweird.f32 %v3371
        %v5762 = vadd.s32 %v5758, 3
        %v5763 = vand.u32 %v5762, 3
        %vm5764 = vcmp.lt.s32.totalorder %v5763, 2
        %vm5765 = vcmp.eq.s32.totalorder %v5763, 0
        %v5766 = vxor.u32 %v5760, 2147483648
        %v5767 = vsel %vm5765, %v5759, %v5766
        %vm5768 = vcmp.eq.s32.totalorder %v5763, 2
        %v5769 = vxor.u32 %v5759, 2147483648
        %v5770 = vsel %vm5768, %v5769, %v5760
        %v5771 = vsel %vm5764, %v5767, %v5770
        %v5772 = vsel %vm5761, nan, %v5771
        %v5773 = vand.u32 2147483647, %v3372
        %vm5774 = vcmp.le.f32.partialorder %v5773, 0.7853982
        %vm5775 = vcmp.lt.s32.totalorder %v3372, 0
        %v5776 = vand.u32 %v3372, 2139095040
        %v5777 = vshrl.u32 %v5776, 23
        %v5778 = vsub.s32 %v5777, 127
        %v5779 = vand.u32 2147483647, %v3372
        %v5780 = vand.u32 %v5779, 8388607
        %v5781 = vor.u32 %v5780, 8388608
        %v5782 = vsub.s32 0, %v5781
        %v5783 = vadd.s32 %v5778, 1
        %vm5784 = vcmp.gt.s32.totalorder %v5783, 0
        %v5785 = vsel %vm5784, %v5783, 0
        %v5786 = vshrl.u32 %v5785, 5
        %v5787 = vand.u32 %v5785, 31
        %v5788 = vsub.s32 32, %v5787
        %v5789 = vshrl.u32 683565275, %v5788
        %v5790 = vshll.u32 683565275, %v5787
        %v5791 = vshrl.u32 2475754826, %v5788
        %v5792 = vor.u32 %v5790, %v5791
        %v5793 = vshll.u32 2475754826, %v5787
        %v5794 = vshrl.u32 2131351028, %v5788
        %v5795 = vor.u32 %v5793, %v5794
        %v5796 = vshll.u32 2131351028, %v5787
        %v5797 = vshrl.u32 2102212464, %v5788
        %v5798 = vor.u32 %v5796, %v5797
        %v5799 = vshll.u32 2102212464, %v5787
        %v5800 = vshrl.u32 920167782, %v5788
        %v5801 = vor.u32 %v5799, %v5800
        %v5802 = vshll.u32 920167782, %v5787
        %v5803 = vshrl.u32 1326507024, %v5788
        %v5804 = vor.u32 %v5802, %v5803
        %vm5805 = vcmp.lt.s32.totalorder %v5786, 1
        %vm5806 = vcmp.lt.s32.totalorder %v5786, 2
        %vm5807 = vcmp.lt.s32.totalorder %v5786, 3
        %vm5808 = vcmp.lt.s32.totalorder %v5786, 4
        %v5809 = vsel %vm5805, %v5789, %v5792
        %v5810 = vsel %vm5808, %v5798, 2102212464
        %v5811 = vsel %vm5807, %v5795, %v5810
        %v5812 = vsel %vm5806, %v5809, %v5811
        %v5813 = vsel %vm5805, %v5792, %v5795
        %v5814 = vsel %vm5808, %v5801, 920167782
        %v5815 = vsel %vm5807, %v5798, %v5814
        %v5816 = vsel %vm5806, %v5813, %v5815
        %v5817 = vsel %vm5805, %v5795, %v5798
        %v5818 = vsel %vm5808, %v5804, 1326507024
        %v5819 = vsel %vm5807, %v5801, %v5818
        %v5820 = vsel %vm5806, %v5817, %v5819
        %v5821 = vshll.u32 %v5781, 8
        %v5822 = vmul.u32.u64.compose %v5821, %v5820
        %v5823 = vextract.low.u32 %v5822
        %v5824 = vextract.high.u32 %v5822
        %v5825 = vmul.u32.u64.compose %v5821, %v5816
        %v5826 = vextract.low.u32 %v5825
        %v5827 = vextract.high.u32 %v5825
        %v5828 = vmul.u32 %v5821, %v5812
        %v5829 = vadd.s32 %v5824, %v5826
        %vm5830 = vc.u32 %v5824, %v5826
        %v5831 = vadd.s32 %v5827, 1
        %v5832 = vsel %vm5830, %v5831, %v5827
        %v5833 = vadd.s32 %v5828, %v5832
        %v5834 = vadd.s32 %v5833, 536870912
        %v5835 = vshrl.u32 %v5834, 30
        %v5836 = vshll.u32 %v5835, 30
        %v5837 = vsub.s32 %v5833, %v5836
        %vm5838 = vcmp.lt.s32.totalorder %v5837, 0
        %v5839 = vsub.s32 0, %v5837
        %v5840 = vsel %vm5838, %v5839, %v5837
        %v5841 = vclz %v5840
        %v5842 = vsub.s32 %v5841, 2
        %vm5843 = vcmp.gt.s32.totalorder 0, %v5842
        %v5844 = vsel %vm5843, 0, %v5842
        %v5845 = vsub.s32 32, %v5844
        %v5846 = vshll.u32 %v5837, %v5844
        %v5847 = vshrl.u32 %v5829, %v5845
        %v5848 = vor.u32 %v5846, %v5847
        %v5849 = vsub.s32 4294967266, %v5844
        %v5850 = vadd.s32 %v5849, 127
        %v5851 = vshll.u32 %v5850, 23
        %v5852 = vor.u32 4788187, %v5851
        %v5853 = vand.u32 2147483647, %v5852
        %v5855 = vcvt.s32.f32 %v5848
        %v5856 = vmul.f32 %v5855, %v5853
        %v5857 = vxor.u32 %v5856, 2147483648
        %v5858 = vsel %vm5775, %v5857, %v5856
        %v5859 = vsub.s32 4, %v5835
        %v5860 = vsel %vm5775, %v5859, %v5835
        %v5861 = vsel %vm5774, %v3372, %v5858
        %v5862 = vsel %vm5774, 0, %v5860
        %v5863 = vcosq.f32.pop %v5861
        %v5864 = vsinq.f32.pop %v5861
        %vm5865 = vweird.f32 %v3372
        %v5866 = vadd.s32 %v5862, 3
        %v5867 = vand.u32 %v5866, 3
        %vm5868 = vcmp.lt.s32.totalorder %v5867, 2
        %vm5869 = vcmp.eq.s32.totalorder %v5867, 0
        %v5870 = vxor.u32 %v5864, 2147483648
        %v5871 = vsel %vm5869, %v5863, %v5870
        %vm5872 = vcmp.eq.s32.totalorder %v5867, 2
        %v5873 = vxor.u32 %v5863, 2147483648
        %v5874 = vsel %vm5872, %v5873, %v5864
        %v5875 = vsel %vm5868, %v5871, %v5874
        %v5876 = vsel %vm5865, nan, %v5875
        %v5877 = vand.u32 2147483647, %v3373
        %vm5878 = vcmp.le.f32.partialorder %v5877, 0.7853982
        %vm5879 = vcmp.lt.s32.totalorder %v3373, 0
        %v5880 = vand.u32 %v3373, 2139095040
        %v5881 = vshrl.u32 %v5880, 23
        %v5882 = vsub.s32 %v5881, 127
        %v5883 = vand.u32 2147483647, %v3373
        %v5884 = vand.u32 %v5883, 8388607
        %v5885 = vor.u32 %v5884, 8388608
        %v5886 = vsub.s32 0, %v5885
        %v5887 = vadd.s32 %v5882, 1
        %vm5888 = vcmp.gt.s32.totalorder %v5887, 0
        %v5889 = vsel %vm5888, %v5887, 0
        %v5890 = vshrl.u32 %v5889, 5
        %v5891 = vand.u32 %v5889, 31
        %v5892 = vsub.s32 32, %v5891
        %v5893 = vshrl.u32 683565275, %v5892
        %v5894 = vshll.u32 683565275, %v5891
        %v5895 = vshrl.u32 2475754826, %v5892
        %v5896 = vor.u32 %v5894, %v5895
        %v5897 = vshll.u32 2475754826, %v5891
        %v5898 = vshrl.u32 2131351028, %v5892
        %v5899 = vor.u32 %v5897, %v5898
        %v5900 = vshll.u32 2131351028, %v5891
        %v5901 = vshrl.u32 2102212464, %v5892
        %v5902 = vor.u32 %v5900, %v5901
        %v5903 = vshll.u32 2102212464, %v5891
        %v5904 = vshrl.u32 920167782, %v5892
        %v5905 = vor.u32 %v5903, %v5904
        %v5906 = vshll.u32 920167782, %v5891
        %v5907 = vshrl.u32 1326507024, %v5892
        %v5908 = vor.u32 %v5906, %v5907
        %vm5909 = vcmp.lt.s32.totalorder %v5890, 1
        %vm5910 = vcmp.lt.s32.totalorder %v5890, 2
        %vm5911 = vcmp.lt.s32.totalorder %v5890, 3
        %vm5912 = vcmp.lt.s32.totalorder %v5890, 4
        %v5913 = vsel %vm5909, %v5893, %v5896
        %v5914 = vsel %vm5912, %v5902, 2102212464
        %v5915 = vsel %vm5911, %v5899, %v5914
        %v5916 = vsel %vm5910, %v5913, %v5915
        %v5917 = vsel %vm5909, %v5896, %v5899
        %v5918 = vsel %vm5912, %v5905, 920167782
        %v5919 = vsel %vm5911, %v5902, %v5918
        %v5920 = vsel %vm5910, %v5917, %v5919
        %v5921 = vsel %vm5909, %v5899, %v5902
        %v5922 = vsel %vm5912, %v5908, 1326507024
        %v5923 = vsel %vm5911, %v5905, %v5922
        %v5924 = vsel %vm5910, %v5921, %v5923
        %v5925 = vshll.u32 %v5885, 8
        %v5926 = vmul.u32.u64.compose %v5925, %v5924
        %v5927 = vextract.low.u32 %v5926
        %v5928 = vextract.high.u32 %v5926
        %v5929 = vmul.u32.u64.compose %v5925, %v5920
        %v5930 = vextract.low.u32 %v5929
        %v5931 = vextract.high.u32 %v5929
        %v5932 = vmul.u32 %v5925, %v5916
        %v5933 = vadd.s32 %v5928, %v5930
        %vm5934 = vc.u32 %v5928, %v5930
        %v5935 = vadd.s32 %v5931, 1
        %v5936 = vsel %vm5934, %v5935, %v5931
        %v5937 = vadd.s32 %v5932, %v5936
        %v5938 = vadd.s32 %v5937, 536870912
        %v5939 = vshrl.u32 %v5938, 30
        %v5940 = vshll.u32 %v5939, 30
        %v5941 = vsub.s32 %v5937, %v5940
        %vm5942 = vcmp.lt.s32.totalorder %v5941, 0
        %v5943 = vsub.s32 0, %v5941
        %v5944 = vsel %vm5942, %v5943, %v5941
        %v5945 = vclz %v5944
        %v5946 = vsub.s32 %v5945, 2
        %vm5947 = vcmp.gt.s32.totalorder 0, %v5946
        %v5948 = vsel %vm5947, 0, %v5946
        %v5949 = vsub.s32 32, %v5948
        %v5950 = vshll.u32 %v5941, %v5948
        %v5951 = vshrl.u32 %v5933, %v5949
        %v5952 = vor.u32 %v5950, %v5951
        %v5953 = vsub.s32 4294967266, %v5948
        %v5954 = vadd.s32 %v5953, 127
        %v5955 = vshll.u32 %v5954, 23
        %v5956 = vor.u32 4788187, %v5955
        %v5957 = vand.u32 2147483647, %v5956
        %v5959 = vcvt.s32.f32 %v5952
        %v5960 = vmul.f32 %v5959, %v5957
        %v5961 = vxor.u32 %v5960, 2147483648
        %v5962 = vsel %vm5879, %v5961, %v5960
        %v5963 = vsub.s32 4, %v5939
        %v5964 = vsel %vm5879, %v5963, %v5939
        %v5965 = vsel %vm5878, %v3373, %v5962
        %v5966 = vsel %vm5878, 0, %v5964
        %v5967 = vcosq.f32.pop %v5965
        %v5968 = vsinq.f32.pop %v5965
        %vm5969 = vweird.f32 %v3373
        %v5970 = vadd.s32 %v5966, 3
        %v5971 = vand.u32 %v5970, 3
        %vm5972 = vcmp.lt.s32.totalorder %v5971, 2
        %vm5973 = vcmp.eq.s32.totalorder %v5971, 0
        %v5974 = vxor.u32 %v5968, 2147483648
        %v5975 = vsel %vm5973, %v5967, %v5974
        %vm5976 = vcmp.eq.s32.totalorder %v5971, 2
        %v5977 = vxor.u32 %v5967, 2147483648
        %v5978 = vsel %vm5976, %v5977, %v5968
        %v5979 = vsel %vm5972, %v5975, %v5978
        %v5980 = vsel %vm5969, nan, %v5979
        %v5981 = vand.u32 2147483647, %v3374
        %vm5982 = vcmp.le.f32.partialorder %v5981, 0.7853982
        %vm5983 = vcmp.lt.s32.totalorder %v3374, 0
        %v5984 = vand.u32 %v3374, 2139095040
        %v5985 = vshrl.u32 %v5984, 23
        %v5986 = vsub.s32 %v5985, 127
        %v5987 = vand.u32 2147483647, %v3374
        %v5988 = vand.u32 %v5987, 8388607
        %v5989 = vor.u32 %v5988, 8388608
        %v5990 = vsub.s32 0, %v5989
        %v5991 = vadd.s32 %v5986, 1
        %vm5992 = vcmp.gt.s32.totalorder %v5991, 0
        %v5993 = vsel %vm5992, %v5991, 0
        %v5994 = vshrl.u32 %v5993, 5
        %v5995 = vand.u32 %v5993, 31
        %v5996 = vsub.s32 32, %v5995
        %v5997 = vshrl.u32 683565275, %v5996
        %v5998 = vshll.u32 683565275, %v5995
        %v5999 = vshrl.u32 2475754826, %v5996
        %v6000 = vor.u32 %v5998, %v5999
        %v6001 = vshll.u32 2475754826, %v5995
        %v6002 = vshrl.u32 2131351028, %v5996
        %v6003 = vor.u32 %v6001, %v6002
        %v6004 = vshll.u32 2131351028, %v5995
        %v6005 = vshrl.u32 2102212464, %v5996
        %v6006 = vor.u32 %v6004, %v6005
        %v6007 = vshll.u32 2102212464, %v5995
        %v6008 = vshrl.u32 920167782, %v5996
        %v6009 = vor.u32 %v6007, %v6008
        %v6010 = vshll.u32 920167782, %v5995
        %v6011 = vshrl.u32 1326507024, %v5996
        %v6012 = vor.u32 %v6010, %v6011
        %vm6013 = vcmp.lt.s32.totalorder %v5994, 1
        %vm6014 = vcmp.lt.s32.totalorder %v5994, 2
        %vm6015 = vcmp.lt.s32.totalorder %v5994, 3
        %vm6016 = vcmp.lt.s32.totalorder %v5994, 4
        %v6017 = vsel %vm6013, %v5997, %v6000
        %v6018 = vsel %vm6016, %v6006, 2102212464
        %v6019 = vsel %vm6015, %v6003, %v6018
        %v6020 = vsel %vm6014, %v6017, %v6019
        %v6021 = vsel %vm6013, %v6000, %v6003
        %v6022 = vsel %vm6016, %v6009, 920167782
        %v6023 = vsel %vm6015, %v6006, %v6022
        %v6024 = vsel %vm6014, %v6021, %v6023
        %v6025 = vsel %vm6013, %v6003, %v6006
        %v6026 = vsel %vm6016, %v6012, 1326507024
        %v6027 = vsel %vm6015, %v6009, %v6026
        %v6028 = vsel %vm6014, %v6025, %v6027
        %v6029 = vshll.u32 %v5989, 8
        %v6030 = vmul.u32.u64.compose %v6029, %v6028
        %v6031 = vextract.low.u32 %v6030
        %v6032 = vextract.high.u32 %v6030
        %v6033 = vmul.u32.u64.compose %v6029, %v6024
        %v6034 = vextract.low.u32 %v6033
        %v6035 = vextract.high.u32 %v6033
        %v6036 = vmul.u32 %v6029, %v6020
        %v6037 = vadd.s32 %v6032, %v6034
        %vm6038 = vc.u32 %v6032, %v6034
        %v6039 = vadd.s32 %v6035, 1
        %v6040 = vsel %vm6038, %v6039, %v6035
        %v6041 = vadd.s32 %v6036, %v6040
        %v6042 = vadd.s32 %v6041, 536870912
        %v6043 = vshrl.u32 %v6042, 30
        %v6044 = vshll.u32 %v6043, 30
        %v6045 = vsub.s32 %v6041, %v6044
        %vm6046 = vcmp.lt.s32.totalorder %v6045, 0
        %v6047 = vsub.s32 0, %v6045
        %v6048 = vsel %vm6046, %v6047, %v6045
        %v6049 = vclz %v6048
        %v6050 = vsub.s32 %v6049, 2
        %vm6051 = vcmp.gt.s32.totalorder 0, %v6050
        %v6052 = vsel %vm6051, 0, %v6050
        %v6053 = vsub.s32 32, %v6052
        %v6054 = vshll.u32 %v6045, %v6052
        %v6055 = vshrl.u32 %v6037, %v6053
        %v6056 = vor.u32 %v6054, %v6055
        %v6057 = vsub.s32 4294967266, %v6052
        %v6058 = vadd.s32 %v6057, 127
        %v6059 = vshll.u32 %v6058, 23
        %v6060 = vor.u32 4788187, %v6059
        %v6061 = vand.u32 2147483647, %v6060
        %v6063 = vcvt.s32.f32 %v6056
        %v6064 = vmul.f32 %v6063, %v6061
        %v6065 = vxor.u32 %v6064, 2147483648
        %v6066 = vsel %vm5983, %v6065, %v6064
        %v6067 = vsub.s32 4, %v6043
        %v6068 = vsel %vm5983, %v6067, %v6043
        %v6069 = vsel %vm5982, %v3374, %v6066
        %v6070 = vsel %vm5982, 0, %v6068
        %v6071 = vcosq.f32.pop %v6069
        %v6072 = vsinq.f32.pop %v6069
        %vm6073 = vweird.f32 %v3374
        %v6074 = vadd.s32 %v6070, 3
        %v6075 = vand.u32 %v6074, 3
        %vm6076 = vcmp.lt.s32.totalorder %v6075, 2
        %vm6077 = vcmp.eq.s32.totalorder %v6075, 0
        %v6078 = vxor.u32 %v6072, 2147483648
        %v6079 = vsel %vm6077, %v6071, %v6078
        %vm6080 = vcmp.eq.s32.totalorder %v6075, 2
        %v6081 = vxor.u32 %v6071, 2147483648
        %v6082 = vsel %vm6080, %v6081, %v6072
        %v6083 = vsel %vm6076, %v6079, %v6082
        %v6084 = vsel %vm6073, nan, %v6083
        %v6085 = vand.u32 2147483647, %v3375
        %vm6086 = vcmp.le.f32.partialorder %v6085, 0.7853982
        %vm6087 = vcmp.lt.s32.totalorder %v3375, 0
        %v6088 = vand.u32 %v3375, 2139095040
        %v6089 = vshrl.u32 %v6088, 23
        %v6090 = vsub.s32 %v6089, 127
        %v6091 = vand.u32 2147483647, %v3375
        %v6092 = vand.u32 %v6091, 8388607
        %v6093 = vor.u32 %v6092, 8388608
        %v6094 = vsub.s32 0, %v6093
        %v6095 = vadd.s32 %v6090, 1
        %vm6096 = vcmp.gt.s32.totalorder %v6095, 0
        %v6097 = vsel %vm6096, %v6095, 0
        %v6098 = vshrl.u32 %v6097, 5
        %v6099 = vand.u32 %v6097, 31
        %v6100 = vsub.s32 32, %v6099
        %v6101 = vshrl.u32 683565275, %v6100
        %v6102 = vshll.u32 683565275, %v6099
        %v6103 = vshrl.u32 2475754826, %v6100
        %v6104 = vor.u32 %v6102, %v6103
        %v6105 = vshll.u32 2475754826, %v6099
        %v6106 = vshrl.u32 2131351028, %v6100
        %v6107 = vor.u32 %v6105, %v6106
        %v6108 = vshll.u32 2131351028, %v6099
        %v6109 = vshrl.u32 2102212464, %v6100
        %v6110 = vor.u32 %v6108, %v6109
        %v6111 = vshll.u32 2102212464, %v6099
        %v6112 = vshrl.u32 920167782, %v6100
        %v6113 = vor.u32 %v6111, %v6112
        %v6114 = vshll.u32 920167782, %v6099
        %v6115 = vshrl.u32 1326507024, %v6100
        %v6116 = vor.u32 %v6114, %v6115
        %vm6117 = vcmp.lt.s32.totalorder %v6098, 1
        %vm6118 = vcmp.lt.s32.totalorder %v6098, 2
        %vm6119 = vcmp.lt.s32.totalorder %v6098, 3
        %vm6120 = vcmp.lt.s32.totalorder %v6098, 4
        %v6121 = vsel %vm6117, %v6101, %v6104
        %v6122 = vsel %vm6120, %v6110, 2102212464
        %v6123 = vsel %vm6119, %v6107, %v6122
        %v6124 = vsel %vm6118, %v6121, %v6123
        %v6125 = vsel %vm6117, %v6104, %v6107
        %v6126 = vsel %vm6120, %v6113, 920167782
        %v6127 = vsel %vm6119, %v6110, %v6126
        %v6128 = vsel %vm6118, %v6125, %v6127
        %v6129 = vsel %vm6117, %v6107, %v6110
        %v6130 = vsel %vm6120, %v6116, 1326507024
        %v6131 = vsel %vm6119, %v6113, %v6130
        %v6132 = vsel %vm6118, %v6129, %v6131
        %v6133 = vshll.u32 %v6093, 8
        %v6134 = vmul.u32.u64.compose %v6133, %v6132
        %v6135 = vextract.low.u32 %v6134
        %v6136 = vextract.high.u32 %v6134
        %v6137 = vmul.u32.u64.compose %v6133, %v6128
        %v6138 = vextract.low.u32 %v6137
        %v6139 = vextract.high.u32 %v6137
        %v6140 = vmul.u32 %v6133, %v6124
        %v6141 = vadd.s32 %v6136, %v6138
        %vm6142 = vc.u32 %v6136, %v6138
        %v6143 = vadd.s32 %v6139, 1
        %v6144 = vsel %vm6142, %v6143, %v6139
        %v6145 = vadd.s32 %v6140, %v6144
        %v6146 = vadd.s32 %v6145, 536870912
        %v6147 = vshrl.u32 %v6146, 30
        %v6148 = vshll.u32 %v6147, 30
        %v6149 = vsub.s32 %v6145, %v6148
        %vm6150 = vcmp.lt.s32.totalorder %v6149, 0
        %v6151 = vsub.s32 0, %v6149
        %v6152 = vsel %vm6150, %v6151, %v6149
        %v6153 = vclz %v6152
        %v6154 = vsub.s32 %v6153, 2
        %vm6155 = vcmp.gt.s32.totalorder 0, %v6154
        %v6156 = vsel %vm6155, 0, %v6154
        %v6157 = vsub.s32 32, %v6156
        %v6158 = vshll.u32 %v6149, %v6156
        %v6159 = vshrl.u32 %v6141, %v6157
        %v6160 = vor.u32 %v6158, %v6159
        %v6161 = vsub.s32 4294967266, %v6156
        %v6162 = vadd.s32 %v6161, 127
        %v6163 = vshll.u32 %v6162, 23
        %v6164 = vor.u32 4788187, %v6163
        %v6165 = vand.u32 2147483647, %v6164
        %v6167 = vcvt.s32.f32 %v6160
        %v6168 = vmul.f32 %v6167, %v6165
        %v6169 = vxor.u32 %v6168, 2147483648
        %v6170 = vsel %vm6087, %v6169, %v6168
        %v6171 = vsub.s32 4, %v6147
        %v6172 = vsel %vm6087, %v6171, %v6147
        %v6173 = vsel %vm6086, %v3375, %v6170
        %v6174 = vsel %vm6086, 0, %v6172
        %v6175 = vcosq.f32.pop %v6173
        %v6176 = vsinq.f32.pop %v6173
        %vm6177 = vweird.f32 %v3375
        %v6178 = vadd.s32 %v6174, 3
        %v6179 = vand.u32 %v6178, 3
        %vm6180 = vcmp.lt.s32.totalorder %v6179, 2
        %vm6181 = vcmp.eq.s32.totalorder %v6179, 0
        %v6182 = vxor.u32 %v6176, 2147483648
        %v6183 = vsel %vm6181, %v6175, %v6182
        %vm6184 = vcmp.eq.s32.totalorder %v6179, 2
        %v6185 = vxor.u32 %v6175, 2147483648
        %v6186 = vsel %vm6184, %v6185, %v6176
        %v6187 = vsel %vm6180, %v6183, %v6186
        %v6188 = vsel %vm6177, nan, %v6187
        %v6189 = vand.u32 2147483647, %v3376
        %vm6190 = vcmp.le.f32.partialorder %v6189, 0.7853982
        %vm6191 = vcmp.lt.s32.totalorder %v3376, 0
        %v6192 = vand.u32 %v3376, 2139095040
        %v6193 = vshrl.u32 %v6192, 23
        %v6194 = vsub.s32 %v6193, 127
        %v6195 = vand.u32 2147483647, %v3376
        %v6196 = vand.u32 %v6195, 8388607
        %v6197 = vor.u32 %v6196, 8388608
        %v6198 = vsub.s32 0, %v6197
        %v6199 = vadd.s32 %v6194, 1
        %vm6200 = vcmp.gt.s32.totalorder %v6199, 0
        %v6201 = vsel %vm6200, %v6199, 0
        %v6202 = vshrl.u32 %v6201, 5
        %v6203 = vand.u32 %v6201, 31
        %v6204 = vsub.s32 32, %v6203
        %v6205 = vshrl.u32 683565275, %v6204
        %v6206 = vshll.u32 683565275, %v6203
        %v6207 = vshrl.u32 2475754826, %v6204
        %v6208 = vor.u32 %v6206, %v6207
        %v6209 = vshll.u32 2475754826, %v6203
        %v6210 = vshrl.u32 2131351028, %v6204
        %v6211 = vor.u32 %v6209, %v6210
        %v6212 = vshll.u32 2131351028, %v6203
        %v6213 = vshrl.u32 2102212464, %v6204
        %v6214 = vor.u32 %v6212, %v6213
        %v6215 = vshll.u32 2102212464, %v6203
        %v6216 = vshrl.u32 920167782, %v6204
        %v6217 = vor.u32 %v6215, %v6216
        %v6218 = vshll.u32 920167782, %v6203
        %v6219 = vshrl.u32 1326507024, %v6204
        %v6220 = vor.u32 %v6218, %v6219
        %vm6221 = vcmp.lt.s32.totalorder %v6202, 1
        %vm6222 = vcmp.lt.s32.totalorder %v6202, 2
        %vm6223 = vcmp.lt.s32.totalorder %v6202, 3
        %vm6224 = vcmp.lt.s32.totalorder %v6202, 4
        %v6225 = vsel %vm6221, %v6205, %v6208
        %v6226 = vsel %vm6224, %v6214, 2102212464
        %v6227 = vsel %vm6223, %v6211, %v6226
        %v6228 = vsel %vm6222, %v6225, %v6227
        %v6229 = vsel %vm6221, %v6208, %v6211
        %v6230 = vsel %vm6224, %v6217, 920167782
        %v6231 = vsel %vm6223, %v6214, %v6230
        %v6232 = vsel %vm6222, %v6229, %v6231
        %v6233 = vsel %vm6221, %v6211, %v6214
        %v6234 = vsel %vm6224, %v6220, 1326507024
        %v6235 = vsel %vm6223, %v6217, %v6234
        %v6236 = vsel %vm6222, %v6233, %v6235
        %v6237 = vshll.u32 %v6197, 8
        %v6238 = vmul.u32.u64.compose %v6237, %v6236
        %v6239 = vextract.low.u32 %v6238
        %v6240 = vextract.high.u32 %v6238
        %v6241 = vmul.u32.u64.compose %v6237, %v6232
        %v6242 = vextract.low.u32 %v6241
        %v6243 = vextract.high.u32 %v6241
        %v6244 = vmul.u32 %v6237, %v6228
        %v6245 = vadd.s32 %v6240, %v6242
        %vm6246 = vc.u32 %v6240, %v6242
        %v6247 = vadd.s32 %v6243, 1
        %v6248 = vsel %vm6246, %v6247, %v6243
        %v6249 = vadd.s32 %v6244, %v6248
        %v6250 = vadd.s32 %v6249, 536870912
        %v6251 = vshrl.u32 %v6250, 30
        %v6252 = vshll.u32 %v6251, 30
        %v6253 = vsub.s32 %v6249, %v6252
        %vm6254 = vcmp.lt.s32.totalorder %v6253, 0
        %v6255 = vsub.s32 0, %v6253
        %v6256 = vsel %vm6254, %v6255, %v6253
        %v6257 = vclz %v6256
        %v6258 = vsub.s32 %v6257, 2
        %vm6259 = vcmp.gt.s32.totalorder 0, %v6258
        %v6260 = vsel %vm6259, 0, %v6258
        %v6261 = vsub.s32 32, %v6260
        %v6262 = vshll.u32 %v6253, %v6260
        %v6263 = vshrl.u32 %v6245, %v6261
        %v6264 = vor.u32 %v6262, %v6263
        %v6265 = vsub.s32 4294967266, %v6260
        %v6266 = vadd.s32 %v6265, 127
        %v6267 = vshll.u32 %v6266, 23
        %v6268 = vor.u32 4788187, %v6267
        %v6269 = vand.u32 2147483647, %v6268
        %v6271 = vcvt.s32.f32 %v6264
        %v6272 = vmul.f32 %v6271, %v6269
        %v6273 = vxor.u32 %v6272, 2147483648
        %v6274 = vsel %vm6191, %v6273, %v6272
        %v6275 = vsub.s32 4, %v6251
        %v6276 = vsel %vm6191, %v6275, %v6251
        %v6277 = vsel %vm6190, %v3376, %v6274
        %v6278 = vsel %vm6190, 0, %v6276
        %v6279 = vcosq.f32.pop %v6277
        %v6280 = vsinq.f32.pop %v6277
        %vm6281 = vweird.f32 %v3376
        %v6282 = vadd.s32 %v6278, 3
        %v6283 = vand.u32 %v6282, 3
        %vm6284 = vcmp.lt.s32.totalorder %v6283, 2
        %vm6285 = vcmp.eq.s32.totalorder %v6283, 0
        %v6286 = vxor.u32 %v6280, 2147483648
        %v6287 = vsel %vm6285, %v6279, %v6286
        %vm6288 = vcmp.eq.s32.totalorder %v6283, 2
        %v6289 = vxor.u32 %v6279, 2147483648
        %v6290 = vsel %vm6288, %v6289, %v6280
        %v6291 = vsel %vm6284, %v6287, %v6290
        %v6292 = vsel %vm6281, nan, %v6291
        %v6293 = vand.u32 2147483647, %v3377
        %vm6294 = vcmp.le.f32.partialorder %v6293, 0.7853982
        %vm6295 = vcmp.lt.s32.totalorder %v3377, 0
        %v6296 = vand.u32 %v3377, 2139095040
        %v6297 = vshrl.u32 %v6296, 23
        %v6298 = vsub.s32 %v6297, 127
        %v6299 = vand.u32 2147483647, %v3377
        %v6300 = vand.u32 %v6299, 8388607
        %v6301 = vor.u32 %v6300, 8388608
        %v6302 = vsub.s32 0, %v6301
        %v6303 = vadd.s32 %v6298, 1
        %vm6304 = vcmp.gt.s32.totalorder %v6303, 0
        %v6305 = vsel %vm6304, %v6303, 0
        %v6306 = vshrl.u32 %v6305, 5
        %v6307 = vand.u32 %v6305, 31
        %v6308 = vsub.s32 32, %v6307
        %v6309 = vshrl.u32 683565275, %v6308
        %v6310 = vshll.u32 683565275, %v6307
        %v6311 = vshrl.u32 2475754826, %v6308
        %v6312 = vor.u32 %v6310, %v6311
        %v6313 = vshll.u32 2475754826, %v6307
        %v6314 = vshrl.u32 2131351028, %v6308
        %v6315 = vor.u32 %v6313, %v6314
        %v6316 = vshll.u32 2131351028, %v6307
        %v6317 = vshrl.u32 2102212464, %v6308
        %v6318 = vor.u32 %v6316, %v6317
        %v6319 = vshll.u32 2102212464, %v6307
        %v6320 = vshrl.u32 920167782, %v6308
        %v6321 = vor.u32 %v6319, %v6320
        %v6322 = vshll.u32 920167782, %v6307
        %v6323 = vshrl.u32 1326507024, %v6308
        %v6324 = vor.u32 %v6322, %v6323
        %vm6325 = vcmp.lt.s32.totalorder %v6306, 1
        %vm6326 = vcmp.lt.s32.totalorder %v6306, 2
        %vm6327 = vcmp.lt.s32.totalorder %v6306, 3
        %vm6328 = vcmp.lt.s32.totalorder %v6306, 4
        %v6329 = vsel %vm6325, %v6309, %v6312
        %v6330 = vsel %vm6328, %v6318, 2102212464
        %v6331 = vsel %vm6327, %v6315, %v6330
        %v6332 = vsel %vm6326, %v6329, %v6331
        %v6333 = vsel %vm6325, %v6312, %v6315
        %v6334 = vsel %vm6328, %v6321, 920167782
        %v6335 = vsel %vm6327, %v6318, %v6334
        %v6336 = vsel %vm6326, %v6333, %v6335
        %v6337 = vsel %vm6325, %v6315, %v6318
        %v6338 = vsel %vm6328, %v6324, 1326507024
        %v6339 = vsel %vm6327, %v6321, %v6338
        %v6340 = vsel %vm6326, %v6337, %v6339
        %v6341 = vshll.u32 %v6301, 8
        %v6342 = vmul.u32.u64.compose %v6341, %v6340
        %v6343 = vextract.low.u32 %v6342
        %v6344 = vextract.high.u32 %v6342
        %v6345 = vmul.u32.u64.compose %v6341, %v6336
        %v6346 = vextract.low.u32 %v6345
        %v6347 = vextract.high.u32 %v6345
        %v6348 = vmul.u32 %v6341, %v6332
        %v6349 = vadd.s32 %v6344, %v6346
        %vm6350 = vc.u32 %v6344, %v6346
        %v6351 = vadd.s32 %v6347, 1
        %v6352 = vsel %vm6350, %v6351, %v6347
        %v6353 = vadd.s32 %v6348, %v6352
        %v6354 = vadd.s32 %v6353, 536870912
        %v6355 = vshrl.u32 %v6354, 30
        %v6356 = vshll.u32 %v6355, 30
        %v6357 = vsub.s32 %v6353, %v6356
        %vm6358 = vcmp.lt.s32.totalorder %v6357, 0
        %v6359 = vsub.s32 0, %v6357
        %v6360 = vsel %vm6358, %v6359, %v6357
        %v6361 = vclz %v6360
        %v6362 = vsub.s32 %v6361, 2
        %vm6363 = vcmp.gt.s32.totalorder 0, %v6362
        %v6364 = vsel %vm6363, 0, %v6362
        %v6365 = vsub.s32 32, %v6364
        %v6366 = vshll.u32 %v6357, %v6364
        %v6367 = vshrl.u32 %v6349, %v6365
        %v6368 = vor.u32 %v6366, %v6367
        %v6369 = vsub.s32 4294967266, %v6364
        %v6370 = vadd.s32 %v6369, 127
        %v6371 = vshll.u32 %v6370, 23
        %v6372 = vor.u32 4788187, %v6371
        %v6373 = vand.u32 2147483647, %v6372
        %v6375 = vcvt.s32.f32 %v6368
        %v6376 = vmul.f32 %v6375, %v6373
        %v6377 = vxor.u32 %v6376, 2147483648
        %v6378 = vsel %vm6295, %v6377, %v6376
        %v6379 = vsub.s32 4, %v6355
        %v6380 = vsel %vm6295, %v6379, %v6355
        %v6381 = vsel %vm6294, %v3377, %v6378
        %v6382 = vsel %vm6294, 0, %v6380
        %v6383 = vcosq.f32.pop %v6381
        %v6384 = vsinq.f32.pop %v6381
        %vm6385 = vweird.f32 %v3377
        %v6386 = vadd.s32 %v6382, 3
        %v6387 = vand.u32 %v6386, 3
        %vm6388 = vcmp.lt.s32.totalorder %v6387, 2
        %vm6389 = vcmp.eq.s32.totalorder %v6387, 0
        %v6390 = vxor.u32 %v6384, 2147483648
        %v6391 = vsel %vm6389, %v6383, %v6390
        %vm6392 = vcmp.eq.s32.totalorder %v6387, 2
        %v6393 = vxor.u32 %v6383, 2147483648
        %v6394 = vsel %vm6392, %v6393, %v6384
        %v6395 = vsel %vm6388, %v6391, %v6394
        %v6396 = vsel %vm6385, nan, %v6395
        %v6397 = vand.u32 2147483647, %v3378
        %vm6398 = vcmp.le.f32.partialorder %v6397, 0.7853982
        %vm6399 = vcmp.lt.s32.totalorder %v3378, 0
        %v6400 = vand.u32 %v3378, 2139095040
        %v6401 = vshrl.u32 %v6400, 23
        %v6402 = vsub.s32 %v6401, 127
        %v6403 = vand.u32 2147483647, %v3378
        %v6404 = vand.u32 %v6403, 8388607
        %v6405 = vor.u32 %v6404, 8388608
        %v6406 = vsub.s32 0, %v6405
        %v6407 = vadd.s32 %v6402, 1
        %vm6408 = vcmp.gt.s32.totalorder %v6407, 0
        %v6409 = vsel %vm6408, %v6407, 0
        %v6410 = vshrl.u32 %v6409, 5
        %v6411 = vand.u32 %v6409, 31
        %v6412 = vsub.s32 32, %v6411
        %v6413 = vshrl.u32 683565275, %v6412
        %v6414 = vshll.u32 683565275, %v6411
        %v6415 = vshrl.u32 2475754826, %v6412
        %v6416 = vor.u32 %v6414, %v6415
        %v6417 = vshll.u32 2475754826, %v6411
        %v6418 = vshrl.u32 2131351028, %v6412
        %v6419 = vor.u32 %v6417, %v6418
        %v6420 = vshll.u32 2131351028, %v6411
        %v6421 = vshrl.u32 2102212464, %v6412
        %v6422 = vor.u32 %v6420, %v6421
        %v6423 = vshll.u32 2102212464, %v6411
        %v6424 = vshrl.u32 920167782, %v6412
        %v6425 = vor.u32 %v6423, %v6424
        %v6426 = vshll.u32 920167782, %v6411
        %v6427 = vshrl.u32 1326507024, %v6412
        %v6428 = vor.u32 %v6426, %v6427
        %vm6429 = vcmp.lt.s32.totalorder %v6410, 1
        %vm6430 = vcmp.lt.s32.totalorder %v6410, 2
        %vm6431 = vcmp.lt.s32.totalorder %v6410, 3
        %vm6432 = vcmp.lt.s32.totalorder %v6410, 4
        %v6433 = vsel %vm6429, %v6413, %v6416
        %v6434 = vsel %vm6432, %v6422, 2102212464
        %v6435 = vsel %vm6431, %v6419, %v6434
        %v6436 = vsel %vm6430, %v6433, %v6435
        %v6437 = vsel %vm6429, %v6416, %v6419
        %v6438 = vsel %vm6432, %v6425, 920167782
        %v6439 = vsel %vm6431, %v6422, %v6438
        %v6440 = vsel %vm6430, %v6437, %v6439
        %v6441 = vsel %vm6429, %v6419, %v6422
        %v6442 = vsel %vm6432, %v6428, 1326507024
        %v6443 = vsel %vm6431, %v6425, %v6442
        %v6444 = vsel %vm6430, %v6441, %v6443
        %v6445 = vshll.u32 %v6405, 8
        %v6446 = vmul.u32.u64.compose %v6445, %v6444
        %v6447 = vextract.low.u32 %v6446
        %v6448 = vextract.high.u32 %v6446
        %v6449 = vmul.u32.u64.compose %v6445, %v6440
        %v6450 = vextract.low.u32 %v6449
        %v6451 = vextract.high.u32 %v6449
        %v6452 = vmul.u32 %v6445, %v6436
        %v6453 = vadd.s32 %v6448, %v6450
        %vm6454 = vc.u32 %v6448, %v6450
        %v6455 = vadd.s32 %v6451, 1
        %v6456 = vsel %vm6454, %v6455, %v6451
        %v6457 = vadd.s32 %v6452, %v6456
        %v6458 = vadd.s32 %v6457, 536870912
        %v6459 = vshrl.u32 %v6458, 30
        %v6460 = vshll.u32 %v6459, 30
        %v6461 = vsub.s32 %v6457, %v6460
        %vm6462 = vcmp.lt.s32.totalorder %v6461, 0
        %v6463 = vsub.s32 0, %v6461
        %v6464 = vsel %vm6462, %v6463, %v6461
        %v6465 = vclz %v6464
        %v6466 = vsub.s32 %v6465, 2
        %vm6467 = vcmp.gt.s32.totalorder 0, %v6466
        %v6468 = vsel %vm6467, 0, %v6466
        %v6469 = vsub.s32 32, %v6468
        %v6470 = vshll.u32 %v6461, %v6468
        %v6471 = vshrl.u32 %v6453, %v6469
        %v6472 = vor.u32 %v6470, %v6471
        %v6473 = vsub.s32 4294967266, %v6468
        %v6474 = vadd.s32 %v6473, 127
        %v6475 = vshll.u32 %v6474, 23
        %v6476 = vor.u32 4788187, %v6475
        %v6477 = vand.u32 2147483647, %v6476
        %v6479 = vcvt.s32.f32 %v6472
        %v6480 = vmul.f32 %v6479, %v6477
        %v6481 = vxor.u32 %v6480, 2147483648
        %v6482 = vsel %vm6399, %v6481, %v6480
        %v6483 = vsub.s32 4, %v6459
        %v6484 = vsel %vm6399, %v6483, %v6459
        %v6485 = vsel %vm6398, %v3378, %v6482
        %v6486 = vsel %vm6398, 0, %v6484
        %v6487 = vcosq.f32.pop %v6485
        %v6488 = vsinq.f32.pop %v6485
        %vm6489 = vweird.f32 %v3378
        %v6490 = vadd.s32 %v6486, 3
        %v6491 = vand.u32 %v6490, 3
        %vm6492 = vcmp.lt.s32.totalorder %v6491, 2
        %vm6493 = vcmp.eq.s32.totalorder %v6491, 0
        %v6494 = vxor.u32 %v6488, 2147483648
        %v6495 = vsel %vm6493, %v6487, %v6494
        %vm6496 = vcmp.eq.s32.totalorder %v6491, 2
        %v6497 = vxor.u32 %v6487, 2147483648
        %v6498 = vsel %vm6496, %v6497, %v6488
        %v6499 = vsel %vm6492, %v6495, %v6498
        %v6500 = vsel %vm6489, nan, %v6499
        %v6501 = vand.u32 2147483647, %v3379
        %vm6502 = vcmp.le.f32.partialorder %v6501, 0.7853982
        %vm6503 = vcmp.lt.s32.totalorder %v3379, 0
        %v6504 = vand.u32 %v3379, 2139095040
        %v6505 = vshrl.u32 %v6504, 23
        %v6506 = vsub.s32 %v6505, 127
        %v6507 = vand.u32 2147483647, %v3379
        %v6508 = vand.u32 %v6507, 8388607
        %v6509 = vor.u32 %v6508, 8388608
        %v6510 = vsub.s32 0, %v6509
        %v6511 = vadd.s32 %v6506, 1
        %vm6512 = vcmp.gt.s32.totalorder %v6511, 0
        %v6513 = vsel %vm6512, %v6511, 0
        %v6514 = vshrl.u32 %v6513, 5
        %v6515 = vand.u32 %v6513, 31
        %v6516 = vsub.s32 32, %v6515
        %v6517 = vshrl.u32 683565275, %v6516
        %v6518 = vshll.u32 683565275, %v6515
        %v6519 = vshrl.u32 2475754826, %v6516
        %v6520 = vor.u32 %v6518, %v6519
        %v6521 = vshll.u32 2475754826, %v6515
        %v6522 = vshrl.u32 2131351028, %v6516
        %v6523 = vor.u32 %v6521, %v6522
        %v6524 = vshll.u32 2131351028, %v6515
        %v6525 = vshrl.u32 2102212464, %v6516
        %v6526 = vor.u32 %v6524, %v6525
        %v6527 = vshll.u32 2102212464, %v6515
        %v6528 = vshrl.u32 920167782, %v6516
        %v6529 = vor.u32 %v6527, %v6528
        %v6530 = vshll.u32 920167782, %v6515
        %v6531 = vshrl.u32 1326507024, %v6516
        %v6532 = vor.u32 %v6530, %v6531
        %vm6533 = vcmp.lt.s32.totalorder %v6514, 1
        %vm6534 = vcmp.lt.s32.totalorder %v6514, 2
        %vm6535 = vcmp.lt.s32.totalorder %v6514, 3
        %vm6536 = vcmp.lt.s32.totalorder %v6514, 4
        %v6537 = vsel %vm6533, %v6517, %v6520
        %v6538 = vsel %vm6536, %v6526, 2102212464
        %v6539 = vsel %vm6535, %v6523, %v6538
        %v6540 = vsel %vm6534, %v6537, %v6539
        %v6541 = vsel %vm6533, %v6520, %v6523
        %v6542 = vsel %vm6536, %v6529, 920167782
        %v6543 = vsel %vm6535, %v6526, %v6542
        %v6544 = vsel %vm6534, %v6541, %v6543
        %v6545 = vsel %vm6533, %v6523, %v6526
        %v6546 = vsel %vm6536, %v6532, 1326507024
        %v6547 = vsel %vm6535, %v6529, %v6546
        %v6548 = vsel %vm6534, %v6545, %v6547
        %v6549 = vshll.u32 %v6509, 8
        %v6550 = vmul.u32.u64.compose %v6549, %v6548
        %v6551 = vextract.low.u32 %v6550
        %v6552 = vextract.high.u32 %v6550
        %v6553 = vmul.u32.u64.compose %v6549, %v6544
        %v6554 = vextract.low.u32 %v6553
        %v6555 = vextract.high.u32 %v6553
        %v6556 = vmul.u32 %v6549, %v6540
        %v6557 = vadd.s32 %v6552, %v6554
        %vm6558 = vc.u32 %v6552, %v6554
        %v6559 = vadd.s32 %v6555, 1
        %v6560 = vsel %vm6558, %v6559, %v6555
        %v6561 = vadd.s32 %v6556, %v6560
        %v6562 = vadd.s32 %v6561, 536870912
        %v6563 = vshrl.u32 %v6562, 30
        %v6564 = vshll.u32 %v6563, 30
        %v6565 = vsub.s32 %v6561, %v6564
        %vm6566 = vcmp.lt.s32.totalorder %v6565, 0
        %v6567 = vsub.s32 0, %v6565
        %v6568 = vsel %vm6566, %v6567, %v6565
        %v6569 = vclz %v6568
        %v6570 = vsub.s32 %v6569, 2
        %vm6571 = vcmp.gt.s32.totalorder 0, %v6570
        %v6572 = vsel %vm6571, 0, %v6570
        %v6573 = vsub.s32 32, %v6572
        %v6574 = vshll.u32 %v6565, %v6572
        %v6575 = vshrl.u32 %v6557, %v6573
        %v6576 = vor.u32 %v6574, %v6575
        %v6577 = vsub.s32 4294967266, %v6572
        %v6578 = vadd.s32 %v6577, 127
        %v6579 = vshll.u32 %v6578, 23
        %v6580 = vor.u32 4788187, %v6579
        %v6581 = vand.u32 2147483647, %v6580
        %v6583 = vcvt.s32.f32 %v6576
        %v6584 = vmul.f32 %v6583, %v6581
        %v6585 = vxor.u32 %v6584, 2147483648
        %v6586 = vsel %vm6503, %v6585, %v6584
        %v6587 = vsub.s32 4, %v6563
        %v6588 = vsel %vm6503, %v6587, %v6563
        %v6589 = vsel %vm6502, %v3379, %v6586
        %v6590 = vsel %vm6502, 0, %v6588
        %v6591 = vcosq.f32.pop %v6589
        %v6592 = vsinq.f32.pop %v6589
        %vm6593 = vweird.f32 %v3379
        %v6594 = vadd.s32 %v6590, 3
        %v6595 = vand.u32 %v6594, 3
        %vm6596 = vcmp.lt.s32.totalorder %v6595, 2
        %vm6597 = vcmp.eq.s32.totalorder %v6595, 0
        %v6598 = vxor.u32 %v6592, 2147483648
        %v6599 = vsel %vm6597, %v6591, %v6598
        %vm6600 = vcmp.eq.s32.totalorder %v6595, 2
        %v6601 = vxor.u32 %v6591, 2147483648
        %v6602 = vsel %vm6600, %v6601, %v6592
        %v6603 = vsel %vm6596, %v6599, %v6602
        %v6604 = vsel %vm6593, nan, %v6603
        %v6605 = vand.u32 2147483647, %v3380
        %vm6606 = vcmp.le.f32.partialorder %v6605, 0.7853982
        %vm6607 = vcmp.lt.s32.totalorder %v3380, 0
        %v6608 = vand.u32 %v3380, 2139095040
        %v6609 = vshrl.u32 %v6608, 23
        %v6610 = vsub.s32 %v6609, 127
        %v6611 = vand.u32 2147483647, %v3380
        %v6612 = vand.u32 %v6611, 8388607
        %v6613 = vor.u32 %v6612, 8388608
        %v6614 = vsub.s32 0, %v6613
        %v6615 = vadd.s32 %v6610, 1
        %vm6616 = vcmp.gt.s32.totalorder %v6615, 0
        %v6617 = vsel %vm6616, %v6615, 0
        %v6618 = vshrl.u32 %v6617, 5
        %v6619 = vand.u32 %v6617, 31
        %v6620 = vsub.s32 32, %v6619
        %v6621 = vshrl.u32 683565275, %v6620
        %v6622 = vshll.u32 683565275, %v6619
        %v6623 = vshrl.u32 2475754826, %v6620
        %v6624 = vor.u32 %v6622, %v6623
        %v6625 = vshll.u32 2475754826, %v6619
        %v6626 = vshrl.u32 2131351028, %v6620
        %v6627 = vor.u32 %v6625, %v6626
        %v6628 = vshll.u32 2131351028, %v6619
        %v6629 = vshrl.u32 2102212464, %v6620
        %v6630 = vor.u32 %v6628, %v6629
        %v6631 = vshll.u32 2102212464, %v6619
        %v6632 = vshrl.u32 920167782, %v6620
        %v6633 = vor.u32 %v6631, %v6632
        %v6634 = vshll.u32 920167782, %v6619
        %v6635 = vshrl.u32 1326507024, %v6620
        %v6636 = vor.u32 %v6634, %v6635
        %vm6637 = vcmp.lt.s32.totalorder %v6618, 1
        %vm6638 = vcmp.lt.s32.totalorder %v6618, 2
        %vm6639 = vcmp.lt.s32.totalorder %v6618, 3
        %vm6640 = vcmp.lt.s32.totalorder %v6618, 4
        %v6641 = vsel %vm6637, %v6621, %v6624
        %v6642 = vsel %vm6640, %v6630, 2102212464
        %v6643 = vsel %vm6639, %v6627, %v6642
        %v6644 = vsel %vm6638, %v6641, %v6643
        %v6645 = vsel %vm6637, %v6624, %v6627
        %v6646 = vsel %vm6640, %v6633, 920167782
        %v6647 = vsel %vm6639, %v6630, %v6646
        %v6648 = vsel %vm6638, %v6645, %v6647
        %v6649 = vsel %vm6637, %v6627, %v6630
        %v6650 = vsel %vm6640, %v6636, 1326507024
        %v6651 = vsel %vm6639, %v6633, %v6650
        %v6652 = vsel %vm6638, %v6649, %v6651
        %v6653 = vshll.u32 %v6613, 8
        %v6654 = vmul.u32.u64.compose %v6653, %v6652
        %v6655 = vextract.low.u32 %v6654
        %v6656 = vextract.high.u32 %v6654
        %v6657 = vmul.u32.u64.compose %v6653, %v6648
        %v6658 = vextract.low.u32 %v6657
        %v6659 = vextract.high.u32 %v6657
        %v6660 = vmul.u32 %v6653, %v6644
        %v6661 = vadd.s32 %v6656, %v6658
        %vm6662 = vc.u32 %v6656, %v6658
        %v6663 = vadd.s32 %v6659, 1
        %v6664 = vsel %vm6662, %v6663, %v6659
        %v6665 = vadd.s32 %v6660, %v6664
        %v6666 = vadd.s32 %v6665, 536870912
        %v6667 = vshrl.u32 %v6666, 30
        %v6668 = vshll.u32 %v6667, 30
        %v6669 = vsub.s32 %v6665, %v6668
        %vm6670 = vcmp.lt.s32.totalorder %v6669, 0
        %v6671 = vsub.s32 0, %v6669
        %v6672 = vsel %vm6670, %v6671, %v6669
        %v6673 = vclz %v6672
        %v6674 = vsub.s32 %v6673, 2
        %vm6675 = vcmp.gt.s32.totalorder 0, %v6674
        %v6676 = vsel %vm6675, 0, %v6674
        %v6677 = vsub.s32 32, %v6676
        %v6678 = vshll.u32 %v6669, %v6676
        %v6679 = vshrl.u32 %v6661, %v6677
        %v6680 = vor.u32 %v6678, %v6679
        %v6681 = vsub.s32 4294967266, %v6676
        %v6682 = vadd.s32 %v6681, 127
        %v6683 = vshll.u32 %v6682, 23
        %v6684 = vor.u32 4788187, %v6683
        %v6685 = vand.u32 2147483647, %v6684
        %v6687 = vcvt.s32.f32 %v6680
        %v6688 = vmul.f32 %v6687, %v6685
        %v6689 = vxor.u32 %v6688, 2147483648
        %v6690 = vsel %vm6607, %v6689, %v6688
        %v6691 = vsub.s32 4, %v6667
        %v6692 = vsel %vm6607, %v6691, %v6667
        %v6693 = vsel %vm6606, %v3380, %v6690
        %v6694 = vsel %vm6606, 0, %v6692
        %v6695 = vcosq.f32.pop %v6693
        %v6696 = vsinq.f32.pop %v6693
        %vm6697 = vweird.f32 %v3380
        %v6698 = vadd.s32 %v6694, 3
        %v6699 = vand.u32 %v6698, 3
        %vm6700 = vcmp.lt.s32.totalorder %v6699, 2
        %vm6701 = vcmp.eq.s32.totalorder %v6699, 0
        %v6702 = vxor.u32 %v6696, 2147483648
        %v6703 = vsel %vm6701, %v6695, %v6702
        %vm6704 = vcmp.eq.s32.totalorder %v6699, 2
        %v6705 = vxor.u32 %v6695, 2147483648
        %v6706 = vsel %vm6704, %v6705, %v6696
        %v6707 = vsel %vm6700, %v6703, %v6706
        %v6708 = vsel %vm6697, nan, %v6707
        %6709 = vst [vmem:[%s164] sm:$0xff] %v3484
        %6710 = vst [vmem:[%s164 + $0x8] sm:$0xff] %v3588
        %6711 = vst [vmem:[%s164 + $0x10] sm:$0xff] %v3692
        %6712 = vst [vmem:[%s164 + $0x18] sm:$0xff] %v3796
        %6713 = vst [vmem:[%s164 + $0x20] sm:$0xff] %v3900
        %6714 = vst [vmem:[%s164 + $0x28] sm:$0xff] %v4004
        %6715 = vst [vmem:[%s164 + $0x30] sm:$0xff] %v4108
        %6716 = vst [vmem:[%s164 + $0x38] sm:$0xff] %v4212
        %6717 = vst [vmem:[%s164 + $0x40] sm:$0xff] %v4316
        %6718 = vst [vmem:[%s164 + $0x48] sm:$0xff] %v4420
        %6719 = vst [vmem:[%s164 + $0x50] sm:$0xff] %v4524
        %6720 = vst [vmem:[%s164 + $0x58] sm:$0xff] %v4628
        %6721 = vst [vmem:[%s164 + $0x60] sm:$0xff] %v4732
        %6722 = vst [vmem:[%s164 + $0x68] sm:$0xff] %v4836
        %6723 = vst [vmem:[%s164 + $0x70] sm:$0xff] %v4940
        %6724 = vst [vmem:[%s164 + $0x78] sm:$0xff] %v5044
        %6725 = vst [vmem:[%s164 + $0x80] sm:$0xff] %v5148
        %6726 = vst [vmem:[%s164 + $0x88] sm:$0xff] %v5252
        %6727 = vst [vmem:[%s164 + $0x90] sm:$0xff] %v5356
        %6728 = vst [vmem:[%s164 + $0x98] sm:$0xff] %v5460
        %6729 = vst [vmem:[%s164 + $0xa0] sm:$0xff] %v5564
        %6730 = vst [vmem:[%s164 + $0xa8] sm:$0xff] %v5668
        %6731 = vst [vmem:[%s164 + $0xb0] sm:$0xff] %v5772
        %6732 = vst [vmem:[%s164 + $0xb8] sm:$0xff] %v5876
        %6733 = vst [vmem:[%s164 + $0xc0] sm:$0xff] %v5980
        %6734 = vst [vmem:[%s164 + $0xc8] sm:$0xff] %v6084
        %6735 = vst [vmem:[%s164 + $0xd0] sm:$0xff] %v6188
        %6736 = vst [vmem:[%s164 + $0xd8] sm:$0xff] %v6292
        %6737 = vst [vmem:[%s164 + $0xe0] sm:$0xff] %v6396
        %6738 = vst [vmem:[%s164 + $0xe8] sm:$0xff] %v6500
        %6739 = vst [vmem:[%s164 + $0xf0] sm:$0xff] %v6604
        %6740 = vst [vmem:[%s164 + $0xf8] sm:$0xff] %v6708
        %s6741 = sand.u32 %s93, 1
        %s6742 = scalar_lea.sflag [#allocation3], %s6741
        %s6743 = sand.u32 %s93, 1
        %s6744 = smul.addr %s6743, 256
        %s6745 = scalar_lea.vmem [#allocation2], %s6744
        // Predicated region
        $region33: #{tpu_custom_call.1} parent=31 // pred_check
          %p6746 = pneg %p103
        $region34: #{tpu_custom_call.1} parent=31 // pred_check_branch
          %6748 = sbr.rel (%p6746) target = $region36
        $region35: #{tpu_custom_call.1} parent=31 // pred_region
          %s6749 = smul.u32 32, %s17
          %s6751 = ssub.s32 4096, 4096
          %6752 = vsyncadd %s6742, %s6751
          %s6753 = smul.addr %s6749, 128
          %s6754 = scalar_lea.hbm %s3, %s6753
          %s6755 = sshll.u32 %s6745, 4
          %s6756 = int_to_ptr.vmem [resolvable:$true] %s6755
          %6761 = dma.vmem_to_hbm [thread:$0]  %s6756, 4096, %s6754, %s6742, 128, 128, 8
        $region36: #{tpu_custom_call.1} parent=31 // pred_fallthru
          _
      $region32: #{tpu_custom_call.1} parent=5 // pred_fallthru
        _
      %p6762 = scmp.le.s32.totalorder 2, %s12
      // Predicated region
      $region37: #{tpu_custom_call.1} parent=5 // pred_check
        %p6763 = pneg %p6762
      $region38: #{tpu_custom_call.1} parent=5 // pred_check_branch
        %6765 = sbr.rel (%p6763) target = $region40
      $region39: #{tpu_custom_call.1} parent=5 // pred_region
        %s6766 = ssub.s32 %s12, 2
        // Predicated region
        $region41: #{tpu_custom_call.1} parent=39 // pred_check
          %p6767 = pneg %p109
        $region42: #{tpu_custom_call.1} parent=39 // pred_check_branch
          %6769 = sbr.rel (%p6767) target = $region44
        $region43: #{tpu_custom_call.1} parent=39 // pred_region
          %s6770 = sand.u32 %s94, 1
          %s6771 = scalar_lea.sflag [#allocation3], %s6770
          %s6772 = sand.u32 %s94, 1
          %s6773 = smul.addr %s6772, 256
          %s6774 = scalar_lea.vmem [#allocation2], %s6773
          %6775 = dma.done %s6771, 4096
        $region44: #{tpu_custom_call.1} parent=39 // pred_fallthru
          _
      $region40: #{tpu_custom_call.1} parent=5 // pred_fallthru
        _
    $region6: #{tpu_custom_call.1} parent=1 // loop_footer
      %s16 = sadd.s32 1, %s12
    $region7: #{tpu_custom_call.1} parent=1 // loop_footer_branch
      %11 = sbr.rel target = $region3
    $region8: #{tpu_custom_call.1} parent=1 // loop_exit
      _
    %6776 = vsyncpa [#allocation3], 1
    %s6777 = scalar_lea.sflag [#allocation3], 1
    %6778 = vsyncpa %s6777, 1

</llo_original>
